<compile_context>
chip_gen: v7x
topology: tpu7x:2x2x1
jax: 0.10.0
libtpu: 0.0.40
codegen_flags: <defaults>
</compile_context>

<pallas_src>
import functools

import jax
import jax.numpy as jnp
from jax import lax
from jax.experimental import pallas as pl
from jax.experimental.pallas import tpu as pltpu

# nn.LeakyReLU(True): True is the *negative_slope* positional arg -> 1.0.
NEG_SLOPE = 1.0


def _leaky_relu(x, slope):
    if slope == 1.0:          # identity: skip the compare/select at trace time
        return x
    return jnp.where(x >= 0, x, slope * x)


def _resblock_kernel(has_sc, W, HW, cout, *refs):
    """Fused actv1 -> (shortcut) -> conv1 -> actv2 -> conv2 -> +shortcut."""
    if has_sc:
        x_ref, w1_ref, b1_ref, w2_ref, b2_ref, ws_ref, bs_ref, o_ref = refs
    else:
        x_ref, w1_ref, b1_ref, w2_ref, b2_ref, o_ref = refs

    Lt = x_ref.shape[-1]                                   # nb * HW (static)
    a = _leaky_relu(x_ref[...].astype(jnp.float32), NEG_SLOPE)   # (Cin, Lt)

    # Per-image border masks over the flat lane index, hoisted once per
    # invocation and shared by both 3x3 convs.  Because each slab holds whole
    # images, roll wrap-around (including across image boundaries inside the
    # slab) always lands on a masked-out border position.
    lane = lax.broadcasted_iota(jnp.int32, (1, Lt), 1)
    col = lane % W                   # x coordinate within a row
    rowp = lane % HW                 # y*W + x within its own image
    h_ok = {-1: col >= 1, 0: None, 1: col < (W - 1)}
    v_ok = {-1: rowp >= W, 0: None, 1: rowp < (HW - W)}
    masks = {}
    for dy in (-1, 0, 1):
        for dx in (-1, 0, 1):
            mv, mh = v_ok[dy], h_ok[dx]
            masks[(dy, dx)] = (mh if mv is None else
                               mv if mh is None else (mv & mh))

    def conv3x3(src, w_ref, acc):
        # src: (C, Lt) activations; w_ref: (9, Cout, C) per-tap matrices;
        # acc: (Cout, Lt) accumulator pre-loaded with bias (+ shortcut).
        # Each tap: lane roll (XLU) + border mask (VPU select) + MXU matmul
        # with a lane-dense (Cout, Lt) result accumulated in f32.
        for dy in (-1, 0, 1):
            for dx in (-1, 0, 1):
                t = (dy + 1) * 3 + (dx + 1)
                d = dy * W + dx                       # flat lane shift
                patch = src if d == 0 else pltpu.roll(src, (-d) % Lt, axis=1)
                m = masks[(dy, dx)]
                if m is not None:
                    patch = jnp.where(m, patch, 0.0)
                acc = acc + jnp.dot(w_ref[t], patch,
                                    preferred_element_type=jnp.float32)
        return acc

    # Shortcut branch (1x1 conv or identity); folded into conv2's accumulator
    # so it is not kept live as a separate add at the end.
    if has_sc:
        s = jnp.dot(ws_ref[...].astype(jnp.float32), a,
                    preferred_element_type=jnp.float32)
        s = s + bs_ref[...].astype(jnp.float32)
    else:
        s = a

    b1 = jnp.broadcast_to(b1_ref[...].astype(jnp.float32), (cout, Lt))
    h = conv3x3(a, w1_ref, b1)                               # conv1 + b1
    h = _leaky_relu(h, NEG_SLOPE)                            # actv2 (identity)
    out = conv3x3(h, w2_ref, s + b2_ref[...].astype(jnp.float32))  # conv2+b2+s
    o_ref[...] = out.astype(o_ref.dtype)                     # lane-dense store


def _pick_batch_block(N, HW, cin, cout, lane_cap=8192,
                      vmem_budget=20 * 1024 * 1024):
    """Largest divisor nb of N keeping the (C, nb*HW) working set inside a
    conservative VMEM budget.  Bigger lane blocks mean fewer grid steps and
    unmasked full-width vst stores; the budget keeps large-channel configs
    from overflowing scoped VMEM (f32 activations + accumulators + pipeline
    double-buffers)."""
    # Rough f32 bytes/lane live in the kernel: x(2x, dbl-buf) + a + h + s +
    # acc + out(2x).
    bytes_per_lane = 4 * (3 * cin + 5 * cout)
    lane_target = max(256, min(lane_cap, vmem_budget // max(1, bytes_per_lane)))
    best = 1
    for nb in range(1, N + 1):
        if N % nb == 0 and nb * HW <= lane_target:
            best = nb
    return best


def funit_res_block(x_nchw, params, *, batch_block=None):
    """FUNITResBlock forward. Input/output are NCHW like PyTorch."""
    w1, b1, w2, b2 = params["w1"], params["b1"], params["w2"], params["b2"]
    N, cin, H, W = x_nchw.shape
    cout = w1.shape[-1]
    has_sc = cin != cout
    HW = H * W

    nb = (batch_block if batch_block is not None
          else _pick_batch_block(N, HW, cin, cout))
    if N % nb:
        nb = 1
    if (nb * HW) % 128 != 0:
        # Lane block must be 128-aligned or equal to the full array extent;
        # fall back to a single full-extent block (always legal).
        nb = N

    # Glue (layout plumbing outside the kernel): NCHW -> (C, N*HW) with pixels
    # on the lane axis; weights HWIO -> per-tap (9, Cout, Cin); biases (Cout,1).
    x2d = jnp.transpose(x_nchw.reshape(N, cin, HW), (1, 0, 2)).reshape(cin, N * HW)
    w1f = jnp.transpose(w1, (0, 1, 3, 2)).reshape(9, cout, cin)
    w2f = jnp.transpose(w2, (0, 1, 3, 2)).reshape(9, cout, cout)
    b1f = b1.reshape(cout, 1)
    b2f = b2.reshape(cout, 1)

    Lb = nb * HW
    grid = (N * HW // Lb,)

    inputs = [x2d, w1f, b1f, w2f, b2f]
    in_specs = [
        pl.BlockSpec((cin, Lb), lambda i: (0, i)),
        pl.BlockSpec((9, cout, cin), lambda i: (0, 0, 0)),
        pl.BlockSpec((cout, 1), lambda i: (0, 0)),
        pl.BlockSpec((9, cout, cout), lambda i: (0, 0, 0)),
        pl.BlockSpec((cout, 1), lambda i: (0, 0)),
    ]
    if has_sc:
        inputs += [jnp.transpose(params["ws"].reshape(cin, cout)),   # (Cout,Cin)
                   params["bs"].reshape(cout, 1)]
        in_specs += [
            pl.BlockSpec((cout, cin), lambda i: (0, 0)),
            pl.BlockSpec((cout, 1), lambda i: (0, 0)),
        ]

    out2d = pl.pallas_call(
        functools.partial(_resblock_kernel, has_sc, W, HW, cout),
        out_shape=jax.ShapeDtypeStruct((cout, N * HW), x_nchw.dtype),
        grid=grid,
        in_specs=in_specs,
        out_specs=pl.BlockSpec((cout, Lb), lambda i: (0, i)),
        compiler_params=pltpu.CompilerParams(
            dimension_semantics=("parallel",),
            vmem_limit_bytes=32 * 1024 * 1024),   # safe on v5e/v6e/v7x
    )(*inputs)

    # (Cout, N*HW) -> NCHW
    return jnp.transpose(out2d.reshape(cout, N, H, W), (1, 0, 2, 3))


def funit_res_block_ref(x_nchw, params):
    """Pure-JAX reference (same semantics as the PyTorch module)."""
    x = jnp.transpose(x_nchw, (0, 2, 3, 1))  # NHWC
    cin = x.shape[-1]
    cout = params["w1"].shape[-1]
    a = _leaky_relu(x, NEG_SLOPE)
    dn = ("NHWC", "HWIO", "NHWC")
    if cin != cout:
        s = lax.conv_general_dilated(a, params["ws"], (1, 1), "SAME",
                                     dimension_numbers=dn) + params["bs"]
    else:
        s = a
    h = lax.conv_general_dilated(a, params["w1"], (1, 1), "SAME",
                                 dimension_numbers=dn) + params["b1"]
    h = _leaky_relu(h, NEG_SLOPE)
    h = lax.conv_general_dilated(h, params["w2"], (1, 1), "SAME",
                                 dimension_numbers=dn) + params["b2"]
    return jnp.transpose(h + s, (0, 3, 1, 2))


def init_params(key, cin, cout, dtype=jnp.float32):
    """Deterministic synthetic parameters (shapes from FUNITResBlock.__init__)."""
    ks = jax.random.split(key, 6)
    s3 = (cin * 9) ** -0.5
    s3b = (cout * 9) ** -0.5
    p = {
        "w1": jax.random.uniform(ks[0], (3, 3, cin, cout), dtype, -s3, s3),
        "b1": jax.random.uniform(ks[1], (cout,), dtype, -s3, s3),
        "w2": jax.random.uniform(ks[2], (3, 3, cout, cout), dtype, -s3b, s3b),
        "b2": jax.random.uniform(ks[3], (cout,), dtype, -s3b, s3b),
    }
    if cin != cout:
        s1 = cin ** -0.5
        p["ws"] = jax.random.uniform(ks[4], (1, 1, cin, cout), dtype, -s1, s1)
        p["bs"] = jax.random.uniform(ks[5], (cout,), dtype, -s1, s1)
    return p


if __name__ == "__main__":
    key = jax.random.PRNGKey(0)
    kx1, kx2, kp1, kp2 = jax.random.split(key, 4)

    # Case 1: input_nc != output_nc -> 1x1-conv shortcut branch.
    x = jax.random.normal(kx1, (2, 4, 16, 16), jnp.float32)   # NCHW like PyTorch
    params = init_params(kp1, 4, 8)
    out = funit_res_block(x, params)
    jax.block_until_ready(out)
    ref = funit_res_block_ref(x, params)
    assert out.shape == (2, 8, 16, 16), out.shape
    assert jnp.allclose(out, ref, atol=2e-4, rtol=2e-4), float(
        jnp.max(jnp.abs(out - ref)))

    # Case 2: input_nc == output_nc -> identity shortcut.
    x2 = jax.random.normal(kx2, (2, 8, 16, 16), jnp.float32)
    params2 = init_params(kp2, 8, 8)
    out2 = funit_res_block(x2, params2)
    jax.block_until_ready(out2)
    ref2 = funit_res_block_ref(x2, params2)
    assert out2.shape == (2, 8, 16, 16), out2.shape
    assert jnp.allclose(out2, ref2, atol=2e-4, rtol=2e-4), float(
        jnp.max(jnp.abs(out2 - ref2)))

    print("KERNEL_OK")
</pallas_src>

<mosaic_0001>
module attributes {stable_mosaic.version = 11 : i64} {
  func.func @_resblock_kernel(%arg0: i32, %arg1: memref<4x512xf32, #tpu.memory_space<vmem>>, %arg2: memref<9x8x4xf32, #tpu.memory_space<vmem>>, %arg3: memref<8x1xf32, #tpu.memory_space<vmem>>, %arg4: memref<9x8x8xf32, #tpu.memory_space<vmem>>, %arg5: memref<8x1xf32, #tpu.memory_space<vmem>>, %arg6: memref<8x4xf32, #tpu.memory_space<vmem>>, %arg7: memref<8x1xf32, #tpu.memory_space<vmem>>, %arg8: memref<8x512xf32, #tpu.memory_space<vmem>>) attributes {dimension_semantics = [#tpu.dimension_semantics<parallel>], iteration_bounds = array<i64: 1>, scalar_prefetch = 0 : i64, scratch_operands = 0 : i64, tpu.core_type = #tpu.core_type<tc>, window_params = [{transform_indices = @transform_0, window_bounds = array<i64: 4, 512>}, {pipeline_mode = #tpu.pipeline_mode<synchronous>, transform_indices = @transform_1, window_bounds = array<i64: 9, 8, 4>}, {pipeline_mode = #tpu.pipeline_mode<synchronous>, transform_indices = @transform_2, window_bounds = array<i64: 8, 1>}, {pipeline_mode = #tpu.pipeline_mode<synchronous>, transform_indices = @transform_3, window_bounds = array<i64: 9, 8, 8>}, {pipeline_mode = #tpu.pipeline_mode<synchronous>, transform_indices = @transform_4, window_bounds = array<i64: 8, 1>}, {pipeline_mode = #tpu.pipeline_mode<synchronous>, transform_indices = @transform_5, window_bounds = array<i64: 8, 4>}, {pipeline_mode = #tpu.pipeline_mode<synchronous>, transform_indices = @transform_6, window_bounds = array<i64: 8, 1>}, {transform_indices = @transform_7, window_bounds = array<i64: 8, 512>}]} {
    %c0 = arith.constant 0 : index
    %c0_0 = arith.constant 0 : index
    %0 = vector.load %arg1[%c0, %c0_0] : memref<4x512xf32, #tpu.memory_space<vmem>>, vector<4x512xf32>
    %1 = tpu.iota {dimensions = array<i32: 1>} : vector<1x512xi32>
    %c16_i32 = arith.constant 16 : i32
    %c0_i32 = arith.constant 0 : i32
    %2 = arith.cmpi eq, %c16_i32, %c0_i32 : i32
    %c1_i32 = arith.constant 1 : i32
    %3 = arith.select %2, %c1_i32, %c16_i32 : i32
    %4 = vector.broadcast %3 : i32 to vector<1x512xi32>
    %5 = arith.remsi %1, %4 : vector<1x512xi32>
    %c0_i32_1 = arith.constant 0 : i32
    %6 = vector.broadcast %c0_i32_1 : i32 to vector<1x512xi32>
    %7 = arith.cmpi ne, %5, %6 : vector<1x512xi32>
    %c0_i32_2 = arith.constant 0 : i32
    %8 = vector.broadcast %c0_i32_2 : i32 to vector<1x512xi32>
    %9 = arith.cmpi slt, %5, %8 : vector<1x512xi32>
    %c0_i32_3 = arith.constant 0 : i32
    %10 = arith.cmpi slt, %3, %c0_i32_3 : i32
    %11 = vector.broadcast %10 : i1 to vector<1x512xi1>
    %12 = vector.broadcast %11 : vector<1x512xi1> to vector<1x512xi1>
    %13 = arith.xori %9, %12 : vector<1x512xi1>
    %14 = arith.andi %13, %7 : vector<1x512xi1>
    %15 = vector.broadcast %3 : i32 to vector<1x512xi32>
    %16 = arith.addi %5, %15 : vector<1x512xi32>
    %17 = arith.select %14, %16, %5 : vector<1x512xi1>, vector<1x512xi32>
    %c256_i32 = arith.constant 256 : i32
    %c0_i32_4 = arith.constant 0 : i32
    %18 = arith.cmpi eq, %c256_i32, %c0_i32_4 : i32
    %c1_i32_5 = arith.constant 1 : i32
    %19 = arith.select %18, %c1_i32_5, %c256_i32 : i32
    %20 = vector.broadcast %19 : i32 to vector<1x512xi32>
    %21 = arith.remsi %1, %20 : vector<1x512xi32>
    %c0_i32_6 = arith.constant 0 : i32
    %22 = vector.broadcast %c0_i32_6 : i32 to vector<1x512xi32>
    %23 = arith.cmpi ne, %21, %22 : vector<1x512xi32>
    %c0_i32_7 = arith.constant 0 : i32
    %24 = vector.broadcast %c0_i32_7 : i32 to vector<1x512xi32>
    %25 = arith.cmpi slt, %21, %24 : vector<1x512xi32>
    %c0_i32_8 = arith.constant 0 : i32
    %26 = arith.cmpi slt, %19, %c0_i32_8 : i32
    %27 = vector.broadcast %26 : i1 to vector<1x512xi1>
    %28 = vector.broadcast %27 : vector<1x512xi1> to vector<1x512xi1>
    %29 = arith.xori %25, %28 : vector<1x512xi1>
    %30 = arith.andi %29, %23 : vector<1x512xi1>
    %31 = vector.broadcast %19 : i32 to vector<1x512xi32>
    %32 = arith.addi %21, %31 : vector<1x512xi32>
    %33 = arith.select %30, %32, %21 : vector<1x512xi1>, vector<1x512xi32>
    %c1_i32_9 = arith.constant 1 : i32
    %34 = vector.broadcast %c1_i32_9 : i32 to vector<1x512xi32>
    %35 = arith.cmpi sge, %17, %34 : vector<1x512xi32>
    %c15_i32 = arith.constant 15 : i32
    %36 = vector.broadcast %c15_i32 : i32 to vector<1x512xi32>
    %37 = arith.cmpi slt, %17, %36 : vector<1x512xi32>
    %c16_i32_10 = arith.constant 16 : i32
    %38 = vector.broadcast %c16_i32_10 : i32 to vector<1x512xi32>
    %39 = arith.cmpi sge, %33, %38 : vector<1x512xi32>
    %c240_i32 = arith.constant 240 : i32
    %40 = vector.broadcast %c240_i32 : i32 to vector<1x512xi32>
    %41 = arith.cmpi slt, %33, %40 : vector<1x512xi32>
    %42 = arith.andi %39, %35 : vector<1x512xi1>
    %43 = arith.andi %39, %37 : vector<1x512xi1>
    %44 = arith.andi %41, %35 : vector<1x512xi1>
    %45 = arith.andi %41, %37 : vector<1x512xi1>
    %c0_11 = arith.constant 0 : index
    %c0_12 = arith.constant 0 : index
    %46 = vector.load %arg6[%c0_11, %c0_12] : memref<8x4xf32, #tpu.memory_space<vmem>>, vector<8x4xf32>
    %cst = arith.constant dense<0.000000e+00> : vector<8x512xf32>
    %47 = tpu.matmul %46, %0, %cst {dimension_numbers = #tpu.dot_dimension_numbers<[1], [0], [0], [1], [0, 0, 1, 1], [], []>} : vector<8x4xf32>, vector<4x512xf32>, vector<8x512xf32> -> vector<8x512xf32>
    %c0_13 = arith.constant 0 : index
    %c0_14 = arith.constant 0 : index
    %48 = vector.load %arg7[%c0_13, %c0_14] : memref<8x1xf32, #tpu.memory_space<vmem>>, vector<8x1xf32>
    %49 = vector.broadcast %48 : vector<8x1xf32> to vector<8x512xf32>
    %50 = arith.addf %47, %49 : vector<8x512xf32>
    %c0_15 = arith.constant 0 : index
    %c0_16 = arith.constant 0 : index
    %51 = vector.load %arg3[%c0_15, %c0_16] : memref<8x1xf32, #tpu.memory_space<vmem>>, vector<8x1xf32>
    %52 = vector.shape_cast %51 : vector<8x1xf32> to vector<8x1xf32>
    %53 = vector.broadcast %52 : vector<8x1xf32> to vector<8x512xf32>
    %c17_i32 = arith.constant 17 : i32
    %54 = tpu.dynamic_rotate %0 by %c17_i32 dim 1 : vector<4x512xf32>, i32 -> vector<4x512xf32>
    %cst_17 = arith.constant 0.000000e+00 : f32
    %55 = vector.shape_cast %42 : vector<1x512xi1> to vector<1x512xi1>
    %56 = vector.broadcast %55 : vector<1x512xi1> to vector<4x512xi1>
    %57 = vector.broadcast %cst_17 : f32 to vector<4x512xf32>
    %58 = arith.select %56, %54, %57 : vector<4x512xi1>, vector<4x512xf32>
    %c0_18 = arith.constant 0 : index
    %c0_19 = arith.constant 0 : index
    %c0_20 = arith.constant 0 : index
    %59 = vector.load %arg2[%c0_18, %c0_19, %c0_20] : memref<9x8x4xf32, #tpu.memory_space<vmem>>, vector<1x8x4xf32>
    %60 = vector.shape_cast %59 : vector<1x8x4xf32> to vector<8x4xf32>
    %cst_21 = arith.constant dense<0.000000e+00> : vector<8x512xf32>
    %61 = tpu.matmul %60, %58, %cst_21 {dimension_numbers = #tpu.dot_dimension_numbers<[1], [0], [0], [1], [0, 0, 1, 1], [], []>} : vector<8x4xf32>, vector<4x512xf32>, vector<8x512xf32> -> vector<8x512xf32>
    %62 = arith.addf %53, %61 : vector<8x512xf32>
    %c16_i32_22 = arith.constant 16 : i32
    %63 = tpu.dynamic_rotate %0 by %c16_i32_22 dim 1 : vector<4x512xf32>, i32 -> vector<4x512xf32>
    %cst_23 = arith.constant 0.000000e+00 : f32
    %64 = vector.shape_cast %39 : vector<1x512xi1> to vector<1x512xi1>
    %65 = vector.broadcast %64 : vector<1x512xi1> to vector<4x512xi1>
    %66 = vector.broadcast %cst_23 : f32 to vector<4x512xf32>
    %67 = arith.select %65, %63, %66 : vector<4x512xi1>, vector<4x512xf32>
    %c1 = arith.constant 1 : index
    %c0_24 = arith.constant 0 : index
    %c0_25 = arith.constant 0 : index
    %68 = vector.load %arg2[%c1, %c0_24, %c0_25] : memref<9x8x4xf32, #tpu.memory_space<vmem>>, vector<1x8x4xf32>
    %69 = vector.shape_cast %68 : vector<1x8x4xf32> to vector<8x4xf32>
    %cst_26 = arith.constant dense<0.000000e+00> : vector<8x512xf32>
    %70 = tpu.matmul %69, %67, %cst_26 {dimension_numbers = #tpu.dot_dimension_numbers<[1], [0], [0], [1], [0, 0, 1, 1], [], []>} : vector<8x4xf32>, vector<4x512xf32>, vector<8x512xf32> -> vector<8x512xf32>
    %71 = arith.addf %62, %70 : vector<8x512xf32>
    %c15_i32_27 = arith.constant 15 : i32
    %72 = tpu.dynamic_rotate %0 by %c15_i32_27 dim 1 : vector<4x512xf32>, i32 -> vector<4x512xf32>
    %cst_28 = arith.constant 0.000000e+00 : f32
    %73 = vector.shape_cast %43 : vector<1x512xi1> to vector<1x512xi1>
    %74 = vector.broadcast %73 : vector<1x512xi1> to vector<4x512xi1>
    %75 = vector.broadcast %cst_28 : f32 to vector<4x512xf32>
    %76 = arith.select %74, %72, %75 : vector<4x512xi1>, vector<4x512xf32>
    %c2 = arith.constant 2 : index
    %c0_29 = arith.constant 0 : index
    %c0_30 = arith.constant 0 : index
    %77 = vector.load %arg2[%c2, %c0_29, %c0_30] : memref<9x8x4xf32, #tpu.memory_space<vmem>>, vector<1x8x4xf32>
    %78 = vector.shape_cast %77 : vector<1x8x4xf32> to vector<8x4xf32>
    %cst_31 = arith.constant dense<0.000000e+00> : vector<8x512xf32>
    %79 = tpu.matmul %78, %76, %cst_31 {dimension_numbers = #tpu.dot_dimension_numbers<[1], [0], [0], [1], [0, 0, 1, 1], [], []>} : vector<8x4xf32>, vector<4x512xf32>, vector<8x512xf32> -> vector<8x512xf32>
    %80 = arith.addf %71, %79 : vector<8x512xf32>
    %c1_i32_32 = arith.constant 1 : i32
    %81 = tpu.dynamic_rotate %0 by %c1_i32_32 dim 1 : vector<4x512xf32>, i32 -> vector<4x512xf32>
    %cst_33 = arith.constant 0.000000e+00 : f32
    %82 = vector.shape_cast %35 : vector<1x512xi1> to vector<1x512xi1>
    %83 = vector.broadcast %82 : vector<1x512xi1> to vector<4x512xi1>
    %84 = vector.broadcast %cst_33 : f32 to vector<4x512xf32>
    %85 = arith.select %83, %81, %84 : vector<4x512xi1>, vector<4x512xf32>
    %c3 = arith.constant 3 : index
    %c0_34 = arith.constant 0 : index
    %c0_35 = arith.constant 0 : index
    %86 = vector.load %arg2[%c3, %c0_34, %c0_35] : memref<9x8x4xf32, #tpu.memory_space<vmem>>, vector<1x8x4xf32>
    %87 = vector.shape_cast %86 : vector<1x8x4xf32> to vector<8x4xf32>
    %cst_36 = arith.constant dense<0.000000e+00> : vector<8x512xf32>
    %88 = tpu.matmul %87, %85, %cst_36 {dimension_numbers = #tpu.dot_dimension_numbers<[1], [0], [0], [1], [0, 0, 1, 1], [], []>} : vector<8x4xf32>, vector<4x512xf32>, vector<8x512xf32> -> vector<8x512xf32>
    %89 = arith.addf %80, %88 : vector<8x512xf32>
    %c4 = arith.constant 4 : index
    %c0_37 = arith.constant 0 : index
    %c0_38 = arith.constant 0 : index
    %90 = vector.load %arg2[%c4, %c0_37, %c0_38] : memref<9x8x4xf32, #tpu.memory_space<vmem>>, vector<1x8x4xf32>
    %91 = vector.shape_cast %90 : vector<1x8x4xf32> to vector<8x4xf32>
    %cst_39 = arith.constant dense<0.000000e+00> : vector<8x512xf32>
    %92 = tpu.matmul %91, %0, %cst_39 {dimension_numbers = #tpu.dot_dimension_numbers<[1], [0], [0], [1], [0, 0, 1, 1], [], []>} : vector<8x4xf32>, vector<4x512xf32>, vector<8x512xf32> -> vector<8x512xf32>
    %93 = arith.addf %89, %92 : vector<8x512xf32>
    %c511_i32 = arith.constant 511 : i32
    %94 = tpu.dynamic_rotate %0 by %c511_i32 dim 1 : vector<4x512xf32>, i32 -> vector<4x512xf32>
    %cst_40 = arith.constant 0.000000e+00 : f32
    %95 = vector.shape_cast %37 : vector<1x512xi1> to vector<1x512xi1>
    %96 = vector.broadcast %95 : vector<1x512xi1> to vector<4x512xi1>
    %97 = vector.broadcast %cst_40 : f32 to vector<4x512xf32>
    %98 = arith.select %96, %94, %97 : vector<4x512xi1>, vector<4x512xf32>
    %c5 = arith.constant 5 : index
    %c0_41 = arith.constant 0 : index
    %c0_42 = arith.constant 0 : index
    %99 = vector.load %arg2[%c5, %c0_41, %c0_42] : memref<9x8x4xf32, #tpu.memory_space<vmem>>, vector<1x8x4xf32>
    %100 = vector.shape_cast %99 : vector<1x8x4xf32> to vector<8x4xf32>
    %cst_43 = arith.constant dense<0.000000e+00> : vector<8x512xf32>
    %101 = tpu.matmul %100, %98, %cst_43 {dimension_numbers = #tpu.dot_dimension_numbers<[1], [0], [0], [1], [0, 0, 1, 1], [], []>} : vector<8x4xf32>, vector<4x512xf32>, vector<8x512xf32> -> vector<8x512xf32>
    %102 = arith.addf %93, %101 : vector<8x512xf32>
    %c497_i32 = arith.constant 497 : i32
    %103 = tpu.dynamic_rotate %0 by %c497_i32 dim 1 : vector<4x512xf32>, i32 -> vector<4x512xf32>
    %cst_44 = arith.constant 0.000000e+00 : f32
    %104 = vector.shape_cast %44 : vector<1x512xi1> to vector<1x512xi1>
    %105 = vector.broadcast %104 : vector<1x512xi1> to vector<4x512xi1>
    %106 = vector.broadcast %cst_44 : f32 to vector<4x512xf32>
    %107 = arith.select %105, %103, %106 : vector<4x512xi1>, vector<4x512xf32>
    %c6 = arith.constant 6 : index
    %c0_45 = arith.constant 0 : index
    %c0_46 = arith.constant 0 : index
    %108 = vector.load %arg2[%c6, %c0_45, %c0_46] : memref<9x8x4xf32, #tpu.memory_space<vmem>>, vector<1x8x4xf32>
    %109 = vector.shape_cast %108 : vector<1x8x4xf32> to vector<8x4xf32>
    %cst_47 = arith.constant dense<0.000000e+00> : vector<8x512xf32>
    %110 = tpu.matmul %109, %107, %cst_47 {dimension_numbers = #tpu.dot_dimension_numbers<[1], [0], [0], [1], [0, 0, 1, 1], [], []>} : vector<8x4xf32>, vector<4x512xf32>, vector<8x512xf32> -> vector<8x512xf32>
    %111 = arith.addf %102, %110 : vector<8x512xf32>
    %c496_i32 = arith.constant 496 : i32
    %112 = tpu.dynamic_rotate %0 by %c496_i32 dim 1 : vector<4x512xf32>, i32 -> vector<4x512xf32>
    %cst_48 = arith.constant 0.000000e+00 : f32
    %113 = vector.shape_cast %41 : vector<1x512xi1> to vector<1x512xi1>
    %114 = vector.broadcast %113 : vector<1x512xi1> to vector<4x512xi1>
    %115 = vector.broadcast %cst_48 : f32 to vector<4x512xf32>
    %116 = arith.select %114, %112, %115 : vector<4x512xi1>, vector<4x512xf32>
    %c7 = arith.constant 7 : index
    %c0_49 = arith.constant 0 : index
    %c0_50 = arith.constant 0 : index
    %117 = vector.load %arg2[%c7, %c0_49, %c0_50] : memref<9x8x4xf32, #tpu.memory_space<vmem>>, vector<1x8x4xf32>
    %118 = vector.shape_cast %117 : vector<1x8x4xf32> to vector<8x4xf32>
    %cst_51 = arith.constant dense<0.000000e+00> : vector<8x512xf32>
    %119 = tpu.matmul %118, %116, %cst_51 {dimension_numbers = #tpu.dot_dimension_numbers<[1], [0], [0], [1], [0, 0, 1, 1], [], []>} : vector<8x4xf32>, vector<4x512xf32>, vector<8x512xf32> -> vector<8x512xf32>
    %120 = arith.addf %111, %119 : vector<8x512xf32>
    %c495_i32 = arith.constant 495 : i32
    %121 = tpu.dynamic_rotate %0 by %c495_i32 dim 1 : vector<4x512xf32>, i32 -> vector<4x512xf32>
    %cst_52 = arith.constant 0.000000e+00 : f32
    %122 = vector.shape_cast %45 : vector<1x512xi1> to vector<1x512xi1>
    %123 = vector.broadcast %122 : vector<1x512xi1> to vector<4x512xi1>
    %124 = vector.broadcast %cst_52 : f32 to vector<4x512xf32>
    %125 = arith.select %123, %121, %124 : vector<4x512xi1>, vector<4x512xf32>
    %c8 = arith.constant 8 : index
    %c0_53 = arith.constant 0 : index
    %c0_54 = arith.constant 0 : index
    %126 = vector.load %arg2[%c8, %c0_53, %c0_54] : memref<9x8x4xf32, #tpu.memory_space<vmem>>, vector<1x8x4xf32>
    %127 = vector.shape_cast %126 : vector<1x8x4xf32> to vector<8x4xf32>
    %cst_55 = arith.constant dense<0.000000e+00> : vector<8x512xf32>
    %128 = tpu.matmul %127, %125, %cst_55 {dimension_numbers = #tpu.dot_dimension_numbers<[1], [0], [0], [1], [0, 0, 1, 1], [], []>} : vector<8x4xf32>, vector<4x512xf32>, vector<8x512xf32> -> vector<8x512xf32>
    %129 = arith.addf %120, %128 : vector<8x512xf32>
    %c0_56 = arith.constant 0 : index
    %c0_57 = arith.constant 0 : index
    %130 = vector.load %arg5[%c0_56, %c0_57] : memref<8x1xf32, #tpu.memory_space<vmem>>, vector<8x1xf32>
    %131 = vector.broadcast %130 : vector<8x1xf32> to vector<8x512xf32>
    %132 = arith.addf %50, %131 : vector<8x512xf32>
    %c17_i32_58 = arith.constant 17 : i32
    %133 = tpu.dynamic_rotate %129 by %c17_i32_58 dim 1 : vector<8x512xf32>, i32 -> vector<8x512xf32>
    %cst_59 = arith.constant 0.000000e+00 : f32
    %134 = vector.shape_cast %42 : vector<1x512xi1> to vector<1x512xi1>
    %135 = vector.broadcast %134 : vector<1x512xi1> to vector<8x512xi1>
    %136 = vector.broadcast %cst_59 : f32 to vector<8x512xf32>
    %137 = arith.select %135, %133, %136 : vector<8x512xi1>, vector<8x512xf32>
    %c0_60 = arith.constant 0 : index
    %c0_61 = arith.constant 0 : index
    %c0_62 = arith.constant 0 : index
    %138 = vector.load %arg4[%c0_60, %c0_61, %c0_62] : memref<9x8x8xf32, #tpu.memory_space<vmem>>, vector<1x8x8xf32>
    %139 = vector.shape_cast %138 : vector<1x8x8xf32> to vector<8x8xf32>
    %cst_63 = arith.constant dense<0.000000e+00> : vector<8x512xf32>
    %140 = tpu.matmul %139, %137, %cst_63 {dimension_numbers = #tpu.dot_dimension_numbers<[1], [0], [0], [1], [0, 0, 1, 1], [], []>} : vector<8x8xf32>, vector<8x512xf32>, vector<8x512xf32> -> vector<8x512xf32>
    %141 = arith.addf %132, %140 : vector<8x512xf32>
    %c16_i32_64 = arith.constant 16 : i32
    %142 = tpu.dynamic_rotate %129 by %c16_i32_64 dim 1 : vector<8x512xf32>, i32 -> vector<8x512xf32>
    %cst_65 = arith.constant 0.000000e+00 : f32
    %143 = vector.shape_cast %39 : vector<1x512xi1> to vector<1x512xi1>
    %144 = vector.broadcast %143 : vector<1x512xi1> to vector<8x512xi1>
    %145 = vector.broadcast %cst_65 : f32 to vector<8x512xf32>
    %146 = arith.select %144, %142, %145 : vector<8x512xi1>, vector<8x512xf32>
    %c1_66 = arith.constant 1 : index
    %c0_67 = arith.constant 0 : index
    %c0_68 = arith.constant 0 : index
    %147 = vector.load %arg4[%c1_66, %c0_67, %c0_68] : memref<9x8x8xf32, #tpu.memory_space<vmem>>, vector<1x8x8xf32>
    %148 = vector.shape_cast %147 : vector<1x8x8xf32> to vector<8x8xf32>
    %cst_69 = arith.constant dense<0.000000e+00> : vector<8x512xf32>
    %149 = tpu.matmul %148, %146, %cst_69 {dimension_numbers = #tpu.dot_dimension_numbers<[1], [0], [0], [1], [0, 0, 1, 1], [], []>} : vector<8x8xf32>, vector<8x512xf32>, vector<8x512xf32> -> vector<8x512xf32>
    %150 = arith.addf %141, %149 : vector<8x512xf32>
    %c15_i32_70 = arith.constant 15 : i32
    %151 = tpu.dynamic_rotate %129 by %c15_i32_70 dim 1 : vector<8x512xf32>, i32 -> vector<8x512xf32>
    %cst_71 = arith.constant 0.000000e+00 : f32
    %152 = vector.shape_cast %43 : vector<1x512xi1> to vector<1x512xi1>
    %153 = vector.broadcast %152 : vector<1x512xi1> to vector<8x512xi1>
    %154 = vector.broadcast %cst_71 : f32 to vector<8x512xf32>
    %155 = arith.select %153, %151, %154 : vector<8x512xi1>, vector<8x512xf32>
    %c2_72 = arith.constant 2 : index
    %c0_73 = arith.constant 0 : index
    %c0_74 = arith.constant 0 : index
    %156 = vector.load %arg4[%c2_72, %c0_73, %c0_74] : memref<9x8x8xf32, #tpu.memory_space<vmem>>, vector<1x8x8xf32>
    %157 = vector.shape_cast %156 : vector<1x8x8xf32> to vector<8x8xf32>
    %cst_75 = arith.constant dense<0.000000e+00> : vector<8x512xf32>
    %158 = tpu.matmul %157, %155, %cst_75 {dimension_numbers = #tpu.dot_dimension_numbers<[1], [0], [0], [1], [0, 0, 1, 1], [], []>} : vector<8x8xf32>, vector<8x512xf32>, vector<8x512xf32> -> vector<8x512xf32>
    %159 = arith.addf %150, %158 : vector<8x512xf32>
    %c1_i32_76 = arith.constant 1 : i32
    %160 = tpu.dynamic_rotate %129 by %c1_i32_76 dim 1 : vector<8x512xf32>, i32 -> vector<8x512xf32>
    %cst_77 = arith.constant 0.000000e+00 : f32
    %161 = vector.shape_cast %35 : vector<1x512xi1> to vector<1x512xi1>
    %162 = vector.broadcast %161 : vector<1x512xi1> to vector<8x512xi1>
    %163 = vector.broadcast %cst_77 : f32 to vector<8x512xf32>
    %164 = arith.select %162, %160, %163 : vector<8x512xi1>, vector<8x512xf32>
    %c3_78 = arith.constant 3 : index
    %c0_79 = arith.constant 0 : index
    %c0_80 = arith.constant 0 : index
    %165 = vector.load %arg4[%c3_78, %c0_79, %c0_80] : memref<9x8x8xf32, #tpu.memory_space<vmem>>, vector<1x8x8xf32>
    %166 = vector.shape_cast %165 : vector<1x8x8xf32> to vector<8x8xf32>
    %cst_81 = arith.constant dense<0.000000e+00> : vector<8x512xf32>
    %167 = tpu.matmul %166, %164, %cst_81 {dimension_numbers = #tpu.dot_dimension_numbers<[1], [0], [0], [1], [0, 0, 1, 1], [], []>} : vector<8x8xf32>, vector<8x512xf32>, vector<8x512xf32> -> vector<8x512xf32>
    %168 = arith.addf %159, %167 : vector<8x512xf32>
    %c4_82 = arith.constant 4 : index
    %c0_83 = arith.constant 0 : index
    %c0_84 = arith.constant 0 : index
    %169 = vector.load %arg4[%c4_82, %c0_83, %c0_84] : memref<9x8x8xf32, #tpu.memory_space<vmem>>, vector<1x8x8xf32>
    %170 = vector.shape_cast %169 : vector<1x8x8xf32> to vector<8x8xf32>
    %cst_85 = arith.constant dense<0.000000e+00> : vector<8x512xf32>
    %171 = tpu.matmul %170, %129, %cst_85 {dimension_numbers = #tpu.dot_dimension_numbers<[1], [0], [0], [1], [0, 0, 1, 1], [], []>} : vector<8x8xf32>, vector<8x512xf32>, vector<8x512xf32> -> vector<8x512xf32>
    %172 = arith.addf %168, %171 : vector<8x512xf32>
    %c511_i32_86 = arith.constant 511 : i32
    %173 = tpu.dynamic_rotate %129 by %c511_i32_86 dim 1 : vector<8x512xf32>, i32 -> vector<8x512xf32>
    %cst_87 = arith.constant 0.000000e+00 : f32
    %174 = vector.shape_cast %37 : vector<1x512xi1> to vector<1x512xi1>
    %175 = vector.broadcast %174 : vector<1x512xi1> to vector<8x512xi1>
    %176 = vector.broadcast %cst_87 : f32 to vector<8x512xf32>
    %177 = arith.select %175, %173, %176 : vector<8x512xi1>, vector<8x512xf32>
    %c5_88 = arith.constant 5 : index
    %c0_89 = arith.constant 0 : index
    %c0_90 = arith.constant 0 : index
    %178 = vector.load %arg4[%c5_88, %c0_89, %c0_90] : memref<9x8x8xf32, #tpu.memory_space<vmem>>, vector<1x8x8xf32>
    %179 = vector.shape_cast %178 : vector<1x8x8xf32> to vector<8x8xf32>
    %cst_91 = arith.constant dense<0.000000e+00> : vector<8x512xf32>
    %180 = tpu.matmul %179, %177, %cst_91 {dimension_numbers = #tpu.dot_dimension_numbers<[1], [0], [0], [1], [0, 0, 1, 1], [], []>} : vector<8x8xf32>, vector<8x512xf32>, vector<8x512xf32> -> vector<8x512xf32>
    %181 = arith.addf %172, %180 : vector<8x512xf32>
    %c497_i32_92 = arith.constant 497 : i32
    %182 = tpu.dynamic_rotate %129 by %c497_i32_92 dim 1 : vector<8x512xf32>, i32 -> vector<8x512xf32>
    %cst_93 = arith.constant 0.000000e+00 : f32
    %183 = vector.shape_cast %44 : vector<1x512xi1> to vector<1x512xi1>
    %184 = vector.broadcast %183 : vector<1x512xi1> to vector<8x512xi1>
    %185 = vector.broadcast %cst_93 : f32 to vector<8x512xf32>
    %186 = arith.select %184, %182, %185 : vector<8x512xi1>, vector<8x512xf32>
    %c6_94 = arith.constant 6 : index
    %c0_95 = arith.constant 0 : index
    %c0_96 = arith.constant 0 : index
    %187 = vector.load %arg4[%c6_94, %c0_95, %c0_96] : memref<9x8x8xf32, #tpu.memory_space<vmem>>, vector<1x8x8xf32>
    %188 = vector.shape_cast %187 : vector<1x8x8xf32> to vector<8x8xf32>
    %cst_97 = arith.constant dense<0.000000e+00> : vector<8x512xf32>
    %189 = tpu.matmul %188, %186, %cst_97 {dimension_numbers = #tpu.dot_dimension_numbers<[1], [0], [0], [1], [0, 0, 1, 1], [], []>} : vector<8x8xf32>, vector<8x512xf32>, vector<8x512xf32> -> vector<8x512xf32>
    %190 = arith.addf %181, %189 : vector<8x512xf32>
    %c496_i32_98 = arith.constant 496 : i32
    %191 = tpu.dynamic_rotate %129 by %c496_i32_98 dim 1 : vector<8x512xf32>, i32 -> vector<8x512xf32>
    %cst_99 = arith.constant 0.000000e+00 : f32
    %192 = vector.shape_cast %41 : vector<1x512xi1> to vector<1x512xi1>
    %193 = vector.broadcast %192 : vector<1x512xi1> to vector<8x512xi1>
    %194 = vector.broadcast %cst_99 : f32 to vector<8x512xf32>
    %195 = arith.select %193, %191, %194 : vector<8x512xi1>, vector<8x512xf32>
    %c7_100 = arith.constant 7 : index
    %c0_101 = arith.constant 0 : index
    %c0_102 = arith.constant 0 : index
    %196 = vector.load %arg4[%c7_100, %c0_101, %c0_102] : memref<9x8x8xf32, #tpu.memory_space<vmem>>, vector<1x8x8xf32>
    %197 = vector.shape_cast %196 : vector<1x8x8xf32> to vector<8x8xf32>
    %cst_103 = arith.constant dense<0.000000e+00> : vector<8x512xf32>
    %198 = tpu.matmul %197, %195, %cst_103 {dimension_numbers = #tpu.dot_dimension_numbers<[1], [0], [0], [1], [0, 0, 1, 1], [], []>} : vector<8x8xf32>, vector<8x512xf32>, vector<8x512xf32> -> vector<8x512xf32>
    %199 = arith.addf %190, %198 : vector<8x512xf32>
    %c495_i32_104 = arith.constant 495 : i32
    %200 = tpu.dynamic_rotate %129 by %c495_i32_104 dim 1 : vector<8x512xf32>, i32 -> vector<8x512xf32>
    %cst_105 = arith.constant 0.000000e+00 : f32
    %201 = vector.shape_cast %45 : vector<1x512xi1> to vector<1x512xi1>
    %202 = vector.broadcast %201 : vector<1x512xi1> to vector<8x512xi1>
    %203 = vector.broadcast %cst_105 : f32 to vector<8x512xf32>
    %204 = arith.select %202, %200, %203 : vector<8x512xi1>, vector<8x512xf32>
    %c8_106 = arith.constant 8 : index
    %c0_107 = arith.constant 0 : index
    %c0_108 = arith.constant 0 : index
    %205 = vector.load %arg4[%c8_106, %c0_107, %c0_108] : memref<9x8x8xf32, #tpu.memory_space<vmem>>, vector<1x8x8xf32>
    %206 = vector.shape_cast %205 : vector<1x8x8xf32> to vector<8x8xf32>
    %cst_109 = arith.constant dense<0.000000e+00> : vector<8x512xf32>
    %207 = tpu.matmul %206, %204, %cst_109 {dimension_numbers = #tpu.dot_dimension_numbers<[1], [0], [0], [1], [0, 0, 1, 1], [], []>} : vector<8x8xf32>, vector<8x512xf32>, vector<8x512xf32> -> vector<8x512xf32>
    %208 = arith.addf %199, %207 : vector<8x512xf32>
    %c0_110 = arith.constant 0 : index
    %c0_111 = arith.constant 0 : index
    %209 = vector.load %arg8[%c0_110, %c0_111] : memref<8x512xf32, #tpu.memory_space<vmem>>, vector<8x512xf32>
    tpu.vector_store %arg8[%c0_110, %c0_111], %208 {strides = array<i32>} : memref<8x512xf32, #tpu.memory_space<vmem>>, vector<8x512xf32>,
    return
  }
  func.func @transform_0(%arg0: i32) -> (i32, i32) {
    %c0_i32 = arith.constant 0 : i32
    %c0_i32_0 = arith.constant 0 : i32
    return %c0_i32, %arg0 : i32, i32
  }
  func.func @transform_1(%arg0: i32) -> (i32, i32, i32) {
    %c0_i32 = arith.constant 0 : i32
    %c0_i32_0 = arith.constant 0 : i32
    %c0_i32_1 = arith.constant 0 : i32
    %c0_i32_2 = arith.constant 0 : i32
    return %c0_i32, %c0_i32_0, %c0_i32_1 : i32, i32, i32
  }
  func.func @transform_2(%arg0: i32) -> (i32, i32) {
    %c0_i32 = arith.constant 0 : i32
    %c0_i32_0 = arith.constant 0 : i32
    %c0_i32_1 = arith.constant 0 : i32
    return %c0_i32, %c0_i32_0 : i32, i32
  }
  func.func @transform_3(%arg0: i32) -> (i32, i32, i32) {
    %c0_i32 = arith.constant 0 : i32
    %c0_i32_0 = arith.constant 0 : i32
    %c0_i32_1 = arith.constant 0 : i32
    %c0_i32_2 = arith.constant 0 : i32
    return %c0_i32, %c0_i32_0, %c0_i32_1 : i32, i32, i32
  }
  func.func @transform_4(%arg0: i32) -> (i32, i32) {
    %c0_i32 = arith.constant 0 : i32
    %c0_i32_0 = arith.constant 0 : i32
    %c0_i32_1 = arith.constant 0 : i32
    return %c0_i32, %c0_i32_0 : i32, i32
  }
  func.func @transform_5(%arg0: i32) -> (i32, i32) {
    %c0_i32 = arith.constant 0 : i32
    %c0_i32_0 = arith.constant 0 : i32
    %c0_i32_1 = arith.constant 0 : i32
    return %c0_i32, %c0_i32_0 : i32, i32
  }
  func.func @transform_6(%arg0: i32) -> (i32, i32) {
    %c0_i32 = arith.constant 0 : i32
    %c0_i32_0 = arith.constant 0 : i32
    %c0_i32_1 = arith.constant 0 : i32
    return %c0_i32, %c0_i32_0 : i32, i32
  }
  func.func @transform_7(%arg0: i32) -> (i32, i32) {
    %c0_i32 = arith.constant 0 : i32
    %c0_i32_0 = arith.constant 0 : i32
    return %c0_i32, %arg0 : i32, i32
  }
}

</mosaic_0001>

<llo_original>
// kernel: tpu_custom_call.1
$region0: #{tpu_custom_call.1}
  #allocation0 [shape = 'u32[]', space=smem, size = 0x4, offset = 0x4, fixed_abs, tag = 'smem constant byte address 0x4 - core index']
  #allocation1 [shape = 'u32[144,128]{1,0:T(1,128)}', space=vmem, size = 0x12000, scoped, tag = 'internal scratch']
  %s0 = inlined_call_operand.vmem [shape: f32[4,512], index: 0, kind: input, shape index: {}]
  %s1 = inlined_call_operand.vmem [shape: f32[9,8,4], index: 1, kind: input, shape index: {}]
  %s2 = inlined_call_operand.vmem [shape: f32[8,1], index: 2, kind: input, shape index: {}]
  %s3 = inlined_call_operand.vmem [shape: f32[9,8,8], index: 3, kind: input, shape index: {}]
  %s4 = inlined_call_operand.vmem [shape: f32[8,1], index: 4, kind: input, shape index: {}]
  %s5 = inlined_call_operand.vmem [shape: f32[8,4], index: 5, kind: input, shape index: {}]
  %s6 = inlined_call_operand.vmem [shape: f32[8,1], index: 6, kind: input, shape index: {}]
  %s7 = inlined_call_operand.hbm [shape: f32[8,512], index: 7, kind: output, shape index: {}]
  %s8 = sld [smem:[#allocation0]]
  $region38: #{tpu_custom_call.1} parent=0
    _
  %s10 = ssub.s32 1, %s8
  %s11 = scalar_select 0, %s10, %s8
  $region1: #{tpu_custom_call.1} parent=0
    #allocation2 [shape = 'u8[16384]{0}', space=vmem, size = 0x4000, scoped, tag = 'output window, operand 0, single buffered']
    #allocation3 [shape = 's32[1]{0}', space=sflag, size = 0x4, scoped, tag = 'scoped memory for tpu_custom_call.1']
    %12 = vsyncpa [#allocation3], 0
    // Predicated region
    $region2: #{tpu_custom_call.1} parent=1 // pred_check
      _
    $region3: #{tpu_custom_call.1} parent=1 // pred_check_branch
      %14 = sbr.rel (0) target = $region5
    $region4: #{tpu_custom_call.1} parent=1 // pred_region
      _
    $region5: #{tpu_custom_call.1} parent=1 // pred_fallthru
      _
    // Predicated region
    $region6: #{tpu_custom_call.1} parent=1 // pred_check
      _
    $region7: #{tpu_custom_call.1} parent=1 // pred_check_branch
      %16 = sbr.rel (0) target = $region9
    $region8: #{tpu_custom_call.1} parent=1 // pred_region
      _
    $region9: #{tpu_custom_call.1} parent=1 // pred_fallthru
      _
    // Predicated region
    $region10: #{tpu_custom_call.1} parent=1 // pred_check
      _
    $region11: #{tpu_custom_call.1} parent=1 // pred_check_branch
      %18 = sbr.rel (0) target = $region13
    $region12: #{tpu_custom_call.1} parent=1 // pred_region
      _
    $region13: #{tpu_custom_call.1} parent=1 // pred_fallthru
      _
    // Predicated region
    $region14: #{tpu_custom_call.1} parent=1 // pred_check
      _
    $region15: #{tpu_custom_call.1} parent=1 // pred_check_branch
      %20 = sbr.rel (0) target = $region17
    $region16: #{tpu_custom_call.1} parent=1 // pred_region
      _
    $region17: #{tpu_custom_call.1} parent=1 // pred_fallthru
      _
    // Predicated region
    $region18: #{tpu_custom_call.1} parent=1 // pred_check
      _
    $region19: #{tpu_custom_call.1} parent=1 // pred_check_branch
      %22 = sbr.rel (0) target = $region21
    $region20: #{tpu_custom_call.1} parent=1 // pred_region
      _
    $region21: #{tpu_custom_call.1} parent=1 // pred_fallthru
      _
    // Predicated region
    $region22: #{tpu_custom_call.1} parent=1 // pred_check
      _
    $region23: #{tpu_custom_call.1} parent=1 // pred_check_branch
      %24 = sbr.rel (0) target = $region25
    $region24: #{tpu_custom_call.1} parent=1 // pred_region
      _
    $region25: #{tpu_custom_call.1} parent=1 // pred_fallthru
      _
    // Predicated region
    $region26: #{tpu_custom_call.1} parent=1 // pred_check
      _
    $region27: #{tpu_custom_call.1} parent=1 // pred_check_branch
      %26 = sbr.rel (0) target = $region29
    $region28: #{tpu_custom_call.1} parent=1 // pred_region
      _
    $region29: #{tpu_custom_call.1} parent=1 // pred_fallthru
      _
    %v27 = vld [vmem:[%s0] sm:$0xff]
    %v28 = vld [vmem:[%s0 + $0x8] sm:$0xff]
    %v29 = vlaneseq
    %v30 = vand.u32 %v29, 127
    %v31 = vadd.s32 %v30, 128
    %v32 = vadd.s32 %v30, 256
    %v33 = vadd.s32 %v30, 384
    %vm34 = vcmp.lt.s32.totalorder %v30, 0
    %v35 = vsub.s32 0, %v30
    %v36 = vsel %vm34, %v35, %v30
    %v37 = vshrl.u32 %v36, 4
    %v38 = vand.u32 %v36, 15
    %v39 = vsub.s32 0, %v38
    %v40 = vsel %vm34, %v39, %v38
    %vm41 = vcmp.lt.s32.totalorder %v31, 0
    %v42 = vsub.s32 0, %v31
    %v43 = vsel %vm41, %v42, %v31
    %v44 = vshrl.u32 %v43, 4
    %v45 = vand.u32 %v43, 15
    %v46 = vsub.s32 0, %v45
    %v47 = vsel %vm41, %v46, %v45
    %vm48 = vcmp.lt.s32.totalorder %v32, 0
    %v49 = vsub.s32 0, %v32
    %v50 = vsel %vm48, %v49, %v32
    %v51 = vshrl.u32 %v50, 4
    %v52 = vand.u32 %v50, 15
    %v53 = vsub.s32 0, %v52
    %v54 = vsel %vm48, %v53, %v52
    %vm55 = vcmp.lt.s32.totalorder %v33, 0
    %v56 = vsub.s32 0, %v33
    %v57 = vsel %vm55, %v56, %v33
    %v58 = vshrl.u32 %v57, 4
    %v59 = vand.u32 %v57, 15
    %v60 = vsub.s32 0, %v59
    %v61 = vsel %vm55, %v60, %v59
    %vm62 = vcmp.ne.s32.totalorder %v40, 0
    %vm63 = vcmp.ne.s32.totalorder %v47, 0
    %vm64 = vcmp.ne.s32.totalorder %v54, 0
    %vm65 = vcmp.ne.s32.totalorder %v61, 0
    %vm66 = vcmp.lt.s32.totalorder %v40, 0
    %vm67 = vcmp.lt.s32.totalorder %v47, 0
    %vm68 = vcmp.lt.s32.totalorder %v54, 0
    %vm69 = vcmp.lt.s32.totalorder %v61, 0
    %vm70 = vmand %vm66, %vm62
    %vm71 = vmand %vm67, %vm63
    %vm72 = vmand %vm68, %vm64
    %vm73 = vmand %vm69, %vm65
    %v74 = vadd.s32 %v40, 16
    %v75 = vadd.s32 %v47, 16
    %v76 = vadd.s32 %v54, 16
    %v77 = vadd.s32 %v61, 16
    %v78 = vsel %vm70, %v74, %v40
    %v79 = vsel %vm71, %v75, %v47
    %v80 = vsel %vm72, %v76, %v54
    %v81 = vsel %vm73, %v77, %v61
    %vm82 = vcmp.lt.s32.totalorder %v30, 0
    %v83 = vsub.s32 0, %v30
    %v84 = vsel %vm82, %v83, %v30
    %v85 = vshrl.u32 %v84, 8
    %v86 = vand.u32 %v84, 255
    %v87 = vsub.s32 0, %v86
    %v88 = vsel %vm82, %v87, %v86
    %vm89 = vcmp.lt.s32.totalorder %v31, 0
    %v90 = vsub.s32 0, %v31
    %v91 = vsel %vm89, %v90, %v31
    %v92 = vshrl.u32 %v91, 8
    %v93 = vand.u32 %v91, 255
    %v94 = vsub.s32 0, %v93
    %v95 = vsel %vm89, %v94, %v93
    %vm96 = vcmp.lt.s32.totalorder %v32, 0
    %v97 = vsub.s32 0, %v32
    %v98 = vsel %vm96, %v97, %v32
    %v99 = vshrl.u32 %v98, 8
    %v100 = vand.u32 %v98, 255
    %v101 = vsub.s32 0, %v100
    %v102 = vsel %vm96, %v101, %v100
    %vm103 = vcmp.lt.s32.totalorder %v33, 0
    %v104 = vsub.s32 0, %v33
    %v105 = vsel %vm103, %v104, %v33
    %v106 = vshrl.u32 %v105, 8
    %v107 = vand.u32 %v105, 255
    %v108 = vsub.s32 0, %v107
    %v109 = vsel %vm103, %v108, %v107
    %vm110 = vcmp.ne.s32.totalorder %v88, 0
    %vm111 = vcmp.ne.s32.totalorder %v95, 0
    %vm112 = vcmp.ne.s32.totalorder %v102, 0
    %vm113 = vcmp.ne.s32.totalorder %v109, 0
    %vm114 = vcmp.lt.s32.totalorder %v88, 0
    %vm115 = vcmp.lt.s32.totalorder %v95, 0
    %vm116 = vcmp.lt.s32.totalorder %v102, 0
    %vm117 = vcmp.lt.s32.totalorder %v109, 0
    %vm118 = vmand %vm114, %vm110
    %vm119 = vmand %vm115, %vm111
    %vm120 = vmand %vm116, %vm112
    %vm121 = vmand %vm117, %vm113
    %v122 = vadd.s32 %v88, 256
    %v123 = vadd.s32 %v95, 256
    %v124 = vadd.s32 %v102, 256
    %v125 = vadd.s32 %v109, 256
    %v126 = vsel %vm118, %v122, %v88
    %v127 = vsel %vm119, %v123, %v95
    %v128 = vsel %vm120, %v124, %v102
    %v129 = vsel %vm121, %v125, %v109
    %vm130 = vcmp.ge.s32.totalorder %v78, 1
    %vm131 = vcmp.ge.s32.totalorder %v79, 1
    %vm132 = vcmp.ge.s32.totalorder %v80, 1
    %vm133 = vcmp.ge.s32.totalorder %v81, 1
    %vm134 = vcmp.lt.s32.totalorder %v78, 15
    %vm135 = vcmp.lt.s32.totalorder %v79, 15
    %vm136 = vcmp.lt.s32.totalorder %v80, 15
    %vm137 = vcmp.lt.s32.totalorder %v81, 15
    %vm138 = vcmp.ge.s32.totalorder %v126, 16
    %vm139 = vcmp.ge.s32.totalorder %v127, 16
    %vm140 = vcmp.ge.s32.totalorder %v128, 16
    %vm141 = vcmp.ge.s32.totalorder %v129, 16
    %vm142 = vcmp.lt.s32.totalorder %v126, 240
    %vm143 = vcmp.lt.s32.totalorder %v127, 240
    %vm144 = vcmp.lt.s32.totalorder %v128, 240
    %vm145 = vcmp.lt.s32.totalorder %v129, 240
    %vm146 = vmand %vm138, %vm130
    %vm147 = vmand %vm139, %vm131
    %vm148 = vmand %vm140, %vm132
    %vm149 = vmand %vm141, %vm133
    %vm150 = vmand %vm138, %vm134
    %vm151 = vmand %vm139, %vm135
    %vm152 = vmand %vm140, %vm136
    %vm153 = vmand %vm141, %vm137
    %vm154 = vmand %vm142, %vm130
    %vm155 = vmand %vm143, %vm131
    %vm156 = vmand %vm144, %vm132
    %vm157 = vmand %vm145, %vm133
    %vm158 = vmand %vm142, %vm134
    %vm159 = vmand %vm143, %vm135
    %vm160 = vmand %vm144, %vm136
    %vm161 = vmand %vm145, %vm137
    %v162 = vld [vmem:[%s5] sm:$0xff]
    %v163 = vld [vmem:[%s6] sm:$0xff]
    %165 = vset.pattern.permute.xlu0 0
    %166 = vperm.xlu0 %165, %v163
    %v167 = vpop.permute.xlu0 %166
    %v171 = vcombine.high %v27, %v27
    %v172 = vcombine.high %v28, %v28
    %vm173 = vcmask 31744
    %v175 = vsel %vm173, %v162, 0
    %vm177 = vcmask 1043456
    %v178 = vsel %vm177, %v27, 0
    %v180 = vsel %vm177, %v171, 0
    %v182 = vsel %vm177, %v28, 0
    %v184 = vsel %vm177, %v172, 0
    %186 = vmatprep.subr.mxu0 %v180
    %187 = vmatpush1.msra.mxu0 %v178
    %188 = vmatprep.subr.mxu0 0.0
    %189 = vmatpush1.msra.mxu0 0.0
    %190 = vmatprep.subr.mxu0 0.0
    %191 = vmatpush1.msra.mxu0 0.0
    %192 = vmatprep.subr.mxu0 0.0
    %193 = vmatpush1.msra.mxu0 0.0
    %194 = vmatprep.subr.mxu0 0.0
    %195 = vmatpush1.msra.mxu0 0.0
    %196 = vmatprep.subr.mxu0 0.0
    %197 = vmatpush1.msra.mxu0 0.0
    %198 = vmatprep.subr.mxu0 0.0
    %199 = vmatpush1.msra.mxu0 0.0
    %200 = vmatprep.subr.mxu0 0.0
    %201 = vmatpush1.msra.mxu0 0.0
    %202 = vmatprep.subr.mxu0 0.0
    %203 = vmatpush1.msra.mxu0 0.0
    %204 = vmatprep.subr.mxu0 0.0
    %205 = vmatpush1.msra.mxu0 0.0
    %206 = vmatprep.subr.mxu0 0.0
    %207 = vmatpush1.msra.mxu0 0.0
    %208 = vmatprep.subr.mxu0 0.0
    %209 = vmatpush1.msra.mxu0 0.0
    %210 = vmatprep.subr.mxu0 0.0
    %211 = vmatpush1.msra.mxu0 0.0
    %212 = vmatprep.subr.mxu0 0.0
    %213 = vmatpush1.msra.mxu0 0.0
    %214 = vmatprep.subr.mxu0 0.0
    %215 = vmatpush1.msra.mxu0 0.0
    %216 = vmatprep.subr.mxu0 0.0
    %217 = vmatpush1.msra.mxu0 0.0
    %218 = vmatprep.subr.mxu0 0.0
    %219 = vmatpush1.msra.mxu0 0.0
    %220 = vmatprep.subr.mxu0 0.0
    %221 = vmatpush1.msra.mxu0 0.0
    %222 = vmatprep.subr.mxu0 0.0
    %223 = vmatpush1.msra.mxu0 0.0
    %224 = vmatprep.subr.mxu0 0.0
    %225 = vmatpush1.msra.mxu0 0.0
    %226 = vmatprep.subr.mxu0 0.0
    %227 = vmatpush1.msra.mxu0 0.0
    %228 = vmatprep.subr.mxu0 0.0
    %229 = vmatpush1.msra.mxu0 0.0
    %230 = vmatprep.subr.mxu0 0.0
    %231 = vmatpush1.msra.mxu0 0.0
    %232 = vmatprep.subr.mxu0 0.0
    %233 = vmatpush1.msra.mxu0 0.0
    %234 = vmatprep.subr.mxu0 0.0
    %235 = vmatpush1.msra.mxu0 0.0
    %236 = vmatprep.subr.mxu0 0.0
    %237 = vmatpush1.msra.mxu0 0.0
    %238 = vmatprep.subr.mxu0 0.0
    %239 = vmatpush1.msra.mxu0 0.0
    %240 = vmatprep.subr.mxu0 0.0
    %241 = vmatpush1.msra.mxu0 0.0
    %242 = vmatprep.subr.mxu0 0.0
    %243 = vmatpush1.msra.mxu0 0.0
    %244 = vmatprep.subr.mxu0 0.0
    %245 = vmatpush1.msra.mxu0 0.0
    %246 = vmatprep.subr.mxu0 0.0
    %247 = vmatpush1.msra.mxu0 0.0
    %248 = vmatprep.subr.mxu0 0.0
    %249 = vmatpush1.msra.mxu0 0.0
    %250 = vmatprep.mubr.f32.mxu0 0.0
    %251 = vmatmul.mubr.f32.gmra.mrb[0].mxu0 %v175
    %v252 = vpop.f32.mrb[0].mxu0
    %v253 = vadd.f32 %v167, %v252
    %v254 = vpop.f32.mrb[0].mxu0
    %v255 = vadd.f32 %v167, %v254
    %256 = vdwg.mxu0
    %257 = vmatprep.subr.mxu0 %v184
    %258 = vmatpush1.msra.mxu0 %v182
    %259 = vmatprep.subr.mxu0 0.0
    %260 = vmatpush1.msra.mxu0 0.0
    %261 = vmatprep.subr.mxu0 0.0
    %262 = vmatpush1.msra.mxu0 0.0
    %263 = vmatprep.subr.mxu0 0.0
    %264 = vmatpush1.msra.mxu0 0.0
    %265 = vmatprep.subr.mxu0 0.0
    %266 = vmatpush1.msra.mxu0 0.0
    %267 = vmatprep.subr.mxu0 0.0
    %268 = vmatpush1.msra.mxu0 0.0
    %269 = vmatprep.subr.mxu0 0.0
    %270 = vmatpush1.msra.mxu0 0.0
    %271 = vmatprep.subr.mxu0 0.0
    %272 = vmatpush1.msra.mxu0 0.0
    %273 = vmatprep.subr.mxu0 0.0
    %274 = vmatpush1.msra.mxu0 0.0
    %275 = vmatprep.subr.mxu0 0.0
    %276 = vmatpush1.msra.mxu0 0.0
    %277 = vmatprep.subr.mxu0 0.0
    %278 = vmatpush1.msra.mxu0 0.0
    %279 = vmatprep.subr.mxu0 0.0
    %280 = vmatpush1.msra.mxu0 0.0
    %281 = vmatprep.subr.mxu0 0.0
    %282 = vmatpush1.msra.mxu0 0.0
    %283 = vmatprep.subr.mxu0 0.0
    %284 = vmatpush1.msra.mxu0 0.0
    %285 = vmatprep.subr.mxu0 0.0
    %286 = vmatpush1.msra.mxu0 0.0
    %287 = vmatprep.subr.mxu0 0.0
    %288 = vmatpush1.msra.mxu0 0.0
    %289 = vmatprep.subr.mxu0 0.0
    %290 = vmatpush1.msra.mxu0 0.0
    %291 = vmatprep.subr.mxu0 0.0
    %292 = vmatpush1.msra.mxu0 0.0
    %293 = vmatprep.subr.mxu0 0.0
    %294 = vmatpush1.msra.mxu0 0.0
    %295 = vmatprep.subr.mxu0 0.0
    %296 = vmatpush1.msra.mxu0 0.0
    %297 = vmatprep.subr.mxu0 0.0
    %298 = vmatpush1.msra.mxu0 0.0
    %299 = vmatprep.subr.mxu0 0.0
    %300 = vmatpush1.msra.mxu0 0.0
    %301 = vmatprep.subr.mxu0 0.0
    %302 = vmatpush1.msra.mxu0 0.0
    %303 = vmatprep.subr.mxu0 0.0
    %304 = vmatpush1.msra.mxu0 0.0
    %305 = vmatprep.subr.mxu0 0.0
    %306 = vmatpush1.msra.mxu0 0.0
    %307 = vmatprep.subr.mxu0 0.0
    %308 = vmatpush1.msra.mxu0 0.0
    %309 = vmatprep.subr.mxu0 0.0
    %310 = vmatpush1.msra.mxu0 0.0
    %311 = vmatprep.subr.mxu0 0.0
    %312 = vmatpush1.msra.mxu0 0.0
    %313 = vmatprep.subr.mxu0 0.0
    %314 = vmatpush1.msra.mxu0 0.0
    %315 = vmatprep.subr.mxu0 0.0
    %316 = vmatpush1.msra.mxu0 0.0
    %317 = vmatprep.subr.mxu0 0.0
    %318 = vmatpush1.msra.mxu0 0.0
    %319 = vmatprep.subr.mxu0 0.0
    %320 = vmatpush1.msra.mxu0 0.0
    %321 = vmatprep.mubr.f32.mxu0 0.0
    %322 = vmatmul.mubr.f32.gmra.mrb[0].mxu0 %v175
    %v323 = vpop.f32.mrb[0].mxu0
    %v324 = vadd.f32 %v167, %v323
    %v325 = vpop.f32.mrb[0].mxu0
    %v326 = vadd.f32 %v167, %v325
    %327 = vdwg.mxu0
    %v328 = vld [vmem:[%s2] sm:$0xff]
    %330 = vset.pattern.permute.xlu0 0
    %331 = vperm.xlu0 %330, %v328
    %v332 = vpop.permute.xlu0 %331
    %336 = vrot.lane.b32.xlu0 %v27, 17
    %v337 = vpop.permute.xlu0 %336
    %338 = vrot.lane.b32.xlu0 %v171, 17
    %v339 = vpop.permute.xlu0 %338
    %340 = vrot.lane.b32.xlu0 %v28, 17
    %v341 = vpop.permute.xlu0 %340
    %342 = vrot.lane.b32.xlu0 %v172, 17
    %v343 = vpop.permute.xlu0 %342
    %vm344 = vcmp.lt.s32.totalorder %v30, 17
    %v345 = vsel %vm344, %v341, %v343
    %v346 = vsel %vm344, %v339, %v341
    %v347 = vsel %vm344, %v337, %v339
    %v348 = vsel %vm344, %v343, %v337
    %v349 = vsel %vm146, 1, 0
    %v350 = vsel %vm147, 1, 0
    %v351 = vsel %vm148, 1, 0
    %v352 = vsel %vm149, 1, 0
    %vm353 = vcmp.eq.s32.totalorder %v349, 1
    %vm354 = vcmp.eq.s32.totalorder %v350, 1
    %vm355 = vcmp.eq.s32.totalorder %v351, 1
    %vm356 = vcmp.eq.s32.totalorder %v352, 1
    %v357 = vsel %vm353, %v348, 0.0
    %v358 = vsel %vm354, %v347, 0.0
    %v359 = vsel %vm355, %v346, 0.0
    %v360 = vsel %vm356, %v345, 0.0
    %v361 = vld [vmem:[%s1] sm:$0xff]
    %v363 = vsel %vm173, %v361, 0
    %v366 = vsel %vm177, %v357, 0
    %v369 = vsel %vm177, %v358, 0
    %v372 = vsel %vm177, %v359, 0
    %v375 = vsel %vm177, %v360, 0
    %377 = vmatprep.subr.mxu0 %v369
    %378 = vmatpush1.msra.mxu0 %v366
    %379 = vmatprep.subr.mxu0 0.0
    %380 = vmatpush1.msra.mxu0 0.0
    %381 = vmatprep.subr.mxu0 0.0
    %382 = vmatpush1.msra.mxu0 0.0
    %383 = vmatprep.subr.mxu0 0.0
    %384 = vmatpush1.msra.mxu0 0.0
    %385 = vmatprep.subr.mxu0 0.0
    %386 = vmatpush1.msra.mxu0 0.0
    %387 = vmatprep.subr.mxu0 0.0
    %388 = vmatpush1.msra.mxu0 0.0
    %389 = vmatprep.subr.mxu0 0.0
    %390 = vmatpush1.msra.mxu0 0.0
    %391 = vmatprep.subr.mxu0 0.0
    %392 = vmatpush1.msra.mxu0 0.0
    %393 = vmatprep.subr.mxu0 0.0
    %394 = vmatpush1.msra.mxu0 0.0
    %395 = vmatprep.subr.mxu0 0.0
    %396 = vmatpush1.msra.mxu0 0.0
    %397 = vmatprep.subr.mxu0 0.0
    %398 = vmatpush1.msra.mxu0 0.0
    %399 = vmatprep.subr.mxu0 0.0
    %400 = vmatpush1.msra.mxu0 0.0
    %401 = vmatprep.subr.mxu0 0.0
    %402 = vmatpush1.msra.mxu0 0.0
    %403 = vmatprep.subr.mxu0 0.0
    %404 = vmatpush1.msra.mxu0 0.0
    %405 = vmatprep.subr.mxu0 0.0
    %406 = vmatpush1.msra.mxu0 0.0
    %407 = vmatprep.subr.mxu0 0.0
    %408 = vmatpush1.msra.mxu0 0.0
    %409 = vmatprep.subr.mxu0 0.0
    %410 = vmatpush1.msra.mxu0 0.0
    %411 = vmatprep.subr.mxu0 0.0
    %412 = vmatpush1.msra.mxu0 0.0
    %413 = vmatprep.subr.mxu0 0.0
    %414 = vmatpush1.msra.mxu0 0.0
    %415 = vmatprep.subr.mxu0 0.0
    %416 = vmatpush1.msra.mxu0 0.0
    %417 = vmatprep.subr.mxu0 0.0
    %418 = vmatpush1.msra.mxu0 0.0
    %419 = vmatprep.subr.mxu0 0.0
    %420 = vmatpush1.msra.mxu0 0.0
    %421 = vmatprep.subr.mxu0 0.0
    %422 = vmatpush1.msra.mxu0 0.0
    %423 = vmatprep.subr.mxu0 0.0
    %424 = vmatpush1.msra.mxu0 0.0
    %425 = vmatprep.subr.mxu0 0.0
    %426 = vmatpush1.msra.mxu0 0.0
    %427 = vmatprep.subr.mxu0 0.0
    %428 = vmatpush1.msra.mxu0 0.0
    %429 = vmatprep.subr.mxu0 0.0
    %430 = vmatpush1.msra.mxu0 0.0
    %431 = vmatprep.subr.mxu0 0.0
    %432 = vmatpush1.msra.mxu0 0.0
    %433 = vmatprep.subr.mxu0 0.0
    %434 = vmatpush1.msra.mxu0 0.0
    %435 = vmatprep.subr.mxu0 0.0
    %436 = vmatpush1.msra.mxu0 0.0
    %437 = vmatprep.subr.mxu0 0.0
    %438 = vmatpush1.msra.mxu0 0.0
    %439 = vmatprep.subr.mxu0 0.0
    %440 = vmatpush1.msra.mxu0 0.0
    %441 = vmatprep.mubr.f32.mxu0 0.0
    %442 = vmatmul.mubr.f32.gmra.mrb[0].mxu0 %v363
    %v443 = vpop.f32.mrb[0].mxu0
    %v444 = vadd.f32 0.0, %v443
    %v445 = vpop.f32.mrb[0].mxu0
    %v446 = vadd.f32 0.0, %v445
    %447 = vdwg.mxu0
    %448 = vmatprep.subr.mxu0 %v375
    %449 = vmatpush1.msra.mxu0 %v372
    %450 = vmatprep.subr.mxu0 0.0
    %451 = vmatpush1.msra.mxu0 0.0
    %452 = vmatprep.subr.mxu0 0.0
    %453 = vmatpush1.msra.mxu0 0.0
    %454 = vmatprep.subr.mxu0 0.0
    %455 = vmatpush1.msra.mxu0 0.0
    %456 = vmatprep.subr.mxu0 0.0
    %457 = vmatpush1.msra.mxu0 0.0
    %458 = vmatprep.subr.mxu0 0.0
    %459 = vmatpush1.msra.mxu0 0.0
    %460 = vmatprep.subr.mxu0 0.0
    %461 = vmatpush1.msra.mxu0 0.0
    %462 = vmatprep.subr.mxu0 0.0
    %463 = vmatpush1.msra.mxu0 0.0
    %464 = vmatprep.subr.mxu0 0.0
    %465 = vmatpush1.msra.mxu0 0.0
    %466 = vmatprep.subr.mxu0 0.0
    %467 = vmatpush1.msra.mxu0 0.0
    %468 = vmatprep.subr.mxu0 0.0
    %469 = vmatpush1.msra.mxu0 0.0
    %470 = vmatprep.subr.mxu0 0.0
    %471 = vmatpush1.msra.mxu0 0.0
    %472 = vmatprep.subr.mxu0 0.0
    %473 = vmatpush1.msra.mxu0 0.0
    %474 = vmatprep.subr.mxu0 0.0
    %475 = vmatpush1.msra.mxu0 0.0
    %476 = vmatprep.subr.mxu0 0.0
    %477 = vmatpush1.msra.mxu0 0.0
    %478 = vmatprep.subr.mxu0 0.0
    %479 = vmatpush1.msra.mxu0 0.0
    %480 = vmatprep.subr.mxu0 0.0
    %481 = vmatpush1.msra.mxu0 0.0
    %482 = vmatprep.subr.mxu0 0.0
    %483 = vmatpush1.msra.mxu0 0.0
    %484 = vmatprep.subr.mxu0 0.0
    %485 = vmatpush1.msra.mxu0 0.0
    %486 = vmatprep.subr.mxu0 0.0
    %487 = vmatpush1.msra.mxu0 0.0
    %488 = vmatprep.subr.mxu0 0.0
    %489 = vmatpush1.msra.mxu0 0.0
    %490 = vmatprep.subr.mxu0 0.0
    %491 = vmatpush1.msra.mxu0 0.0
    %492 = vmatprep.subr.mxu0 0.0
    %493 = vmatpush1.msra.mxu0 0.0
    %494 = vmatprep.subr.mxu0 0.0
    %495 = vmatpush1.msra.mxu0 0.0
    %496 = vmatprep.subr.mxu0 0.0
    %497 = vmatpush1.msra.mxu0 0.0
    %498 = vmatprep.subr.mxu0 0.0
    %499 = vmatpush1.msra.mxu0 0.0
    %500 = vmatprep.subr.mxu0 0.0
    %501 = vmatpush1.msra.mxu0 0.0
    %502 = vmatprep.subr.mxu0 0.0
    %503 = vmatpush1.msra.mxu0 0.0
    %504 = vmatprep.subr.mxu0 0.0
    %505 = vmatpush1.msra.mxu0 0.0
    %506 = vmatprep.subr.mxu0 0.0
    %507 = vmatpush1.msra.mxu0 0.0
    %508 = vmatprep.subr.mxu0 0.0
    %509 = vmatpush1.msra.mxu0 0.0
    %510 = vmatprep.subr.mxu0 0.0
    %511 = vmatpush1.msra.mxu0 0.0
    %512 = vmatprep.mubr.f32.mxu0 0.0
    %513 = vmatmul.mubr.f32.gmra.mrb[0].mxu0 %v363
    %v514 = vpop.f32.mrb[0].mxu0
    %v515 = vadd.f32 0.0, %v514
    %v516 = vpop.f32.mrb[0].mxu0
    %v517 = vadd.f32 0.0, %v516
    %518 = vdwg.mxu0
    %v519 = vadd.f32 %v332, %v444
    %v520 = vadd.f32 %v332, %v446
    %v521 = vadd.f32 %v332, %v515
    %v522 = vadd.f32 %v332, %v517
    %523 = vrot.lane.b32.xlu0 %v27, 16
    %v524 = vpop.permute.xlu0 %523
    %525 = vrot.lane.b32.xlu0 %v171, 16
    %v526 = vpop.permute.xlu0 %525
    %527 = vrot.lane.b32.xlu0 %v28, 16
    %v528 = vpop.permute.xlu0 %527
    %529 = vrot.lane.b32.xlu0 %v172, 16
    %v530 = vpop.permute.xlu0 %529
    %vm531 = vcmp.lt.s32.totalorder %v30, 16
    %v532 = vsel %vm531, %v528, %v530
    %v533 = vsel %vm531, %v526, %v528
    %v534 = vsel %vm531, %v524, %v526
    %v535 = vsel %vm531, %v530, %v524
    %v536 = vsel %vm138, 1, 0
    %v537 = vsel %vm139, 1, 0
    %v538 = vsel %vm140, 1, 0
    %v539 = vsel %vm141, 1, 0
    %vm540 = vcmp.eq.s32.totalorder %v536, 1
    %vm541 = vcmp.eq.s32.totalorder %v537, 1
    %vm542 = vcmp.eq.s32.totalorder %v538, 1
    %vm543 = vcmp.eq.s32.totalorder %v539, 1
    %v544 = vsel %vm540, %v535, 0.0
    %v545 = vsel %vm541, %v534, 0.0
    %v546 = vsel %vm542, %v533, 0.0
    %v547 = vsel %vm543, %v532, 0.0
    %s548 = scalar_lea.vmem %s1, 8
    %v549 = vld [vmem:[%s548] sm:$0xff]
    %v551 = vsel %vm173, %v549, 0
    %v554 = vsel %vm177, %v544, 0
    %v557 = vsel %vm177, %v545, 0
    %v560 = vsel %vm177, %v546, 0
    %v563 = vsel %vm177, %v547, 0
    %565 = vmatprep.subr.mxu0 %v557
    %566 = vmatpush1.msra.mxu0 %v554
    %567 = vmatprep.subr.mxu0 0.0
    %568 = vmatpush1.msra.mxu0 0.0
    %569 = vmatprep.subr.mxu0 0.0
    %570 = vmatpush1.msra.mxu0 0.0
    %571 = vmatprep.subr.mxu0 0.0
    %572 = vmatpush1.msra.mxu0 0.0
    %573 = vmatprep.subr.mxu0 0.0
    %574 = vmatpush1.msra.mxu0 0.0
    %575 = vmatprep.subr.mxu0 0.0
    %576 = vmatpush1.msra.mxu0 0.0
    %577 = vmatprep.subr.mxu0 0.0
    %578 = vmatpush1.msra.mxu0 0.0
    %579 = vmatprep.subr.mxu0 0.0
    %580 = vmatpush1.msra.mxu0 0.0
    %581 = vmatprep.subr.mxu0 0.0
    %582 = vmatpush1.msra.mxu0 0.0
    %583 = vmatprep.subr.mxu0 0.0
    %584 = vmatpush1.msra.mxu0 0.0
    %585 = vmatprep.subr.mxu0 0.0
    %586 = vmatpush1.msra.mxu0 0.0
    %587 = vmatprep.subr.mxu0 0.0
    %588 = vmatpush1.msra.mxu0 0.0
    %589 = vmatprep.subr.mxu0 0.0
    %590 = vmatpush1.msra.mxu0 0.0
    %591 = vmatprep.subr.mxu0 0.0
    %592 = vmatpush1.msra.mxu0 0.0
    %593 = vmatprep.subr.mxu0 0.0
    %594 = vmatpush1.msra.mxu0 0.0
    %595 = vmatprep.subr.mxu0 0.0
    %596 = vmatpush1.msra.mxu0 0.0
    %597 = vmatprep.subr.mxu0 0.0
    %598 = vmatpush1.msra.mxu0 0.0
    %599 = vmatprep.subr.mxu0 0.0
    %600 = vmatpush1.msra.mxu0 0.0
    %601 = vmatprep.subr.mxu0 0.0
    %602 = vmatpush1.msra.mxu0 0.0
    %603 = vmatprep.subr.mxu0 0.0
    %604 = vmatpush1.msra.mxu0 0.0
    %605 = vmatprep.subr.mxu0 0.0
    %606 = vmatpush1.msra.mxu0 0.0
    %607 = vmatprep.subr.mxu0 0.0
    %608 = vmatpush1.msra.mxu0 0.0
    %609 = vmatprep.subr.mxu0 0.0
    %610 = vmatpush1.msra.mxu0 0.0
    %611 = vmatprep.subr.mxu0 0.0
    %612 = vmatpush1.msra.mxu0 0.0
    %613 = vmatprep.subr.mxu0 0.0
    %614 = vmatpush1.msra.mxu0 0.0
    %615 = vmatprep.subr.mxu0 0.0
    %616 = vmatpush1.msra.mxu0 0.0
    %617 = vmatprep.subr.mxu0 0.0
    %618 = vmatpush1.msra.mxu0 0.0
    %619 = vmatprep.subr.mxu0 0.0
    %620 = vmatpush1.msra.mxu0 0.0
    %621 = vmatprep.subr.mxu0 0.0
    %622 = vmatpush1.msra.mxu0 0.0
    %623 = vmatprep.subr.mxu0 0.0
    %624 = vmatpush1.msra.mxu0 0.0
    %625 = vmatprep.subr.mxu0 0.0
    %626 = vmatpush1.msra.mxu0 0.0
    %627 = vmatprep.subr.mxu0 0.0
    %628 = vmatpush1.msra.mxu0 0.0
    %629 = vmatprep.mubr.f32.mxu0 0.0
    %630 = vmatmul.mubr.f32.gmra.mrb[0].mxu0 %v551
    %v631 = vpop.f32.mrb[0].mxu0
    %v632 = vadd.f32 0.0, %v631
    %v633 = vpop.f32.mrb[0].mxu0
    %v634 = vadd.f32 0.0, %v633
    %635 = vdwg.mxu0
    %636 = vmatprep.subr.mxu0 %v563
    %637 = vmatpush1.msra.mxu0 %v560
    %638 = vmatprep.subr.mxu0 0.0
    %639 = vmatpush1.msra.mxu0 0.0
    %640 = vmatprep.subr.mxu0 0.0
    %641 = vmatpush1.msra.mxu0 0.0
    %642 = vmatprep.subr.mxu0 0.0
    %643 = vmatpush1.msra.mxu0 0.0
    %644 = vmatprep.subr.mxu0 0.0
    %645 = vmatpush1.msra.mxu0 0.0
    %646 = vmatprep.subr.mxu0 0.0
    %647 = vmatpush1.msra.mxu0 0.0
    %648 = vmatprep.subr.mxu0 0.0
    %649 = vmatpush1.msra.mxu0 0.0
    %650 = vmatprep.subr.mxu0 0.0
    %651 = vmatpush1.msra.mxu0 0.0
    %652 = vmatprep.subr.mxu0 0.0
    %653 = vmatpush1.msra.mxu0 0.0
    %654 = vmatprep.subr.mxu0 0.0
    %655 = vmatpush1.msra.mxu0 0.0
    %656 = vmatprep.subr.mxu0 0.0
    %657 = vmatpush1.msra.mxu0 0.0
    %658 = vmatprep.subr.mxu0 0.0
    %659 = vmatpush1.msra.mxu0 0.0
    %660 = vmatprep.subr.mxu0 0.0
    %661 = vmatpush1.msra.mxu0 0.0
    %662 = vmatprep.subr.mxu0 0.0
    %663 = vmatpush1.msra.mxu0 0.0
    %664 = vmatprep.subr.mxu0 0.0
    %665 = vmatpush1.msra.mxu0 0.0
    %666 = vmatprep.subr.mxu0 0.0
    %667 = vmatpush1.msra.mxu0 0.0
    %668 = vmatprep.subr.mxu0 0.0
    %669 = vmatpush1.msra.mxu0 0.0
    %670 = vmatprep.subr.mxu0 0.0
    %671 = vmatpush1.msra.mxu0 0.0
    %672 = vmatprep.subr.mxu0 0.0
    %673 = vmatpush1.msra.mxu0 0.0
    %674 = vmatprep.subr.mxu0 0.0
    %675 = vmatpush1.msra.mxu0 0.0
    %676 = vmatprep.subr.mxu0 0.0
    %677 = vmatpush1.msra.mxu0 0.0
    %678 = vmatprep.subr.mxu0 0.0
    %679 = vmatpush1.msra.mxu0 0.0
    %680 = vmatprep.subr.mxu0 0.0
    %681 = vmatpush1.msra.mxu0 0.0
    %682 = vmatprep.subr.mxu0 0.0
    %683 = vmatpush1.msra.mxu0 0.0
    %684 = vmatprep.subr.mxu0 0.0
    %685 = vmatpush1.msra.mxu0 0.0
    %686 = vmatprep.subr.mxu0 0.0
    %687 = vmatpush1.msra.mxu0 0.0
    %688 = vmatprep.subr.mxu0 0.0
    %689 = vmatpush1.msra.mxu0 0.0
    %690 = vmatprep.subr.mxu0 0.0
    %691 = vmatpush1.msra.mxu0 0.0
    %692 = vmatprep.subr.mxu0 0.0
    %693 = vmatpush1.msra.mxu0 0.0
    %694 = vmatprep.subr.mxu0 0.0
    %695 = vmatpush1.msra.mxu0 0.0
    %696 = vmatprep.subr.mxu0 0.0
    %697 = vmatpush1.msra.mxu0 0.0
    %698 = vmatprep.subr.mxu0 0.0
    %699 = vmatpush1.msra.mxu0 0.0
    %700 = vmatprep.mubr.f32.mxu0 0.0
    %701 = vmatmul.mubr.f32.gmra.mrb[0].mxu0 %v551
    %v702 = vpop.f32.mrb[0].mxu0
    %v703 = vadd.f32 0.0, %v702
    %v704 = vpop.f32.mrb[0].mxu0
    %v705 = vadd.f32 0.0, %v704
    %706 = vdwg.mxu0
    %v707 = vadd.f32 %v519, %v632
    %v708 = vadd.f32 %v520, %v634
    %v709 = vadd.f32 %v521, %v703
    %v710 = vadd.f32 %v522, %v705
    %711 = vrot.lane.b32.xlu0 %v27, 15
    %v712 = vpop.permute.xlu0 %711
    %713 = vrot.lane.b32.xlu0 %v171, 15
    %v714 = vpop.permute.xlu0 %713
    %715 = vrot.lane.b32.xlu0 %v28, 15
    %v716 = vpop.permute.xlu0 %715
    %717 = vrot.lane.b32.xlu0 %v172, 15
    %v718 = vpop.permute.xlu0 %717
    %vm719 = vcmp.lt.s32.totalorder %v30, 15
    %v720 = vsel %vm719, %v716, %v718
    %v721 = vsel %vm719, %v714, %v716
    %v722 = vsel %vm719, %v712, %v714
    %v723 = vsel %vm719, %v718, %v712
    %v724 = vsel %vm150, 1, 0
    %v725 = vsel %vm151, 1, 0
    %v726 = vsel %vm152, 1, 0
    %v727 = vsel %vm153, 1, 0
    %vm728 = vcmp.eq.s32.totalorder %v724, 1
    %vm729 = vcmp.eq.s32.totalorder %v725, 1
    %vm730 = vcmp.eq.s32.totalorder %v726, 1
    %vm731 = vcmp.eq.s32.totalorder %v727, 1
    %v732 = vsel %vm728, %v723, 0.0
    %v733 = vsel %vm729, %v722, 0.0
    %v734 = vsel %vm730, %v721, 0.0
    %v735 = vsel %vm731, %v720, 0.0
    %s736 = scalar_lea.vmem %s1, 16
    %v737 = vld [vmem:[%s736] sm:$0xff]
    %v739 = vsel %vm173, %v737, 0
    %v742 = vsel %vm177, %v732, 0
    %v745 = vsel %vm177, %v733, 0
    %v748 = vsel %vm177, %v734, 0
    %v751 = vsel %vm177, %v735, 0
    %753 = vmatprep.subr.mxu0 %v745
    %754 = vmatpush1.msra.mxu0 %v742
    %755 = vmatprep.subr.mxu0 0.0
    %756 = vmatpush1.msra.mxu0 0.0
    %757 = vmatprep.subr.mxu0 0.0
    %758 = vmatpush1.msra.mxu0 0.0
    %759 = vmatprep.subr.mxu0 0.0
    %760 = vmatpush1.msra.mxu0 0.0
    %761 = vmatprep.subr.mxu0 0.0
    %762 = vmatpush1.msra.mxu0 0.0
    %763 = vmatprep.subr.mxu0 0.0
    %764 = vmatpush1.msra.mxu0 0.0
    %765 = vmatprep.subr.mxu0 0.0
    %766 = vmatpush1.msra.mxu0 0.0
    %767 = vmatprep.subr.mxu0 0.0
    %768 = vmatpush1.msra.mxu0 0.0
    %769 = vmatprep.subr.mxu0 0.0
    %770 = vmatpush1.msra.mxu0 0.0
    %771 = vmatprep.subr.mxu0 0.0
    %772 = vmatpush1.msra.mxu0 0.0
    %773 = vmatprep.subr.mxu0 0.0
    %774 = vmatpush1.msra.mxu0 0.0
    %775 = vmatprep.subr.mxu0 0.0
    %776 = vmatpush1.msra.mxu0 0.0
    %777 = vmatprep.subr.mxu0 0.0
    %778 = vmatpush1.msra.mxu0 0.0
    %779 = vmatprep.subr.mxu0 0.0
    %780 = vmatpush1.msra.mxu0 0.0
    %781 = vmatprep.subr.mxu0 0.0
    %782 = vmatpush1.msra.mxu0 0.0
    %783 = vmatprep.subr.mxu0 0.0
    %784 = vmatpush1.msra.mxu0 0.0
    %785 = vmatprep.subr.mxu0 0.0
    %786 = vmatpush1.msra.mxu0 0.0
    %787 = vmatprep.subr.mxu0 0.0
    %788 = vmatpush1.msra.mxu0 0.0
    %789 = vmatprep.subr.mxu0 0.0
    %790 = vmatpush1.msra.mxu0 0.0
    %791 = vmatprep.subr.mxu0 0.0
    %792 = vmatpush1.msra.mxu0 0.0
    %793 = vmatprep.subr.mxu0 0.0
    %794 = vmatpush1.msra.mxu0 0.0
    %795 = vmatprep.subr.mxu0 0.0
    %796 = vmatpush1.msra.mxu0 0.0
    %797 = vmatprep.subr.mxu0 0.0
    %798 = vmatpush1.msra.mxu0 0.0
    %799 = vmatprep.subr.mxu0 0.0
    %800 = vmatpush1.msra.mxu0 0.0
    %801 = vmatprep.subr.mxu0 0.0
    %802 = vmatpush1.msra.mxu0 0.0
    %803 = vmatprep.subr.mxu0 0.0
    %804 = vmatpush1.msra.mxu0 0.0
    %805 = vmatprep.subr.mxu0 0.0
    %806 = vmatpush1.msra.mxu0 0.0
    %807 = vmatprep.subr.mxu0 0.0
    %808 = vmatpush1.msra.mxu0 0.0
    %809 = vmatprep.subr.mxu0 0.0
    %810 = vmatpush1.msra.mxu0 0.0
    %811 = vmatprep.subr.mxu0 0.0
    %812 = vmatpush1.msra.mxu0 0.0
    %813 = vmatprep.subr.mxu0 0.0
    %814 = vmatpush1.msra.mxu0 0.0
    %815 = vmatprep.subr.mxu0 0.0
    %816 = vmatpush1.msra.mxu0 0.0
    %817 = vmatprep.mubr.f32.mxu0 0.0
    %818 = vmatmul.mubr.f32.gmra.mrb[0].mxu0 %v739
    %v819 = vpop.f32.mrb[0].mxu0
    %v820 = vadd.f32 0.0, %v819
    %v821 = vpop.f32.mrb[0].mxu0
    %v822 = vadd.f32 0.0, %v821
    %823 = vdwg.mxu0
    %824 = vmatprep.subr.mxu0 %v751
    %825 = vmatpush1.msra.mxu0 %v748
    %826 = vmatprep.subr.mxu0 0.0
    %827 = vmatpush1.msra.mxu0 0.0
    %828 = vmatprep.subr.mxu0 0.0
    %829 = vmatpush1.msra.mxu0 0.0
    %830 = vmatprep.subr.mxu0 0.0
    %831 = vmatpush1.msra.mxu0 0.0
    %832 = vmatprep.subr.mxu0 0.0
    %833 = vmatpush1.msra.mxu0 0.0
    %834 = vmatprep.subr.mxu0 0.0
    %835 = vmatpush1.msra.mxu0 0.0
    %836 = vmatprep.subr.mxu0 0.0
    %837 = vmatpush1.msra.mxu0 0.0
    %838 = vmatprep.subr.mxu0 0.0
    %839 = vmatpush1.msra.mxu0 0.0
    %840 = vmatprep.subr.mxu0 0.0
    %841 = vmatpush1.msra.mxu0 0.0
    %842 = vmatprep.subr.mxu0 0.0
    %843 = vmatpush1.msra.mxu0 0.0
    %844 = vmatprep.subr.mxu0 0.0
    %845 = vmatpush1.msra.mxu0 0.0
    %846 = vmatprep.subr.mxu0 0.0
    %847 = vmatpush1.msra.mxu0 0.0
    %848 = vmatprep.subr.mxu0 0.0
    %849 = vmatpush1.msra.mxu0 0.0
    %850 = vmatprep.subr.mxu0 0.0
    %851 = vmatpush1.msra.mxu0 0.0
    %852 = vmatprep.subr.mxu0 0.0
    %853 = vmatpush1.msra.mxu0 0.0
    %854 = vmatprep.subr.mxu0 0.0
    %855 = vmatpush1.msra.mxu0 0.0
    %856 = vmatprep.subr.mxu0 0.0
    %857 = vmatpush1.msra.mxu0 0.0
    %858 = vmatprep.subr.mxu0 0.0
    %859 = vmatpush1.msra.mxu0 0.0
    %860 = vmatprep.subr.mxu0 0.0
    %861 = vmatpush1.msra.mxu0 0.0
    %862 = vmatprep.subr.mxu0 0.0
    %863 = vmatpush1.msra.mxu0 0.0
    %864 = vmatprep.subr.mxu0 0.0
    %865 = vmatpush1.msra.mxu0 0.0
    %866 = vmatprep.subr.mxu0 0.0
    %867 = vmatpush1.msra.mxu0 0.0
    %868 = vmatprep.subr.mxu0 0.0
    %869 = vmatpush1.msra.mxu0 0.0
    %870 = vmatprep.subr.mxu0 0.0
    %871 = vmatpush1.msra.mxu0 0.0
    %872 = vmatprep.subr.mxu0 0.0
    %873 = vmatpush1.msra.mxu0 0.0
    %874 = vmatprep.subr.mxu0 0.0
    %875 = vmatpush1.msra.mxu0 0.0
    %876 = vmatprep.subr.mxu0 0.0
    %877 = vmatpush1.msra.mxu0 0.0
    %878 = vmatprep.subr.mxu0 0.0
    %879 = vmatpush1.msra.mxu0 0.0
    %880 = vmatprep.subr.mxu0 0.0
    %881 = vmatpush1.msra.mxu0 0.0
    %882 = vmatprep.subr.mxu0 0.0
    %883 = vmatpush1.msra.mxu0 0.0
    %884 = vmatprep.subr.mxu0 0.0
    %885 = vmatpush1.msra.mxu0 0.0
    %886 = vmatprep.subr.mxu0 0.0
    %887 = vmatpush1.msra.mxu0 0.0
    %888 = vmatprep.mubr.f32.mxu0 0.0
    %889 = vmatmul.mubr.f32.gmra.mrb[0].mxu0 %v739
    %v890 = vpop.f32.mrb[0].mxu0
    %v891 = vadd.f32 0.0, %v890
    %v892 = vpop.f32.mrb[0].mxu0
    %v893 = vadd.f32 0.0, %v892
    %894 = vdwg.mxu0
    %v895 = vadd.f32 %v707, %v820
    %v896 = vadd.f32 %v708, %v822
    %v897 = vadd.f32 %v709, %v891
    %v898 = vadd.f32 %v710, %v893
    %899 = vrot.lane.b32.xlu0 %v27, 1
    %v900 = vpop.permute.xlu0 %899
    %901 = vrot.lane.b32.xlu0 %v171, 1
    %v902 = vpop.permute.xlu0 %901
    %903 = vrot.lane.b32.xlu0 %v28, 1
    %v904 = vpop.permute.xlu0 %903
    %905 = vrot.lane.b32.xlu0 %v172, 1
    %v906 = vpop.permute.xlu0 %905
    %vm907 = vcmp.lt.s32.totalorder %v30, 1
    %v908 = vsel %vm907, %v904, %v906
    %v909 = vsel %vm907, %v902, %v904
    %v910 = vsel %vm907, %v900, %v902
    %v911 = vsel %vm907, %v906, %v900
    %v912 = vsel %vm130, 1, 0
    %v913 = vsel %vm131, 1, 0
    %v914 = vsel %vm132, 1, 0
    %v915 = vsel %vm133, 1, 0
    %vm916 = vcmp.eq.s32.totalorder %v912, 1
    %vm917 = vcmp.eq.s32.totalorder %v913, 1
    %vm918 = vcmp.eq.s32.totalorder %v914, 1
    %vm919 = vcmp.eq.s32.totalorder %v915, 1
    %v920 = vsel %vm916, %v911, 0.0
    %v921 = vsel %vm917, %v910, 0.0
    %v922 = vsel %vm918, %v909, 0.0
    %v923 = vsel %vm919, %v908, 0.0
    %s924 = scalar_lea.vmem %s1, 24
    %v925 = vld [vmem:[%s924] sm:$0xff]
    %v927 = vsel %vm173, %v925, 0
    %v930 = vsel %vm177, %v920, 0
    %v933 = vsel %vm177, %v921, 0
    %v936 = vsel %vm177, %v922, 0
    %v939 = vsel %vm177, %v923, 0
    %941 = vmatprep.subr.mxu0 %v933
    %942 = vmatpush1.msra.mxu0 %v930
    %943 = vmatprep.subr.mxu0 0.0
    %944 = vmatpush1.msra.mxu0 0.0
    %945 = vmatprep.subr.mxu0 0.0
    %946 = vmatpush1.msra.mxu0 0.0
    %947 = vmatprep.subr.mxu0 0.0
    %948 = vmatpush1.msra.mxu0 0.0
    %949 = vmatprep.subr.mxu0 0.0
    %950 = vmatpush1.msra.mxu0 0.0
    %951 = vmatprep.subr.mxu0 0.0
    %952 = vmatpush1.msra.mxu0 0.0
    %953 = vmatprep.subr.mxu0 0.0
    %954 = vmatpush1.msra.mxu0 0.0
    %955 = vmatprep.subr.mxu0 0.0
    %956 = vmatpush1.msra.mxu0 0.0
    %957 = vmatprep.subr.mxu0 0.0
    %958 = vmatpush1.msra.mxu0 0.0
    %959 = vmatprep.subr.mxu0 0.0
    %960 = vmatpush1.msra.mxu0 0.0
    %961 = vmatprep.subr.mxu0 0.0
    %962 = vmatpush1.msra.mxu0 0.0
    %963 = vmatprep.subr.mxu0 0.0
    %964 = vmatpush1.msra.mxu0 0.0
    %965 = vmatprep.subr.mxu0 0.0
    %966 = vmatpush1.msra.mxu0 0.0
    %967 = vmatprep.subr.mxu0 0.0
    %968 = vmatpush1.msra.mxu0 0.0
    %969 = vmatprep.subr.mxu0 0.0
    %970 = vmatpush1.msra.mxu0 0.0
    %971 = vmatprep.subr.mxu0 0.0
    %972 = vmatpush1.msra.mxu0 0.0
    %973 = vmatprep.subr.mxu0 0.0
    %974 = vmatpush1.msra.mxu0 0.0
    %975 = vmatprep.subr.mxu0 0.0
    %976 = vmatpush1.msra.mxu0 0.0
    %977 = vmatprep.subr.mxu0 0.0
    %978 = vmatpush1.msra.mxu0 0.0
    %979 = vmatprep.subr.mxu0 0.0
    %980 = vmatpush1.msra.mxu0 0.0
    %981 = vmatprep.subr.mxu0 0.0
    %982 = vmatpush1.msra.mxu0 0.0
    %983 = vmatprep.subr.mxu0 0.0
    %984 = vmatpush1.msra.mxu0 0.0
    %985 = vmatprep.subr.mxu0 0.0
    %986 = vmatpush1.msra.mxu0 0.0
    %987 = vmatprep.subr.mxu0 0.0
    %988 = vmatpush1.msra.mxu0 0.0
    %989 = vmatprep.subr.mxu0 0.0
    %990 = vmatpush1.msra.mxu0 0.0
    %991 = vmatprep.subr.mxu0 0.0
    %992 = vmatpush1.msra.mxu0 0.0
    %993 = vmatprep.subr.mxu0 0.0
    %994 = vmatpush1.msra.mxu0 0.0
    %995 = vmatprep.subr.mxu0 0.0
    %996 = vmatpush1.msra.mxu0 0.0
    %997 = vmatprep.subr.mxu0 0.0
    %998 = vmatpush1.msra.mxu0 0.0
    %999 = vmatprep.subr.mxu0 0.0
    %1000 = vmatpush1.msra.mxu0 0.0
    %1001 = vmatprep.subr.mxu0 0.0
    %1002 = vmatpush1.msra.mxu0 0.0
    %1003 = vmatprep.subr.mxu0 0.0
    %1004 = vmatpush1.msra.mxu0 0.0
    %1005 = vmatprep.mubr.f32.mxu0 0.0
    %1006 = vmatmul.mubr.f32.gmra.mrb[0].mxu0 %v927
    %v1007 = vpop.f32.mrb[0].mxu0
    %v1008 = vadd.f32 0.0, %v1007
    %v1009 = vpop.f32.mrb[0].mxu0
    %v1010 = vadd.f32 0.0, %v1009
    %1011 = vdwg.mxu0
    %1012 = vmatprep.subr.mxu0 %v939
    %1013 = vmatpush1.msra.mxu0 %v936
    %1014 = vmatprep.subr.mxu0 0.0
    %1015 = vmatpush1.msra.mxu0 0.0
    %1016 = vmatprep.subr.mxu0 0.0
    %1017 = vmatpush1.msra.mxu0 0.0
    %1018 = vmatprep.subr.mxu0 0.0
    %1019 = vmatpush1.msra.mxu0 0.0
    %1020 = vmatprep.subr.mxu0 0.0
    %1021 = vmatpush1.msra.mxu0 0.0
    %1022 = vmatprep.subr.mxu0 0.0
    %1023 = vmatpush1.msra.mxu0 0.0
    %1024 = vmatprep.subr.mxu0 0.0
    %1025 = vmatpush1.msra.mxu0 0.0
    %1026 = vmatprep.subr.mxu0 0.0
    %1027 = vmatpush1.msra.mxu0 0.0
    %1028 = vmatprep.subr.mxu0 0.0
    %1029 = vmatpush1.msra.mxu0 0.0
    %1030 = vmatprep.subr.mxu0 0.0
    %1031 = vmatpush1.msra.mxu0 0.0
    %1032 = vmatprep.subr.mxu0 0.0
    %1033 = vmatpush1.msra.mxu0 0.0
    %1034 = vmatprep.subr.mxu0 0.0
    %1035 = vmatpush1.msra.mxu0 0.0
    %1036 = vmatprep.subr.mxu0 0.0
    %1037 = vmatpush1.msra.mxu0 0.0
    %1038 = vmatprep.subr.mxu0 0.0
    %1039 = vmatpush1.msra.mxu0 0.0
    %1040 = vmatprep.subr.mxu0 0.0
    %1041 = vmatpush1.msra.mxu0 0.0
    %1042 = vmatprep.subr.mxu0 0.0
    %1043 = vmatpush1.msra.mxu0 0.0
    %1044 = vmatprep.subr.mxu0 0.0
    %1045 = vmatpush1.msra.mxu0 0.0
    %1046 = vmatprep.subr.mxu0 0.0
    %1047 = vmatpush1.msra.mxu0 0.0
    %1048 = vmatprep.subr.mxu0 0.0
    %1049 = vmatpush1.msra.mxu0 0.0
    %1050 = vmatprep.subr.mxu0 0.0
    %1051 = vmatpush1.msra.mxu0 0.0
    %1052 = vmatprep.subr.mxu0 0.0
    %1053 = vmatpush1.msra.mxu0 0.0
    %1054 = vmatprep.subr.mxu0 0.0
    %1055 = vmatpush1.msra.mxu0 0.0
    %1056 = vmatprep.subr.mxu0 0.0
    %1057 = vmatpush1.msra.mxu0 0.0
    %1058 = vmatprep.subr.mxu0 0.0
    %1059 = vmatpush1.msra.mxu0 0.0
    %1060 = vmatprep.subr.mxu0 0.0
    %1061 = vmatpush1.msra.mxu0 0.0
    %1062 = vmatprep.subr.mxu0 0.0
    %1063 = vmatpush1.msra.mxu0 0.0
    %1064 = vmatprep.subr.mxu0 0.0
    %1065 = vmatpush1.msra.mxu0 0.0
    %1066 = vmatprep.subr.mxu0 0.0
    %1067 = vmatpush1.msra.mxu0 0.0
    %1068 = vmatprep.subr.mxu0 0.0
    %1069 = vmatpush1.msra.mxu0 0.0
    %1070 = vmatprep.subr.mxu0 0.0
    %1071 = vmatpush1.msra.mxu0 0.0
    %1072 = vmatprep.subr.mxu0 0.0
    %1073 = vmatpush1.msra.mxu0 0.0
    %1074 = vmatprep.subr.mxu0 0.0
    %1075 = vmatpush1.msra.mxu0 0.0
    %1076 = vmatprep.mubr.f32.mxu0 0.0
    %1077 = vmatmul.mubr.f32.gmra.mrb[0].mxu0 %v927
    %v1078 = vpop.f32.mrb[0].mxu0
    %v1079 = vadd.f32 0.0, %v1078
    %v1080 = vpop.f32.mrb[0].mxu0
    %v1081 = vadd.f32 0.0, %v1080
    %1082 = vdwg.mxu0
    %v1083 = vadd.f32 %v895, %v1008
    %v1084 = vadd.f32 %v896, %v1010
    %v1085 = vadd.f32 %v897, %v1079
    %v1086 = vadd.f32 %v898, %v1081
    %s1087 = scalar_lea.vmem %s1, 32
    %v1088 = vld [vmem:[%s1087] sm:$0xff]
    %v1090 = vsel %vm173, %v1088, 0
    %1092 = vmatprep.subr.mxu0 %v180
    %1093 = vmatpush1.msra.mxu0 %v178
    %1094 = vmatprep.subr.mxu0 0.0
    %1095 = vmatpush1.msra.mxu0 0.0
    %1096 = vmatprep.subr.mxu0 0.0
    %1097 = vmatpush1.msra.mxu0 0.0
    %1098 = vmatprep.subr.mxu0 0.0
    %1099 = vmatpush1.msra.mxu0 0.0
    %1100 = vmatprep.subr.mxu0 0.0
    %1101 = vmatpush1.msra.mxu0 0.0
    %1102 = vmatprep.subr.mxu0 0.0
    %1103 = vmatpush1.msra.mxu0 0.0
    %1104 = vmatprep.subr.mxu0 0.0
    %1105 = vmatpush1.msra.mxu0 0.0
    %1106 = vmatprep.subr.mxu0 0.0
    %1107 = vmatpush1.msra.mxu0 0.0
    %1108 = vmatprep.subr.mxu0 0.0
    %1109 = vmatpush1.msra.mxu0 0.0
    %1110 = vmatprep.subr.mxu0 0.0
    %1111 = vmatpush1.msra.mxu0 0.0
    %1112 = vmatprep.subr.mxu0 0.0
    %1113 = vmatpush1.msra.mxu0 0.0
    %1114 = vmatprep.subr.mxu0 0.0
    %1115 = vmatpush1.msra.mxu0 0.0
    %1116 = vmatprep.subr.mxu0 0.0
    %1117 = vmatpush1.msra.mxu0 0.0
    %1118 = vmatprep.subr.mxu0 0.0
    %1119 = vmatpush1.msra.mxu0 0.0
    %1120 = vmatprep.subr.mxu0 0.0
    %1121 = vmatpush1.msra.mxu0 0.0
    %1122 = vmatprep.subr.mxu0 0.0
    %1123 = vmatpush1.msra.mxu0 0.0
    %1124 = vmatprep.subr.mxu0 0.0
    %1125 = vmatpush1.msra.mxu0 0.0
    %1126 = vmatprep.subr.mxu0 0.0
    %1127 = vmatpush1.msra.mxu0 0.0
    %1128 = vmatprep.subr.mxu0 0.0
    %1129 = vmatpush1.msra.mxu0 0.0
    %1130 = vmatprep.subr.mxu0 0.0
    %1131 = vmatpush1.msra.mxu0 0.0
    %1132 = vmatprep.subr.mxu0 0.0
    %1133 = vmatpush1.msra.mxu0 0.0
    %1134 = vmatprep.subr.mxu0 0.0
    %1135 = vmatpush1.msra.mxu0 0.0
    %1136 = vmatprep.subr.mxu0 0.0
    %1137 = vmatpush1.msra.mxu0 0.0
    %1138 = vmatprep.subr.mxu0 0.0
    %1139 = vmatpush1.msra.mxu0 0.0
    %1140 = vmatprep.subr.mxu0 0.0
    %1141 = vmatpush1.msra.mxu0 0.0
    %1142 = vmatprep.subr.mxu0 0.0
    %1143 = vmatpush1.msra.mxu0 0.0
    %1144 = vmatprep.subr.mxu0 0.0
    %1145 = vmatpush1.msra.mxu0 0.0
    %1146 = vmatprep.subr.mxu0 0.0
    %1147 = vmatpush1.msra.mxu0 0.0
    %1148 = vmatprep.subr.mxu0 0.0
    %1149 = vmatpush1.msra.mxu0 0.0
    %1150 = vmatprep.subr.mxu0 0.0
    %1151 = vmatpush1.msra.mxu0 0.0
    %1152 = vmatprep.subr.mxu0 0.0
    %1153 = vmatpush1.msra.mxu0 0.0
    %1154 = vmatprep.subr.mxu0 0.0
    %1155 = vmatpush1.msra.mxu0 0.0
    %1156 = vmatprep.mubr.f32.mxu0 0.0
    %1157 = vmatmul.mubr.f32.gmra.mrb[0].mxu0 %v1090
    %v1158 = vpop.f32.mrb[0].mxu0
    %v1159 = vadd.f32 0.0, %v1158
    %v1160 = vpop.f32.mrb[0].mxu0
    %v1161 = vadd.f32 0.0, %v1160
    %1162 = vdwg.mxu0
    %1163 = vmatprep.subr.mxu0 %v184
    %1164 = vmatpush1.msra.mxu0 %v182
    %1165 = vmatprep.subr.mxu0 0.0
    %1166 = vmatpush1.msra.mxu0 0.0
    %1167 = vmatprep.subr.mxu0 0.0
    %1168 = vmatpush1.msra.mxu0 0.0
    %1169 = vmatprep.subr.mxu0 0.0
    %1170 = vmatpush1.msra.mxu0 0.0
    %1171 = vmatprep.subr.mxu0 0.0
    %1172 = vmatpush1.msra.mxu0 0.0
    %1173 = vmatprep.subr.mxu0 0.0
    %1174 = vmatpush1.msra.mxu0 0.0
    %1175 = vmatprep.subr.mxu0 0.0
    %1176 = vmatpush1.msra.mxu0 0.0
    %1177 = vmatprep.subr.mxu0 0.0
    %1178 = vmatpush1.msra.mxu0 0.0
    %1179 = vmatprep.subr.mxu0 0.0
    %1180 = vmatpush1.msra.mxu0 0.0
    %1181 = vmatprep.subr.mxu0 0.0
    %1182 = vmatpush1.msra.mxu0 0.0
    %1183 = vmatprep.subr.mxu0 0.0
    %1184 = vmatpush1.msra.mxu0 0.0
    %1185 = vmatprep.subr.mxu0 0.0
    %1186 = vmatpush1.msra.mxu0 0.0
    %1187 = vmatprep.subr.mxu0 0.0
    %1188 = vmatpush1.msra.mxu0 0.0
    %1189 = vmatprep.subr.mxu0 0.0
    %1190 = vmatpush1.msra.mxu0 0.0
    %1191 = vmatprep.subr.mxu0 0.0
    %1192 = vmatpush1.msra.mxu0 0.0
    %1193 = vmatprep.subr.mxu0 0.0
    %1194 = vmatpush1.msra.mxu0 0.0
    %1195 = vmatprep.subr.mxu0 0.0
    %1196 = vmatpush1.msra.mxu0 0.0
    %1197 = vmatprep.subr.mxu0 0.0
    %1198 = vmatpush1.msra.mxu0 0.0
    %1199 = vmatprep.subr.mxu0 0.0
    %1200 = vmatpush1.msra.mxu0 0.0
    %1201 = vmatprep.subr.mxu0 0.0
    %1202 = vmatpush1.msra.mxu0 0.0
    %1203 = vmatprep.subr.mxu0 0.0
    %1204 = vmatpush1.msra.mxu0 0.0
    %1205 = vmatprep.subr.mxu0 0.0
    %1206 = vmatpush1.msra.mxu0 0.0
    %1207 = vmatprep.subr.mxu0 0.0
    %1208 = vmatpush1.msra.mxu0 0.0
    %1209 = vmatprep.subr.mxu0 0.0
    %1210 = vmatpush1.msra.mxu0 0.0
    %1211 = vmatprep.subr.mxu0 0.0
    %1212 = vmatpush1.msra.mxu0 0.0
    %1213 = vmatprep.subr.mxu0 0.0
    %1214 = vmatpush1.msra.mxu0 0.0
    %1215 = vmatprep.subr.mxu0 0.0
    %1216 = vmatpush1.msra.mxu0 0.0
    %1217 = vmatprep.subr.mxu0 0.0
    %1218 = vmatpush1.msra.mxu0 0.0
    %1219 = vmatprep.subr.mxu0 0.0
    %1220 = vmatpush1.msra.mxu0 0.0
    %1221 = vmatprep.subr.mxu0 0.0
    %1222 = vmatpush1.msra.mxu0 0.0
    %1223 = vmatprep.subr.mxu0 0.0
    %1224 = vmatpush1.msra.mxu0 0.0
    %1225 = vmatprep.subr.mxu0 0.0
    %1226 = vmatpush1.msra.mxu0 0.0
    %1227 = vmatprep.mubr.f32.mxu0 0.0
    %1228 = vmatmul.mubr.f32.gmra.mrb[0].mxu0 %v1090
    %v1229 = vpop.f32.mrb[0].mxu0
    %v1230 = vadd.f32 0.0, %v1229
    %v1231 = vpop.f32.mrb[0].mxu0
    %v1232 = vadd.f32 0.0, %v1231
    %1233 = vdwg.mxu0
    %v1234 = vadd.f32 %v1083, %v1159
    %v1235 = vadd.f32 %v1084, %v1161
    %v1236 = vadd.f32 %v1085, %v1230
    %v1237 = vadd.f32 %v1086, %v1232
    %1238 = vrot.lane.b32.xlu0 %v27, 127
    %v1239 = vpop.permute.xlu0 %1238
    %1240 = vrot.lane.b32.xlu0 %v171, 127
    %v1241 = vpop.permute.xlu0 %1240
    %1242 = vrot.lane.b32.xlu0 %v28, 127
    %v1243 = vpop.permute.xlu0 %1242
    %1244 = vrot.lane.b32.xlu0 %v172, 127
    %v1245 = vpop.permute.xlu0 %1244
    %vm1246 = vcmp.lt.s32.totalorder %v30, 127
    %v1247 = vsel %vm1246, %v1243, %v1245
    %v1248 = vsel %vm1246, %v1241, %v1243
    %v1249 = vsel %vm1246, %v1239, %v1241
    %v1250 = vsel %vm1246, %v1245, %v1239
    %v1251 = vsel %vm134, 1, 0
    %v1252 = vsel %vm135, 1, 0
    %v1253 = vsel %vm136, 1, 0
    %v1254 = vsel %vm137, 1, 0
    %vm1255 = vcmp.eq.s32.totalorder %v1251, 1
    %vm1256 = vcmp.eq.s32.totalorder %v1252, 1
    %vm1257 = vcmp.eq.s32.totalorder %v1253, 1
    %vm1258 = vcmp.eq.s32.totalorder %v1254, 1
    %v1259 = vsel %vm1255, %v1249, 0.0
    %v1260 = vsel %vm1256, %v1248, 0.0
    %v1261 = vsel %vm1257, %v1247, 0.0
    %v1262 = vsel %vm1258, %v1250, 0.0
    %s1263 = scalar_lea.vmem %s1, 40
    %v1264 = vld [vmem:[%s1263] sm:$0xff]
    %v1266 = vsel %vm173, %v1264, 0
    %v1269 = vsel %vm177, %v1259, 0
    %v1272 = vsel %vm177, %v1260, 0
    %v1275 = vsel %vm177, %v1261, 0
    %v1278 = vsel %vm177, %v1262, 0
    %1280 = vmatprep.subr.mxu0 %v1272
    %1281 = vmatpush1.msra.mxu0 %v1269
    %1282 = vmatprep.subr.mxu0 0.0
    %1283 = vmatpush1.msra.mxu0 0.0
    %1284 = vmatprep.subr.mxu0 0.0
    %1285 = vmatpush1.msra.mxu0 0.0
    %1286 = vmatprep.subr.mxu0 0.0
    %1287 = vmatpush1.msra.mxu0 0.0
    %1288 = vmatprep.subr.mxu0 0.0
    %1289 = vmatpush1.msra.mxu0 0.0
    %1290 = vmatprep.subr.mxu0 0.0
    %1291 = vmatpush1.msra.mxu0 0.0
    %1292 = vmatprep.subr.mxu0 0.0
    %1293 = vmatpush1.msra.mxu0 0.0
    %1294 = vmatprep.subr.mxu0 0.0
    %1295 = vmatpush1.msra.mxu0 0.0
    %1296 = vmatprep.subr.mxu0 0.0
    %1297 = vmatpush1.msra.mxu0 0.0
    %1298 = vmatprep.subr.mxu0 0.0
    %1299 = vmatpush1.msra.mxu0 0.0
    %1300 = vmatprep.subr.mxu0 0.0
    %1301 = vmatpush1.msra.mxu0 0.0
    %1302 = vmatprep.subr.mxu0 0.0
    %1303 = vmatpush1.msra.mxu0 0.0
    %1304 = vmatprep.subr.mxu0 0.0
    %1305 = vmatpush1.msra.mxu0 0.0
    %1306 = vmatprep.subr.mxu0 0.0
    %1307 = vmatpush1.msra.mxu0 0.0
    %1308 = vmatprep.subr.mxu0 0.0
    %1309 = vmatpush1.msra.mxu0 0.0
    %1310 = vmatprep.subr.mxu0 0.0
    %1311 = vmatpush1.msra.mxu0 0.0
    %1312 = vmatprep.subr.mxu0 0.0
    %1313 = vmatpush1.msra.mxu0 0.0
    %1314 = vmatprep.subr.mxu0 0.0
    %1315 = vmatpush1.msra.mxu0 0.0
    %1316 = vmatprep.subr.mxu0 0.0
    %1317 = vmatpush1.msra.mxu0 0.0
    %1318 = vmatprep.subr.mxu0 0.0
    %1319 = vmatpush1.msra.mxu0 0.0
    %1320 = vmatprep.subr.mxu0 0.0
    %1321 = vmatpush1.msra.mxu0 0.0
    %1322 = vmatprep.subr.mxu0 0.0
    %1323 = vmatpush1.msra.mxu0 0.0
    %1324 = vmatprep.subr.mxu0 0.0
    %1325 = vmatpush1.msra.mxu0 0.0
    %1326 = vmatprep.subr.mxu0 0.0
    %1327 = vmatpush1.msra.mxu0 0.0
    %1328 = vmatprep.subr.mxu0 0.0
    %1329 = vmatpush1.msra.mxu0 0.0
    %1330 = vmatprep.subr.mxu0 0.0
    %1331 = vmatpush1.msra.mxu0 0.0
    %1332 = vmatprep.subr.mxu0 0.0
    %1333 = vmatpush1.msra.mxu0 0.0
    %1334 = vmatprep.subr.mxu0 0.0
    %1335 = vmatpush1.msra.mxu0 0.0
    %1336 = vmatprep.subr.mxu0 0.0
    %1337 = vmatpush1.msra.mxu0 0.0
    %1338 = vmatprep.subr.mxu0 0.0
    %1339 = vmatpush1.msra.mxu0 0.0
    %1340 = vmatprep.subr.mxu0 0.0
    %1341 = vmatpush1.msra.mxu0 0.0
    %1342 = vmatprep.subr.mxu0 0.0
    %1343 = vmatpush1.msra.mxu0 0.0
    %1344 = vmatprep.mubr.f32.mxu0 0.0
    %1345 = vmatmul.mubr.f32.gmra.mrb[0].mxu0 %v1266
    %v1346 = vpop.f32.mrb[0].mxu0
    %v1347 = vadd.f32 0.0, %v1346
    %v1348 = vpop.f32.mrb[0].mxu0
    %v1349 = vadd.f32 0.0, %v1348
    %1350 = vdwg.mxu0
    %1351 = vmatprep.subr.mxu0 %v1278
    %1352 = vmatpush1.msra.mxu0 %v1275
    %1353 = vmatprep.subr.mxu0 0.0
    %1354 = vmatpush1.msra.mxu0 0.0
    %1355 = vmatprep.subr.mxu0 0.0
    %1356 = vmatpush1.msra.mxu0 0.0
    %1357 = vmatprep.subr.mxu0 0.0
    %1358 = vmatpush1.msra.mxu0 0.0
    %1359 = vmatprep.subr.mxu0 0.0
    %1360 = vmatpush1.msra.mxu0 0.0
    %1361 = vmatprep.subr.mxu0 0.0
    %1362 = vmatpush1.msra.mxu0 0.0
    %1363 = vmatprep.subr.mxu0 0.0
    %1364 = vmatpush1.msra.mxu0 0.0
    %1365 = vmatprep.subr.mxu0 0.0
    %1366 = vmatpush1.msra.mxu0 0.0
    %1367 = vmatprep.subr.mxu0 0.0
    %1368 = vmatpush1.msra.mxu0 0.0
    %1369 = vmatprep.subr.mxu0 0.0
    %1370 = vmatpush1.msra.mxu0 0.0
    %1371 = vmatprep.subr.mxu0 0.0
    %1372 = vmatpush1.msra.mxu0 0.0
    %1373 = vmatprep.subr.mxu0 0.0
    %1374 = vmatpush1.msra.mxu0 0.0
    %1375 = vmatprep.subr.mxu0 0.0
    %1376 = vmatpush1.msra.mxu0 0.0
    %1377 = vmatprep.subr.mxu0 0.0
    %1378 = vmatpush1.msra.mxu0 0.0
    %1379 = vmatprep.subr.mxu0 0.0
    %1380 = vmatpush1.msra.mxu0 0.0
    %1381 = vmatprep.subr.mxu0 0.0
    %1382 = vmatpush1.msra.mxu0 0.0
    %1383 = vmatprep.subr.mxu0 0.0
    %1384 = vmatpush1.msra.mxu0 0.0
    %1385 = vmatprep.subr.mxu0 0.0
    %1386 = vmatpush1.msra.mxu0 0.0
    %1387 = vmatprep.subr.mxu0 0.0
    %1388 = vmatpush1.msra.mxu0 0.0
    %1389 = vmatprep.subr.mxu0 0.0
    %1390 = vmatpush1.msra.mxu0 0.0
    %1391 = vmatprep.subr.mxu0 0.0
    %1392 = vmatpush1.msra.mxu0 0.0
    %1393 = vmatprep.subr.mxu0 0.0
    %1394 = vmatpush1.msra.mxu0 0.0
    %1395 = vmatprep.subr.mxu0 0.0
    %1396 = vmatpush1.msra.mxu0 0.0
    %1397 = vmatprep.subr.mxu0 0.0
    %1398 = vmatpush1.msra.mxu0 0.0
    %1399 = vmatprep.subr.mxu0 0.0
    %1400 = vmatpush1.msra.mxu0 0.0
    %1401 = vmatprep.subr.mxu0 0.0
    %1402 = vmatpush1.msra.mxu0 0.0
    %1403 = vmatprep.subr.mxu0 0.0
    %1404 = vmatpush1.msra.mxu0 0.0
    %1405 = vmatprep.subr.mxu0 0.0
    %1406 = vmatpush1.msra.mxu0 0.0
    %1407 = vmatprep.subr.mxu0 0.0
    %1408 = vmatpush1.msra.mxu0 0.0
    %1409 = vmatprep.subr.mxu0 0.0
    %1410 = vmatpush1.msra.mxu0 0.0
    %1411 = vmatprep.subr.mxu0 0.0
    %1412 = vmatpush1.msra.mxu0 0.0
    %1413 = vmatprep.subr.mxu0 0.0
    %1414 = vmatpush1.msra.mxu0 0.0
    %1415 = vmatprep.mubr.f32.mxu0 0.0
    %1416 = vmatmul.mubr.f32.gmra.mrb[0].mxu0 %v1266
    %v1417 = vpop.f32.mrb[0].mxu0
    %v1418 = vadd.f32 0.0, %v1417
    %v1419 = vpop.f32.mrb[0].mxu0
    %v1420 = vadd.f32 0.0, %v1419
    %1421 = vdwg.mxu0
    %v1422 = vadd.f32 %v1234, %v1347
    %v1423 = vadd.f32 %v1235, %v1349
    %v1424 = vadd.f32 %v1236, %v1418
    %v1425 = vadd.f32 %v1237, %v1420
    %1426 = vrot.lane.b32.xlu0 %v27, 113
    %v1427 = vpop.permute.xlu0 %1426
    %1428 = vrot.lane.b32.xlu0 %v171, 113
    %v1429 = vpop.permute.xlu0 %1428
    %1430 = vrot.lane.b32.xlu0 %v28, 113
    %v1431 = vpop.permute.xlu0 %1430
    %1432 = vrot.lane.b32.xlu0 %v172, 113
    %v1433 = vpop.permute.xlu0 %1432
    %vm1434 = vcmp.lt.s32.totalorder %v30, 113
    %v1435 = vsel %vm1434, %v1431, %v1433
    %v1436 = vsel %vm1434, %v1429, %v1431
    %v1437 = vsel %vm1434, %v1427, %v1429
    %v1438 = vsel %vm1434, %v1433, %v1427
    %v1439 = vsel %vm154, 1, 0
    %v1440 = vsel %vm155, 1, 0
    %v1441 = vsel %vm156, 1, 0
    %v1442 = vsel %vm157, 1, 0
    %vm1443 = vcmp.eq.s32.totalorder %v1439, 1
    %vm1444 = vcmp.eq.s32.totalorder %v1440, 1
    %vm1445 = vcmp.eq.s32.totalorder %v1441, 1
    %vm1446 = vcmp.eq.s32.totalorder %v1442, 1
    %v1447 = vsel %vm1443, %v1437, 0.0
    %v1448 = vsel %vm1444, %v1436, 0.0
    %v1449 = vsel %vm1445, %v1435, 0.0
    %v1450 = vsel %vm1446, %v1438, 0.0
    %s1451 = scalar_lea.vmem %s1, 48
    %v1452 = vld [vmem:[%s1451] sm:$0xff]
    %v1454 = vsel %vm173, %v1452, 0
    %v1457 = vsel %vm177, %v1447, 0
    %v1460 = vsel %vm177, %v1448, 0
    %v1463 = vsel %vm177, %v1449, 0
    %v1466 = vsel %vm177, %v1450, 0
    %1468 = vmatprep.subr.mxu0 %v1460
    %1469 = vmatpush1.msra.mxu0 %v1457
    %1470 = vmatprep.subr.mxu0 0.0
    %1471 = vmatpush1.msra.mxu0 0.0
    %1472 = vmatprep.subr.mxu0 0.0
    %1473 = vmatpush1.msra.mxu0 0.0
    %1474 = vmatprep.subr.mxu0 0.0
    %1475 = vmatpush1.msra.mxu0 0.0
    %1476 = vmatprep.subr.mxu0 0.0
    %1477 = vmatpush1.msra.mxu0 0.0
    %1478 = vmatprep.subr.mxu0 0.0
    %1479 = vmatpush1.msra.mxu0 0.0
    %1480 = vmatprep.subr.mxu0 0.0
    %1481 = vmatpush1.msra.mxu0 0.0
    %1482 = vmatprep.subr.mxu0 0.0
    %1483 = vmatpush1.msra.mxu0 0.0
    %1484 = vmatprep.subr.mxu0 0.0
    %1485 = vmatpush1.msra.mxu0 0.0
    %1486 = vmatprep.subr.mxu0 0.0
    %1487 = vmatpush1.msra.mxu0 0.0
    %1488 = vmatprep.subr.mxu0 0.0
    %1489 = vmatpush1.msra.mxu0 0.0
    %1490 = vmatprep.subr.mxu0 0.0
    %1491 = vmatpush1.msra.mxu0 0.0
    %1492 = vmatprep.subr.mxu0 0.0
    %1493 = vmatpush1.msra.mxu0 0.0
    %1494 = vmatprep.subr.mxu0 0.0
    %1495 = vmatpush1.msra.mxu0 0.0
    %1496 = vmatprep.subr.mxu0 0.0
    %1497 = vmatpush1.msra.mxu0 0.0
    %1498 = vmatprep.subr.mxu0 0.0
    %1499 = vmatpush1.msra.mxu0 0.0
    %1500 = vmatprep.subr.mxu0 0.0
    %1501 = vmatpush1.msra.mxu0 0.0
    %1502 = vmatprep.subr.mxu0 0.0
    %1503 = vmatpush1.msra.mxu0 0.0
    %1504 = vmatprep.subr.mxu0 0.0
    %1505 = vmatpush1.msra.mxu0 0.0
    %1506 = vmatprep.subr.mxu0 0.0
    %1507 = vmatpush1.msra.mxu0 0.0
    %1508 = vmatprep.subr.mxu0 0.0
    %1509 = vmatpush1.msra.mxu0 0.0
    %1510 = vmatprep.subr.mxu0 0.0
    %1511 = vmatpush1.msra.mxu0 0.0
    %1512 = vmatprep.subr.mxu0 0.0
    %1513 = vmatpush1.msra.mxu0 0.0
    %1514 = vmatprep.subr.mxu0 0.0
    %1515 = vmatpush1.msra.mxu0 0.0
    %1516 = vmatprep.subr.mxu0 0.0
    %1517 = vmatpush1.msra.mxu0 0.0
    %1518 = vmatprep.subr.mxu0 0.0
    %1519 = vmatpush1.msra.mxu0 0.0
    %1520 = vmatprep.subr.mxu0 0.0
    %1521 = vmatpush1.msra.mxu0 0.0
    %1522 = vmatprep.subr.mxu0 0.0
    %1523 = vmatpush1.msra.mxu0 0.0
    %1524 = vmatprep.subr.mxu0 0.0
    %1525 = vmatpush1.msra.mxu0 0.0
    %1526 = vmatprep.subr.mxu0 0.0
    %1527 = vmatpush1.msra.mxu0 0.0
    %1528 = vmatprep.subr.mxu0 0.0
    %1529 = vmatpush1.msra.mxu0 0.0
    %1530 = vmatprep.subr.mxu0 0.0
    %1531 = vmatpush1.msra.mxu0 0.0
    %1532 = vmatprep.mubr.f32.mxu0 0.0
    %1533 = vmatmul.mubr.f32.gmra.mrb[0].mxu0 %v1454
    %v1534 = vpop.f32.mrb[0].mxu0
    %v1535 = vadd.f32 0.0, %v1534
    %v1536 = vpop.f32.mrb[0].mxu0
    %v1537 = vadd.f32 0.0, %v1536
    %1538 = vdwg.mxu0
    %1539 = vmatprep.subr.mxu0 %v1466
    %1540 = vmatpush1.msra.mxu0 %v1463
    %1541 = vmatprep.subr.mxu0 0.0
    %1542 = vmatpush1.msra.mxu0 0.0
    %1543 = vmatprep.subr.mxu0 0.0
    %1544 = vmatpush1.msra.mxu0 0.0
    %1545 = vmatprep.subr.mxu0 0.0
    %1546 = vmatpush1.msra.mxu0 0.0
    %1547 = vmatprep.subr.mxu0 0.0
    %1548 = vmatpush1.msra.mxu0 0.0
    %1549 = vmatprep.subr.mxu0 0.0
    %1550 = vmatpush1.msra.mxu0 0.0
    %1551 = vmatprep.subr.mxu0 0.0
    %1552 = vmatpush1.msra.mxu0 0.0
    %1553 = vmatprep.subr.mxu0 0.0
    %1554 = vmatpush1.msra.mxu0 0.0
    %1555 = vmatprep.subr.mxu0 0.0
    %1556 = vmatpush1.msra.mxu0 0.0
    %1557 = vmatprep.subr.mxu0 0.0
    %1558 = vmatpush1.msra.mxu0 0.0
    %1559 = vmatprep.subr.mxu0 0.0
    %1560 = vmatpush1.msra.mxu0 0.0
    %1561 = vmatprep.subr.mxu0 0.0
    %1562 = vmatpush1.msra.mxu0 0.0
    %1563 = vmatprep.subr.mxu0 0.0
    %1564 = vmatpush1.msra.mxu0 0.0
    %1565 = vmatprep.subr.mxu0 0.0
    %1566 = vmatpush1.msra.mxu0 0.0
    %1567 = vmatprep.subr.mxu0 0.0
    %1568 = vmatpush1.msra.mxu0 0.0
    %1569 = vmatprep.subr.mxu0 0.0
    %1570 = vmatpush1.msra.mxu0 0.0
    %1571 = vmatprep.subr.mxu0 0.0
    %1572 = vmatpush1.msra.mxu0 0.0
    %1573 = vmatprep.subr.mxu0 0.0
    %1574 = vmatpush1.msra.mxu0 0.0
    %1575 = vmatprep.subr.mxu0 0.0
    %1576 = vmatpush1.msra.mxu0 0.0
    %1577 = vmatprep.subr.mxu0 0.0
    %1578 = vmatpush1.msra.mxu0 0.0
    %1579 = vmatprep.subr.mxu0 0.0
    %1580 = vmatpush1.msra.mxu0 0.0
    %1581 = vmatprep.subr.mxu0 0.0
    %1582 = vmatpush1.msra.mxu0 0.0
    %1583 = vmatprep.subr.mxu0 0.0
    %1584 = vmatpush1.msra.mxu0 0.0
    %1585 = vmatprep.subr.mxu0 0.0
    %1586 = vmatpush1.msra.mxu0 0.0
    %1587 = vmatprep.subr.mxu0 0.0
    %1588 = vmatpush1.msra.mxu0 0.0
    %1589 = vmatprep.subr.mxu0 0.0
    %1590 = vmatpush1.msra.mxu0 0.0
    %1591 = vmatprep.subr.mxu0 0.0
    %1592 = vmatpush1.msra.mxu0 0.0
    %1593 = vmatprep.subr.mxu0 0.0
    %1594 = vmatpush1.msra.mxu0 0.0
    %1595 = vmatprep.subr.mxu0 0.0
    %1596 = vmatpush1.msra.mxu0 0.0
    %1597 = vmatprep.subr.mxu0 0.0
    %1598 = vmatpush1.msra.mxu0 0.0
    %1599 = vmatprep.subr.mxu0 0.0
    %1600 = vmatpush1.msra.mxu0 0.0
    %1601 = vmatprep.subr.mxu0 0.0
    %1602 = vmatpush1.msra.mxu0 0.0
    %1603 = vmatprep.mubr.f32.mxu0 0.0
    %1604 = vmatmul.mubr.f32.gmra.mrb[0].mxu0 %v1454
    %v1605 = vpop.f32.mrb[0].mxu0
    %v1606 = vadd.f32 0.0, %v1605
    %v1607 = vpop.f32.mrb[0].mxu0
    %v1608 = vadd.f32 0.0, %v1607
    %1609 = vdwg.mxu0
    %v1610 = vadd.f32 %v1422, %v1535
    %v1611 = vadd.f32 %v1423, %v1537
    %v1612 = vadd.f32 %v1424, %v1606
    %v1613 = vadd.f32 %v1425, %v1608
    %1614 = vrot.lane.b32.xlu0 %v27, 112
    %v1615 = vpop.permute.xlu0 %1614
    %1616 = vrot.lane.b32.xlu0 %v171, 112
    %v1617 = vpop.permute.xlu0 %1616
    %1618 = vrot.lane.b32.xlu0 %v28, 112
    %v1619 = vpop.permute.xlu0 %1618
    %1620 = vrot.lane.b32.xlu0 %v172, 112
    %v1621 = vpop.permute.xlu0 %1620
    %vm1622 = vcmp.lt.s32.totalorder %v30, 112
    %v1623 = vsel %vm1622, %v1619, %v1621
    %v1624 = vsel %vm1622, %v1617, %v1619
    %v1625 = vsel %vm1622, %v1615, %v1617
    %v1626 = vsel %vm1622, %v1621, %v1615
    %v1627 = vsel %vm142, 1, 0
    %v1628 = vsel %vm143, 1, 0
    %v1629 = vsel %vm144, 1, 0
    %v1630 = vsel %vm145, 1, 0
    %vm1631 = vcmp.eq.s32.totalorder %v1627, 1
    %vm1632 = vcmp.eq.s32.totalorder %v1628, 1
    %vm1633 = vcmp.eq.s32.totalorder %v1629, 1
    %vm1634 = vcmp.eq.s32.totalorder %v1630, 1
    %v1635 = vsel %vm1631, %v1625, 0.0
    %v1636 = vsel %vm1632, %v1624, 0.0
    %v1637 = vsel %vm1633, %v1623, 0.0
    %v1638 = vsel %vm1634, %v1626, 0.0
    %s1639 = scalar_lea.vmem %s1, 56
    %v1640 = vld [vmem:[%s1639] sm:$0xff]
    %v1642 = vsel %vm173, %v1640, 0
    %v1645 = vsel %vm177, %v1635, 0
    %v1648 = vsel %vm177, %v1636, 0
    %v1651 = vsel %vm177, %v1637, 0
    %v1654 = vsel %vm177, %v1638, 0
    %1656 = vmatprep.subr.mxu0 %v1648
    %1657 = vmatpush1.msra.mxu0 %v1645
    %1658 = vmatprep.subr.mxu0 0.0
    %1659 = vmatpush1.msra.mxu0 0.0
    %1660 = vmatprep.subr.mxu0 0.0
    %1661 = vmatpush1.msra.mxu0 0.0
    %1662 = vmatprep.subr.mxu0 0.0
    %1663 = vmatpush1.msra.mxu0 0.0
    %1664 = vmatprep.subr.mxu0 0.0
    %1665 = vmatpush1.msra.mxu0 0.0
    %1666 = vmatprep.subr.mxu0 0.0
    %1667 = vmatpush1.msra.mxu0 0.0
    %1668 = vmatprep.subr.mxu0 0.0
    %1669 = vmatpush1.msra.mxu0 0.0
    %1670 = vmatprep.subr.mxu0 0.0
    %1671 = vmatpush1.msra.mxu0 0.0
    %1672 = vmatprep.subr.mxu0 0.0
    %1673 = vmatpush1.msra.mxu0 0.0
    %1674 = vmatprep.subr.mxu0 0.0
    %1675 = vmatpush1.msra.mxu0 0.0
    %1676 = vmatprep.subr.mxu0 0.0
    %1677 = vmatpush1.msra.mxu0 0.0
    %1678 = vmatprep.subr.mxu0 0.0
    %1679 = vmatpush1.msra.mxu0 0.0
    %1680 = vmatprep.subr.mxu0 0.0
    %1681 = vmatpush1.msra.mxu0 0.0
    %1682 = vmatprep.subr.mxu0 0.0
    %1683 = vmatpush1.msra.mxu0 0.0
    %1684 = vmatprep.subr.mxu0 0.0
    %1685 = vmatpush1.msra.mxu0 0.0
    %1686 = vmatprep.subr.mxu0 0.0
    %1687 = vmatpush1.msra.mxu0 0.0
    %1688 = vmatprep.subr.mxu0 0.0
    %1689 = vmatpush1.msra.mxu0 0.0
    %1690 = vmatprep.subr.mxu0 0.0
    %1691 = vmatpush1.msra.mxu0 0.0
    %1692 = vmatprep.subr.mxu0 0.0
    %1693 = vmatpush1.msra.mxu0 0.0
    %1694 = vmatprep.subr.mxu0 0.0
    %1695 = vmatpush1.msra.mxu0 0.0
    %1696 = vmatprep.subr.mxu0 0.0
    %1697 = vmatpush1.msra.mxu0 0.0
    %1698 = vmatprep.subr.mxu0 0.0
    %1699 = vmatpush1.msra.mxu0 0.0
    %1700 = vmatprep.subr.mxu0 0.0
    %1701 = vmatpush1.msra.mxu0 0.0
    %1702 = vmatprep.subr.mxu0 0.0
    %1703 = vmatpush1.msra.mxu0 0.0
    %1704 = vmatprep.subr.mxu0 0.0
    %1705 = vmatpush1.msra.mxu0 0.0
    %1706 = vmatprep.subr.mxu0 0.0
    %1707 = vmatpush1.msra.mxu0 0.0
    %1708 = vmatprep.subr.mxu0 0.0
    %1709 = vmatpush1.msra.mxu0 0.0
    %1710 = vmatprep.subr.mxu0 0.0
    %1711 = vmatpush1.msra.mxu0 0.0
    %1712 = vmatprep.subr.mxu0 0.0
    %1713 = vmatpush1.msra.mxu0 0.0
    %1714 = vmatprep.subr.mxu0 0.0
    %1715 = vmatpush1.msra.mxu0 0.0
    %1716 = vmatprep.subr.mxu0 0.0
    %1717 = vmatpush1.msra.mxu0 0.0
    %1718 = vmatprep.subr.mxu0 0.0
    %1719 = vmatpush1.msra.mxu0 0.0
    %1720 = vmatprep.mubr.f32.mxu0 0.0
    %1721 = vmatmul.mubr.f32.gmra.mrb[0].mxu0 %v1642
    %v1722 = vpop.f32.mrb[0].mxu0
    %v1723 = vadd.f32 0.0, %v1722
    %v1724 = vpop.f32.mrb[0].mxu0
    %v1725 = vadd.f32 0.0, %v1724
    %1726 = vdwg.mxu0
    %1727 = vmatprep.subr.mxu0 %v1654
    %1728 = vmatpush1.msra.mxu0 %v1651
    %1729 = vmatprep.subr.mxu0 0.0
    %1730 = vmatpush1.msra.mxu0 0.0
    %1731 = vmatprep.subr.mxu0 0.0
    %1732 = vmatpush1.msra.mxu0 0.0
    %1733 = vmatprep.subr.mxu0 0.0
    %1734 = vmatpush1.msra.mxu0 0.0
    %1735 = vmatprep.subr.mxu0 0.0
    %1736 = vmatpush1.msra.mxu0 0.0
    %1737 = vmatprep.subr.mxu0 0.0
    %1738 = vmatpush1.msra.mxu0 0.0
    %1739 = vmatprep.subr.mxu0 0.0
    %1740 = vmatpush1.msra.mxu0 0.0
    %1741 = vmatprep.subr.mxu0 0.0
    %1742 = vmatpush1.msra.mxu0 0.0
    %1743 = vmatprep.subr.mxu0 0.0
    %1744 = vmatpush1.msra.mxu0 0.0
    %1745 = vmatprep.subr.mxu0 0.0
    %1746 = vmatpush1.msra.mxu0 0.0
    %1747 = vmatprep.subr.mxu0 0.0
    %1748 = vmatpush1.msra.mxu0 0.0
    %1749 = vmatprep.subr.mxu0 0.0
    %1750 = vmatpush1.msra.mxu0 0.0
    %1751 = vmatprep.subr.mxu0 0.0
    %1752 = vmatpush1.msra.mxu0 0.0
    %1753 = vmatprep.subr.mxu0 0.0
    %1754 = vmatpush1.msra.mxu0 0.0
    %1755 = vmatprep.subr.mxu0 0.0
    %1756 = vmatpush1.msra.mxu0 0.0
    %1757 = vmatprep.subr.mxu0 0.0
    %1758 = vmatpush1.msra.mxu0 0.0
    %1759 = vmatprep.subr.mxu0 0.0
    %1760 = vmatpush1.msra.mxu0 0.0
    %1761 = vmatprep.subr.mxu0 0.0
    %1762 = vmatpush1.msra.mxu0 0.0
    %1763 = vmatprep.subr.mxu0 0.0
    %1764 = vmatpush1.msra.mxu0 0.0
    %1765 = vmatprep.subr.mxu0 0.0
    %1766 = vmatpush1.msra.mxu0 0.0
    %1767 = vmatprep.subr.mxu0 0.0
    %1768 = vmatpush1.msra.mxu0 0.0
    %1769 = vmatprep.subr.mxu0 0.0
    %1770 = vmatpush1.msra.mxu0 0.0
    %1771 = vmatprep.subr.mxu0 0.0
    %1772 = vmatpush1.msra.mxu0 0.0
    %1773 = vmatprep.subr.mxu0 0.0
    %1774 = vmatpush1.msra.mxu0 0.0
    %1775 = vmatprep.subr.mxu0 0.0
    %1776 = vmatpush1.msra.mxu0 0.0
    %1777 = vmatprep.subr.mxu0 0.0
    %1778 = vmatpush1.msra.mxu0 0.0
    %1779 = vmatprep.subr.mxu0 0.0
    %1780 = vmatpush1.msra.mxu0 0.0
    %1781 = vmatprep.subr.mxu0 0.0
    %1782 = vmatpush1.msra.mxu0 0.0
    %1783 = vmatprep.subr.mxu0 0.0
    %1784 = vmatpush1.msra.mxu0 0.0
    %1785 = vmatprep.subr.mxu0 0.0
    %1786 = vmatpush1.msra.mxu0 0.0
    %1787 = vmatprep.subr.mxu0 0.0
    %1788 = vmatpush1.msra.mxu0 0.0
    %1789 = vmatprep.subr.mxu0 0.0
    %1790 = vmatpush1.msra.mxu0 0.0
    %1791 = vmatprep.mubr.f32.mxu0 0.0
    %1792 = vmatmul.mubr.f32.gmra.mrb[0].mxu0 %v1642
    %v1793 = vpop.f32.mrb[0].mxu0
    %v1794 = vadd.f32 0.0, %v1793
    %v1795 = vpop.f32.mrb[0].mxu0
    %v1796 = vadd.f32 0.0, %v1795
    %1797 = vdwg.mxu0
    %v1798 = vadd.f32 %v1610, %v1723
    %v1799 = vadd.f32 %v1611, %v1725
    %v1800 = vadd.f32 %v1612, %v1794
    %v1801 = vadd.f32 %v1613, %v1796
    %1802 = vrot.lane.b32.xlu0 %v27, 111
    %v1803 = vpop.permute.xlu0 %1802
    %1804 = vrot.lane.b32.xlu0 %v171, 111
    %v1805 = vpop.permute.xlu0 %1804
    %1806 = vrot.lane.b32.xlu0 %v28, 111
    %v1807 = vpop.permute.xlu0 %1806
    %1808 = vrot.lane.b32.xlu0 %v172, 111
    %v1809 = vpop.permute.xlu0 %1808
    %vm1810 = vcmp.lt.s32.totalorder %v30, 111
    %v1811 = vsel %vm1810, %v1807, %v1809
    %v1812 = vsel %vm1810, %v1805, %v1807
    %v1813 = vsel %vm1810, %v1803, %v1805
    %v1814 = vsel %vm1810, %v1809, %v1803
    %v1815 = vsel %vm158, 1, 0
    %v1816 = vsel %vm159, 1, 0
    %v1817 = vsel %vm160, 1, 0
    %v1818 = vsel %vm161, 1, 0
    %vm1819 = vcmp.eq.s32.totalorder %v1815, 1
    %vm1820 = vcmp.eq.s32.totalorder %v1816, 1
    %vm1821 = vcmp.eq.s32.totalorder %v1817, 1
    %vm1822 = vcmp.eq.s32.totalorder %v1818, 1
    %v1823 = vsel %vm1819, %v1813, 0.0
    %v1824 = vsel %vm1820, %v1812, 0.0
    %v1825 = vsel %vm1821, %v1811, 0.0
    %v1826 = vsel %vm1822, %v1814, 0.0
    %s1827 = scalar_lea.vmem %s1, 64
    %v1828 = vld [vmem:[%s1827] sm:$0xff]
    %v1830 = vsel %vm173, %v1828, 0
    %v1833 = vsel %vm177, %v1823, 0
    %v1836 = vsel %vm177, %v1824, 0
    %v1839 = vsel %vm177, %v1825, 0
    %v1842 = vsel %vm177, %v1826, 0
    %1844 = vmatprep.subr.mxu0 %v1836
    %1845 = vmatpush1.msra.mxu0 %v1833
    %1846 = vmatprep.subr.mxu0 0.0
    %1847 = vmatpush1.msra.mxu0 0.0
    %1848 = vmatprep.subr.mxu0 0.0
    %1849 = vmatpush1.msra.mxu0 0.0
    %1850 = vmatprep.subr.mxu0 0.0
    %1851 = vmatpush1.msra.mxu0 0.0
    %1852 = vmatprep.subr.mxu0 0.0
    %1853 = vmatpush1.msra.mxu0 0.0
    %1854 = vmatprep.subr.mxu0 0.0
    %1855 = vmatpush1.msra.mxu0 0.0
    %1856 = vmatprep.subr.mxu0 0.0
    %1857 = vmatpush1.msra.mxu0 0.0
    %1858 = vmatprep.subr.mxu0 0.0
    %1859 = vmatpush1.msra.mxu0 0.0
    %1860 = vmatprep.subr.mxu0 0.0
    %1861 = vmatpush1.msra.mxu0 0.0
    %1862 = vmatprep.subr.mxu0 0.0
    %1863 = vmatpush1.msra.mxu0 0.0
    %1864 = vmatprep.subr.mxu0 0.0
    %1865 = vmatpush1.msra.mxu0 0.0
    %1866 = vmatprep.subr.mxu0 0.0
    %1867 = vmatpush1.msra.mxu0 0.0
    %1868 = vmatprep.subr.mxu0 0.0
    %1869 = vmatpush1.msra.mxu0 0.0
    %1870 = vmatprep.subr.mxu0 0.0
    %1871 = vmatpush1.msra.mxu0 0.0
    %1872 = vmatprep.subr.mxu0 0.0
    %1873 = vmatpush1.msra.mxu0 0.0
    %1874 = vmatprep.subr.mxu0 0.0
    %1875 = vmatpush1.msra.mxu0 0.0
    %1876 = vmatprep.subr.mxu0 0.0
    %1877 = vmatpush1.msra.mxu0 0.0
    %1878 = vmatprep.subr.mxu0 0.0
    %1879 = vmatpush1.msra.mxu0 0.0
    %1880 = vmatprep.subr.mxu0 0.0
    %1881 = vmatpush1.msra.mxu0 0.0
    %1882 = vmatprep.subr.mxu0 0.0
    %1883 = vmatpush1.msra.mxu0 0.0
    %1884 = vmatprep.subr.mxu0 0.0
    %1885 = vmatpush1.msra.mxu0 0.0
    %1886 = vmatprep.subr.mxu0 0.0
    %1887 = vmatpush1.msra.mxu0 0.0
    %1888 = vmatprep.subr.mxu0 0.0
    %1889 = vmatpush1.msra.mxu0 0.0
    %1890 = vmatprep.subr.mxu0 0.0
    %1891 = vmatpush1.msra.mxu0 0.0
    %1892 = vmatprep.subr.mxu0 0.0
    %1893 = vmatpush1.msra.mxu0 0.0
    %1894 = vmatprep.subr.mxu0 0.0
    %1895 = vmatpush1.msra.mxu0 0.0
    %1896 = vmatprep.subr.mxu0 0.0
    %1897 = vmatpush1.msra.mxu0 0.0
    %1898 = vmatprep.subr.mxu0 0.0
    %1899 = vmatpush1.msra.mxu0 0.0
    %1900 = vmatprep.subr.mxu0 0.0
    %1901 = vmatpush1.msra.mxu0 0.0
    %1902 = vmatprep.subr.mxu0 0.0
    %1903 = vmatpush1.msra.mxu0 0.0
    %1904 = vmatprep.subr.mxu0 0.0
    %1905 = vmatpush1.msra.mxu0 0.0
    %1906 = vmatprep.subr.mxu0 0.0
    %1907 = vmatpush1.msra.mxu0 0.0
    %1908 = vmatprep.mubr.f32.mxu0 0.0
    %1909 = vmatmul.mubr.f32.gmra.mrb[0].mxu0 %v1830
    %v1910 = vpop.f32.mrb[0].mxu0
    %v1911 = vadd.f32 0.0, %v1910
    %v1912 = vpop.f32.mrb[0].mxu0
    %v1913 = vadd.f32 0.0, %v1912
    %1914 = vdwg.mxu0
    %1915 = vmatprep.subr.mxu0 %v1842
    %1916 = vmatpush1.msra.mxu0 %v1839
    %1917 = vmatprep.subr.mxu0 0.0
    %1918 = vmatpush1.msra.mxu0 0.0
    %1919 = vmatprep.subr.mxu0 0.0
    %1920 = vmatpush1.msra.mxu0 0.0
    %1921 = vmatprep.subr.mxu0 0.0
    %1922 = vmatpush1.msra.mxu0 0.0
    %1923 = vmatprep.subr.mxu0 0.0
    %1924 = vmatpush1.msra.mxu0 0.0
    %1925 = vmatprep.subr.mxu0 0.0
    %1926 = vmatpush1.msra.mxu0 0.0
    %1927 = vmatprep.subr.mxu0 0.0
    %1928 = vmatpush1.msra.mxu0 0.0
    %1929 = vmatprep.subr.mxu0 0.0
    %1930 = vmatpush1.msra.mxu0 0.0
    %1931 = vmatprep.subr.mxu0 0.0
    %1932 = vmatpush1.msra.mxu0 0.0
    %1933 = vmatprep.subr.mxu0 0.0
    %1934 = vmatpush1.msra.mxu0 0.0
    %1935 = vmatprep.subr.mxu0 0.0
    %1936 = vmatpush1.msra.mxu0 0.0
    %1937 = vmatprep.subr.mxu0 0.0
    %1938 = vmatpush1.msra.mxu0 0.0
    %1939 = vmatprep.subr.mxu0 0.0
    %1940 = vmatpush1.msra.mxu0 0.0
    %1941 = vmatprep.subr.mxu0 0.0
    %1942 = vmatpush1.msra.mxu0 0.0
    %1943 = vmatprep.subr.mxu0 0.0
    %1944 = vmatpush1.msra.mxu0 0.0
    %1945 = vmatprep.subr.mxu0 0.0
    %1946 = vmatpush1.msra.mxu0 0.0
    %1947 = vmatprep.subr.mxu0 0.0
    %1948 = vmatpush1.msra.mxu0 0.0
    %1949 = vmatprep.subr.mxu0 0.0
    %1950 = vmatpush1.msra.mxu0 0.0
    %1951 = vmatprep.subr.mxu0 0.0
    %1952 = vmatpush1.msra.mxu0 0.0
    %1953 = vmatprep.subr.mxu0 0.0
    %1954 = vmatpush1.msra.mxu0 0.0
    %1955 = vmatprep.subr.mxu0 0.0
    %1956 = vmatpush1.msra.mxu0 0.0
    %1957 = vmatprep.subr.mxu0 0.0
    %1958 = vmatpush1.msra.mxu0 0.0
    %1959 = vmatprep.subr.mxu0 0.0
    %1960 = vmatpush1.msra.mxu0 0.0
    %1961 = vmatprep.subr.mxu0 0.0
    %1962 = vmatpush1.msra.mxu0 0.0
    %1963 = vmatprep.subr.mxu0 0.0
    %1964 = vmatpush1.msra.mxu0 0.0
    %1965 = vmatprep.subr.mxu0 0.0
    %1966 = vmatpush1.msra.mxu0 0.0
    %1967 = vmatprep.subr.mxu0 0.0
    %1968 = vmatpush1.msra.mxu0 0.0
    %1969 = vmatprep.subr.mxu0 0.0
    %1970 = vmatpush1.msra.mxu0 0.0
    %1971 = vmatprep.subr.mxu0 0.0
    %1972 = vmatpush1.msra.mxu0 0.0
    %1973 = vmatprep.subr.mxu0 0.0
    %1974 = vmatpush1.msra.mxu0 0.0
    %1975 = vmatprep.subr.mxu0 0.0
    %1976 = vmatpush1.msra.mxu0 0.0
    %1977 = vmatprep.subr.mxu0 0.0
    %1978 = vmatpush1.msra.mxu0 0.0
    %1979 = vmatprep.mubr.f32.mxu0 0.0
    %1980 = vmatmul.mubr.f32.gmra.mrb[0].mxu0 %v1830
    %v1981 = vpop.f32.mrb[0].mxu0
    %v1982 = vadd.f32 0.0, %v1981
    %v1983 = vpop.f32.mrb[0].mxu0
    %v1984 = vadd.f32 0.0, %v1983
    %1985 = vdwg.mxu0
    %v1986 = vadd.f32 %v1798, %v1911
    %v1987 = vadd.f32 %v1799, %v1913
    %v1988 = vadd.f32 %v1800, %v1982
    %v1989 = vadd.f32 %v1801, %v1984
    %v1990 = vld [vmem:[%s4] sm:$0xff]
    %1992 = vset.pattern.permute.xlu0 0
    %1993 = vperm.xlu0 %1992, %v1990
    %v1994 = vpop.permute.xlu0 %1993
    %v1996 = vadd.f32 %v253, %v1994
    %v1997 = vadd.f32 %v255, %v1994
    %v1998 = vadd.f32 %v324, %v1994
    %v1999 = vadd.f32 %v326, %v1994
    %2000 = vrot.lane.b32.xlu0 %v1986, 17
    %v2001 = vpop.permute.xlu0 %2000
    %2002 = vrot.lane.b32.xlu0 %v1987, 17
    %v2003 = vpop.permute.xlu0 %2002
    %2004 = vrot.lane.b32.xlu0 %v1988, 17
    %v2005 = vpop.permute.xlu0 %2004
    %2006 = vrot.lane.b32.xlu0 %v1989, 17
    %v2007 = vpop.permute.xlu0 %2006
    %v2008 = vsel %vm344, %v2005, %v2007
    %v2009 = vsel %vm344, %v2003, %v2005
    %v2010 = vsel %vm344, %v2001, %v2003
    %v2011 = vsel %vm344, %v2007, %v2001
    %v2012 = vsel %vm353, %v2011, 0.0
    %v2013 = vsel %vm354, %v2010, 0.0
    %v2014 = vsel %vm355, %v2009, 0.0
    %v2015 = vsel %vm356, %v2008, 0.0
    %v2016 = vld [vmem:[%s3] sm:$0xff]
    %vm2017 = vcmask 64512
    %v2019 = vsel %vm2017, %v2016, 0
    %2021 = vmatprep.subr.mxu0 %v2013
    %2022 = vmatpush1.msra.mxu0 %v2012
    %2023 = vmatprep.subr.mxu0 0.0
    %2024 = vmatpush1.msra.mxu0 0.0
    %2025 = vmatprep.subr.mxu0 0.0
    %2026 = vmatpush1.msra.mxu0 0.0
    %2027 = vmatprep.subr.mxu0 0.0
    %2028 = vmatpush1.msra.mxu0 0.0
    %2029 = vmatprep.subr.mxu0 0.0
    %2030 = vmatpush1.msra.mxu0 0.0
    %2031 = vmatprep.subr.mxu0 0.0
    %2032 = vmatpush1.msra.mxu0 0.0
    %2033 = vmatprep.subr.mxu0 0.0
    %2034 = vmatpush1.msra.mxu0 0.0
    %2035 = vmatprep.subr.mxu0 0.0
    %2036 = vmatpush1.msra.mxu0 0.0
    %2037 = vmatprep.subr.mxu0 0.0
    %2038 = vmatpush1.msra.mxu0 0.0
    %2039 = vmatprep.subr.mxu0 0.0
    %2040 = vmatpush1.msra.mxu0 0.0
    %2041 = vmatprep.subr.mxu0 0.0
    %2042 = vmatpush1.msra.mxu0 0.0
    %2043 = vmatprep.subr.mxu0 0.0
    %2044 = vmatpush1.msra.mxu0 0.0
    %2045 = vmatprep.subr.mxu0 0.0
    %2046 = vmatpush1.msra.mxu0 0.0
    %2047 = vmatprep.subr.mxu0 0.0
    %2048 = vmatpush1.msra.mxu0 0.0
    %2049 = vmatprep.subr.mxu0 0.0
    %2050 = vmatpush1.msra.mxu0 0.0
    %2051 = vmatprep.subr.mxu0 0.0
    %2052 = vmatpush1.msra.mxu0 0.0
    %2053 = vmatprep.subr.mxu0 0.0
    %2054 = vmatpush1.msra.mxu0 0.0
    %2055 = vmatprep.subr.mxu0 0.0
    %2056 = vmatpush1.msra.mxu0 0.0
    %2057 = vmatprep.subr.mxu0 0.0
    %2058 = vmatpush1.msra.mxu0 0.0
    %2059 = vmatprep.subr.mxu0 0.0
    %2060 = vmatpush1.msra.mxu0 0.0
    %2061 = vmatprep.subr.mxu0 0.0
    %2062 = vmatpush1.msra.mxu0 0.0
    %2063 = vmatprep.subr.mxu0 0.0
    %2064 = vmatpush1.msra.mxu0 0.0
    %2065 = vmatprep.subr.mxu0 0.0
    %2066 = vmatpush1.msra.mxu0 0.0
    %2067 = vmatprep.subr.mxu0 0.0
    %2068 = vmatpush1.msra.mxu0 0.0
    %2069 = vmatprep.subr.mxu0 0.0
    %2070 = vmatpush1.msra.mxu0 0.0
    %2071 = vmatprep.subr.mxu0 0.0
    %2072 = vmatpush1.msra.mxu0 0.0
    %2073 = vmatprep.subr.mxu0 0.0
    %2074 = vmatpush1.msra.mxu0 0.0
    %2075 = vmatprep.subr.mxu0 0.0
    %2076 = vmatpush1.msra.mxu0 0.0
    %2077 = vmatprep.subr.mxu0 0.0
    %2078 = vmatpush1.msra.mxu0 0.0
    %2079 = vmatprep.subr.mxu0 0.0
    %2080 = vmatpush1.msra.mxu0 0.0
    %2081 = vmatprep.subr.mxu0 0.0
    %2082 = vmatpush1.msra.mxu0 0.0
    %2083 = vmatprep.subr.mxu0 0.0
    %2084 = vmatpush1.msra.mxu0 0.0
    %2085 = vmatprep.mubr.f32.mxu0 0.0
    %2086 = vmatmul.mubr.f32.gmra.mrb[0].mxu0 %v2019
    %v2087 = vpop.f32.mrb[0].mxu0
    %v2088 = vadd.f32 0.0, %v2087
    %v2089 = vpop.f32.mrb[0].mxu0
    %v2090 = vadd.f32 0.0, %v2089
    %2091 = vdwg.mxu0
    %2092 = vmatprep.subr.mxu0 %v2015
    %2093 = vmatpush1.msra.mxu0 %v2014
    %2094 = vmatprep.subr.mxu0 0.0
    %2095 = vmatpush1.msra.mxu0 0.0
    %2096 = vmatprep.subr.mxu0 0.0
    %2097 = vmatpush1.msra.mxu0 0.0
    %2098 = vmatprep.subr.mxu0 0.0
    %2099 = vmatpush1.msra.mxu0 0.0
    %2100 = vmatprep.subr.mxu0 0.0
    %2101 = vmatpush1.msra.mxu0 0.0
    %2102 = vmatprep.subr.mxu0 0.0
    %2103 = vmatpush1.msra.mxu0 0.0
    %2104 = vmatprep.subr.mxu0 0.0
    %2105 = vmatpush1.msra.mxu0 0.0
    %2106 = vmatprep.subr.mxu0 0.0
    %2107 = vmatpush1.msra.mxu0 0.0
    %2108 = vmatprep.subr.mxu0 0.0
    %2109 = vmatpush1.msra.mxu0 0.0
    %2110 = vmatprep.subr.mxu0 0.0
    %2111 = vmatpush1.msra.mxu0 0.0
    %2112 = vmatprep.subr.mxu0 0.0
    %2113 = vmatpush1.msra.mxu0 0.0
    %2114 = vmatprep.subr.mxu0 0.0
    %2115 = vmatpush1.msra.mxu0 0.0
    %2116 = vmatprep.subr.mxu0 0.0
    %2117 = vmatpush1.msra.mxu0 0.0
    %2118 = vmatprep.subr.mxu0 0.0
    %2119 = vmatpush1.msra.mxu0 0.0
    %2120 = vmatprep.subr.mxu0 0.0
    %2121 = vmatpush1.msra.mxu0 0.0
    %2122 = vmatprep.subr.mxu0 0.0
    %2123 = vmatpush1.msra.mxu0 0.0
    %2124 = vmatprep.subr.mxu0 0.0
    %2125 = vmatpush1.msra.mxu0 0.0
    %2126 = vmatprep.subr.mxu0 0.0
    %2127 = vmatpush1.msra.mxu0 0.0
    %2128 = vmatprep.subr.mxu0 0.0
    %2129 = vmatpush1.msra.mxu0 0.0
    %2130 = vmatprep.subr.mxu0 0.0
    %2131 = vmatpush1.msra.mxu0 0.0
    %2132 = vmatprep.subr.mxu0 0.0
    %2133 = vmatpush1.msra.mxu0 0.0
    %2134 = vmatprep.subr.mxu0 0.0
    %2135 = vmatpush1.msra.mxu0 0.0
    %2136 = vmatprep.subr.mxu0 0.0
    %2137 = vmatpush1.msra.mxu0 0.0
    %2138 = vmatprep.subr.mxu0 0.0
    %2139 = vmatpush1.msra.mxu0 0.0
    %2140 = vmatprep.subr.mxu0 0.0
    %2141 = vmatpush1.msra.mxu0 0.0
    %2142 = vmatprep.subr.mxu0 0.0
    %2143 = vmatpush1.msra.mxu0 0.0
    %2144 = vmatprep.subr.mxu0 0.0
    %2145 = vmatpush1.msra.mxu0 0.0
    %2146 = vmatprep.subr.mxu0 0.0
    %2147 = vmatpush1.msra.mxu0 0.0
    %2148 = vmatprep.subr.mxu0 0.0
    %2149 = vmatpush1.msra.mxu0 0.0
    %2150 = vmatprep.subr.mxu0 0.0
    %2151 = vmatpush1.msra.mxu0 0.0
    %2152 = vmatprep.subr.mxu0 0.0
    %2153 = vmatpush1.msra.mxu0 0.0
    %2154 = vmatprep.subr.mxu0 0.0
    %2155 = vmatpush1.msra.mxu0 0.0
    %2156 = vmatprep.mubr.f32.mxu0 0.0
    %2157 = vmatmul.mubr.f32.gmra.mrb[0].mxu0 %v2019
    %v2158 = vpop.f32.mrb[0].mxu0
    %v2159 = vadd.f32 0.0, %v2158
    %v2160 = vpop.f32.mrb[0].mxu0
    %v2161 = vadd.f32 0.0, %v2160
    %2162 = vdwg.mxu0
    %v2163 = vadd.f32 %v1996, %v2088
    %v2164 = vadd.f32 %v1997, %v2090
    %v2165 = vadd.f32 %v1998, %v2159
    %v2166 = vadd.f32 %v1999, %v2161
    %2167 = vrot.lane.b32.xlu0 %v1986, 16
    %v2168 = vpop.permute.xlu0 %2167
    %2169 = vrot.lane.b32.xlu0 %v1987, 16
    %v2170 = vpop.permute.xlu0 %2169
    %2171 = vrot.lane.b32.xlu0 %v1988, 16
    %v2172 = vpop.permute.xlu0 %2171
    %2173 = vrot.lane.b32.xlu0 %v1989, 16
    %v2174 = vpop.permute.xlu0 %2173
    %v2175 = vsel %vm531, %v2172, %v2174
    %v2176 = vsel %vm531, %v2170, %v2172
    %v2177 = vsel %vm531, %v2168, %v2170
    %v2178 = vsel %vm531, %v2174, %v2168
    %v2179 = vsel %vm540, %v2178, 0.0
    %v2180 = vsel %vm541, %v2177, 0.0
    %v2181 = vsel %vm542, %v2176, 0.0
    %v2182 = vsel %vm543, %v2175, 0.0
    %s2183 = scalar_lea.vmem %s3, 8
    %v2184 = vld [vmem:[%s2183] sm:$0xff]
    %v2186 = vsel %vm2017, %v2184, 0
    %2188 = vmatprep.subr.mxu0 %v2180
    %2189 = vmatpush1.msra.mxu0 %v2179
    %2190 = vmatprep.subr.mxu0 0.0
    %2191 = vmatpush1.msra.mxu0 0.0
    %2192 = vmatprep.subr.mxu0 0.0
    %2193 = vmatpush1.msra.mxu0 0.0
    %2194 = vmatprep.subr.mxu0 0.0
    %2195 = vmatpush1.msra.mxu0 0.0
    %2196 = vmatprep.subr.mxu0 0.0
    %2197 = vmatpush1.msra.mxu0 0.0
    %2198 = vmatprep.subr.mxu0 0.0
    %2199 = vmatpush1.msra.mxu0 0.0
    %2200 = vmatprep.subr.mxu0 0.0
    %2201 = vmatpush1.msra.mxu0 0.0
    %2202 = vmatprep.subr.mxu0 0.0
    %2203 = vmatpush1.msra.mxu0 0.0
    %2204 = vmatprep.subr.mxu0 0.0
    %2205 = vmatpush1.msra.mxu0 0.0
    %2206 = vmatprep.subr.mxu0 0.0
    %2207 = vmatpush1.msra.mxu0 0.0
    %2208 = vmatprep.subr.mxu0 0.0
    %2209 = vmatpush1.msra.mxu0 0.0
    %2210 = vmatprep.subr.mxu0 0.0
    %2211 = vmatpush1.msra.mxu0 0.0
    %2212 = vmatprep.subr.mxu0 0.0
    %2213 = vmatpush1.msra.mxu0 0.0
    %2214 = vmatprep.subr.mxu0 0.0
    %2215 = vmatpush1.msra.mxu0 0.0
    %2216 = vmatprep.subr.mxu0 0.0
    %2217 = vmatpush1.msra.mxu0 0.0
    %2218 = vmatprep.subr.mxu0 0.0
    %2219 = vmatpush1.msra.mxu0 0.0
    %2220 = vmatprep.subr.mxu0 0.0
    %2221 = vmatpush1.msra.mxu0 0.0
    %2222 = vmatprep.subr.mxu0 0.0
    %2223 = vmatpush1.msra.mxu0 0.0
    %2224 = vmatprep.subr.mxu0 0.0
    %2225 = vmatpush1.msra.mxu0 0.0
    %2226 = vmatprep.subr.mxu0 0.0
    %2227 = vmatpush1.msra.mxu0 0.0
    %2228 = vmatprep.subr.mxu0 0.0
    %2229 = vmatpush1.msra.mxu0 0.0
    %2230 = vmatprep.subr.mxu0 0.0
    %2231 = vmatpush1.msra.mxu0 0.0
    %2232 = vmatprep.subr.mxu0 0.0
    %2233 = vmatpush1.msra.mxu0 0.0
    %2234 = vmatprep.subr.mxu0 0.0
    %2235 = vmatpush1.msra.mxu0 0.0
    %2236 = vmatprep.subr.mxu0 0.0
    %2237 = vmatpush1.msra.mxu0 0.0
    %2238 = vmatprep.subr.mxu0 0.0
    %2239 = vmatpush1.msra.mxu0 0.0
    %2240 = vmatprep.subr.mxu0 0.0
    %2241 = vmatpush1.msra.mxu0 0.0
    %2242 = vmatprep.subr.mxu0 0.0
    %2243 = vmatpush1.msra.mxu0 0.0
    %2244 = vmatprep.subr.mxu0 0.0
    %2245 = vmatpush1.msra.mxu0 0.0
    %2246 = vmatprep.subr.mxu0 0.0
    %2247 = vmatpush1.msra.mxu0 0.0
    %2248 = vmatprep.subr.mxu0 0.0
    %2249 = vmatpush1.msra.mxu0 0.0
    %2250 = vmatprep.subr.mxu0 0.0
    %2251 = vmatpush1.msra.mxu0 0.0
    %2252 = vmatprep.mubr.f32.mxu0 0.0
    %2253 = vmatmul.mubr.f32.gmra.mrb[0].mxu0 %v2186
    %v2254 = vpop.f32.mrb[0].mxu0
    %v2255 = vadd.f32 0.0, %v2254
    %v2256 = vpop.f32.mrb[0].mxu0
    %v2257 = vadd.f32 0.0, %v2256
    %2258 = vdwg.mxu0
    %2259 = vmatprep.subr.mxu0 %v2182
    %2260 = vmatpush1.msra.mxu0 %v2181
    %2261 = vmatprep.subr.mxu0 0.0
    %2262 = vmatpush1.msra.mxu0 0.0
    %2263 = vmatprep.subr.mxu0 0.0
    %2264 = vmatpush1.msra.mxu0 0.0
    %2265 = vmatprep.subr.mxu0 0.0
    %2266 = vmatpush1.msra.mxu0 0.0
    %2267 = vmatprep.subr.mxu0 0.0
    %2268 = vmatpush1.msra.mxu0 0.0
    %2269 = vmatprep.subr.mxu0 0.0
    %2270 = vmatpush1.msra.mxu0 0.0
    %2271 = vmatprep.subr.mxu0 0.0
    %2272 = vmatpush1.msra.mxu0 0.0
    %2273 = vmatprep.subr.mxu0 0.0
    %2274 = vmatpush1.msra.mxu0 0.0
    %2275 = vmatprep.subr.mxu0 0.0
    %2276 = vmatpush1.msra.mxu0 0.0
    %2277 = vmatprep.subr.mxu0 0.0
    %2278 = vmatpush1.msra.mxu0 0.0
    %2279 = vmatprep.subr.mxu0 0.0
    %2280 = vmatpush1.msra.mxu0 0.0
    %2281 = vmatprep.subr.mxu0 0.0
    %2282 = vmatpush1.msra.mxu0 0.0
    %2283 = vmatprep.subr.mxu0 0.0
    %2284 = vmatpush1.msra.mxu0 0.0
    %2285 = vmatprep.subr.mxu0 0.0
    %2286 = vmatpush1.msra.mxu0 0.0
    %2287 = vmatprep.subr.mxu0 0.0
    %2288 = vmatpush1.msra.mxu0 0.0
    %2289 = vmatprep.subr.mxu0 0.0
    %2290 = vmatpush1.msra.mxu0 0.0
    %2291 = vmatprep.subr.mxu0 0.0
    %2292 = vmatpush1.msra.mxu0 0.0
    %2293 = vmatprep.subr.mxu0 0.0
    %2294 = vmatpush1.msra.mxu0 0.0
    %2295 = vmatprep.subr.mxu0 0.0
    %2296 = vmatpush1.msra.mxu0 0.0
    %2297 = vmatprep.subr.mxu0 0.0
    %2298 = vmatpush1.msra.mxu0 0.0
    %2299 = vmatprep.subr.mxu0 0.0
    %2300 = vmatpush1.msra.mxu0 0.0
    %2301 = vmatprep.subr.mxu0 0.0
    %2302 = vmatpush1.msra.mxu0 0.0
    %2303 = vmatprep.subr.mxu0 0.0
    %2304 = vmatpush1.msra.mxu0 0.0
    %2305 = vmatprep.subr.mxu0 0.0
    %2306 = vmatpush1.msra.mxu0 0.0
    %2307 = vmatprep.subr.mxu0 0.0
    %2308 = vmatpush1.msra.mxu0 0.0
    %2309 = vmatprep.subr.mxu0 0.0
    %2310 = vmatpush1.msra.mxu0 0.0
    %2311 = vmatprep.subr.mxu0 0.0
    %2312 = vmatpush1.msra.mxu0 0.0
    %2313 = vmatprep.subr.mxu0 0.0
    %2314 = vmatpush1.msra.mxu0 0.0
    %2315 = vmatprep.subr.mxu0 0.0
    %2316 = vmatpush1.msra.mxu0 0.0
    %2317 = vmatprep.subr.mxu0 0.0
    %2318 = vmatpush1.msra.mxu0 0.0
    %2319 = vmatprep.subr.mxu0 0.0
    %2320 = vmatpush1.msra.mxu0 0.0
    %2321 = vmatprep.subr.mxu0 0.0
    %2322 = vmatpush1.msra.mxu0 0.0
    %2323 = vmatprep.mubr.f32.mxu0 0.0
    %2324 = vmatmul.mubr.f32.gmra.mrb[0].mxu0 %v2186
    %v2325 = vpop.f32.mrb[0].mxu0
    %v2326 = vadd.f32 0.0, %v2325
    %v2327 = vpop.f32.mrb[0].mxu0
    %v2328 = vadd.f32 0.0, %v2327
    %2329 = vdwg.mxu0
    %v2330 = vadd.f32 %v2163, %v2255
    %v2331 = vadd.f32 %v2164, %v2257
    %v2332 = vadd.f32 %v2165, %v2326
    %v2333 = vadd.f32 %v2166, %v2328
    %2334 = vrot.lane.b32.xlu0 %v1986, 15
    %v2335 = vpop.permute.xlu0 %2334
    %2336 = vrot.lane.b32.xlu0 %v1987, 15
    %v2337 = vpop.permute.xlu0 %2336
    %2338 = vrot.lane.b32.xlu0 %v1988, 15
    %v2339 = vpop.permute.xlu0 %2338
    %2340 = vrot.lane.b32.xlu0 %v1989, 15
    %v2341 = vpop.permute.xlu0 %2340
    %v2342 = vsel %vm719, %v2339, %v2341
    %v2343 = vsel %vm719, %v2337, %v2339
    %v2344 = vsel %vm719, %v2335, %v2337
    %v2345 = vsel %vm719, %v2341, %v2335
    %v2346 = vsel %vm728, %v2345, 0.0
    %v2347 = vsel %vm729, %v2344, 0.0
    %v2348 = vsel %vm730, %v2343, 0.0
    %v2349 = vsel %vm731, %v2342, 0.0
    %s2350 = scalar_lea.vmem %s3, 16
    %v2351 = vld [vmem:[%s2350] sm:$0xff]
    %v2353 = vsel %vm2017, %v2351, 0
    %2355 = vmatprep.subr.mxu0 %v2347
    %2356 = vmatpush1.msra.mxu0 %v2346
    %2357 = vmatprep.subr.mxu0 0.0
    %2358 = vmatpush1.msra.mxu0 0.0
    %2359 = vmatprep.subr.mxu0 0.0
    %2360 = vmatpush1.msra.mxu0 0.0
    %2361 = vmatprep.subr.mxu0 0.0
    %2362 = vmatpush1.msra.mxu0 0.0
    %2363 = vmatprep.subr.mxu0 0.0
    %2364 = vmatpush1.msra.mxu0 0.0
    %2365 = vmatprep.subr.mxu0 0.0
    %2366 = vmatpush1.msra.mxu0 0.0
    %2367 = vmatprep.subr.mxu0 0.0
    %2368 = vmatpush1.msra.mxu0 0.0
    %2369 = vmatprep.subr.mxu0 0.0
    %2370 = vmatpush1.msra.mxu0 0.0
    %2371 = vmatprep.subr.mxu0 0.0
    %2372 = vmatpush1.msra.mxu0 0.0
    %2373 = vmatprep.subr.mxu0 0.0
    %2374 = vmatpush1.msra.mxu0 0.0
    %2375 = vmatprep.subr.mxu0 0.0
    %2376 = vmatpush1.msra.mxu0 0.0
    %2377 = vmatprep.subr.mxu0 0.0
    %2378 = vmatpush1.msra.mxu0 0.0
    %2379 = vmatprep.subr.mxu0 0.0
    %2380 = vmatpush1.msra.mxu0 0.0
    %2381 = vmatprep.subr.mxu0 0.0
    %2382 = vmatpush1.msra.mxu0 0.0
    %2383 = vmatprep.subr.mxu0 0.0
    %2384 = vmatpush1.msra.mxu0 0.0
    %2385 = vmatprep.subr.mxu0 0.0
    %2386 = vmatpush1.msra.mxu0 0.0
    %2387 = vmatprep.subr.mxu0 0.0
    %2388 = vmatpush1.msra.mxu0 0.0
    %2389 = vmatprep.subr.mxu0 0.0
    %2390 = vmatpush1.msra.mxu0 0.0
    %2391 = vmatprep.subr.mxu0 0.0
    %2392 = vmatpush1.msra.mxu0 0.0
    %2393 = vmatprep.subr.mxu0 0.0
    %2394 = vmatpush1.msra.mxu0 0.0
    %2395 = vmatprep.subr.mxu0 0.0
    %2396 = vmatpush1.msra.mxu0 0.0
    %2397 = vmatprep.subr.mxu0 0.0
    %2398 = vmatpush1.msra.mxu0 0.0
    %2399 = vmatprep.subr.mxu0 0.0
    %2400 = vmatpush1.msra.mxu0 0.0
    %2401 = vmatprep.subr.mxu0 0.0
    %2402 = vmatpush1.msra.mxu0 0.0
    %2403 = vmatprep.subr.mxu0 0.0
    %2404 = vmatpush1.msra.mxu0 0.0
    %2405 = vmatprep.subr.mxu0 0.0
    %2406 = vmatpush1.msra.mxu0 0.0
    %2407 = vmatprep.subr.mxu0 0.0
    %2408 = vmatpush1.msra.mxu0 0.0
    %2409 = vmatprep.subr.mxu0 0.0
    %2410 = vmatpush1.msra.mxu0 0.0
    %2411 = vmatprep.subr.mxu0 0.0
    %2412 = vmatpush1.msra.mxu0 0.0
    %2413 = vmatprep.subr.mxu0 0.0
    %2414 = vmatpush1.msra.mxu0 0.0
    %2415 = vmatprep.subr.mxu0 0.0
    %2416 = vmatpush1.msra.mxu0 0.0
    %2417 = vmatprep.subr.mxu0 0.0
    %2418 = vmatpush1.msra.mxu0 0.0
    %2419 = vmatprep.mubr.f32.mxu0 0.0
    %2420 = vmatmul.mubr.f32.gmra.mrb[0].mxu0 %v2353
    %v2421 = vpop.f32.mrb[0].mxu0
    %v2422 = vadd.f32 0.0, %v2421
    %v2423 = vpop.f32.mrb[0].mxu0
    %v2424 = vadd.f32 0.0, %v2423
    %2425 = vdwg.mxu0
    %2426 = vmatprep.subr.mxu0 %v2349
    %2427 = vmatpush1.msra.mxu0 %v2348
    %2428 = vmatprep.subr.mxu0 0.0
    %2429 = vmatpush1.msra.mxu0 0.0
    %2430 = vmatprep.subr.mxu0 0.0
    %2431 = vmatpush1.msra.mxu0 0.0
    %2432 = vmatprep.subr.mxu0 0.0
    %2433 = vmatpush1.msra.mxu0 0.0
    %2434 = vmatprep.subr.mxu0 0.0
    %2435 = vmatpush1.msra.mxu0 0.0
    %2436 = vmatprep.subr.mxu0 0.0
    %2437 = vmatpush1.msra.mxu0 0.0
    %2438 = vmatprep.subr.mxu0 0.0
    %2439 = vmatpush1.msra.mxu0 0.0
    %2440 = vmatprep.subr.mxu0 0.0
    %2441 = vmatpush1.msra.mxu0 0.0
    %2442 = vmatprep.subr.mxu0 0.0
    %2443 = vmatpush1.msra.mxu0 0.0
    %2444 = vmatprep.subr.mxu0 0.0
    %2445 = vmatpush1.msra.mxu0 0.0
    %2446 = vmatprep.subr.mxu0 0.0
    %2447 = vmatpush1.msra.mxu0 0.0
    %2448 = vmatprep.subr.mxu0 0.0
    %2449 = vmatpush1.msra.mxu0 0.0
    %2450 = vmatprep.subr.mxu0 0.0
    %2451 = vmatpush1.msra.mxu0 0.0
    %2452 = vmatprep.subr.mxu0 0.0
    %2453 = vmatpush1.msra.mxu0 0.0
    %2454 = vmatprep.subr.mxu0 0.0
    %2455 = vmatpush1.msra.mxu0 0.0
    %2456 = vmatprep.subr.mxu0 0.0
    %2457 = vmatpush1.msra.mxu0 0.0
    %2458 = vmatprep.subr.mxu0 0.0
    %2459 = vmatpush1.msra.mxu0 0.0
    %2460 = vmatprep.subr.mxu0 0.0
    %2461 = vmatpush1.msra.mxu0 0.0
    %2462 = vmatprep.subr.mxu0 0.0
    %2463 = vmatpush1.msra.mxu0 0.0
    %2464 = vmatprep.subr.mxu0 0.0
    %2465 = vmatpush1.msra.mxu0 0.0
    %2466 = vmatprep.subr.mxu0 0.0
    %2467 = vmatpush1.msra.mxu0 0.0
    %2468 = vmatprep.subr.mxu0 0.0
    %2469 = vmatpush1.msra.mxu0 0.0
    %2470 = vmatprep.subr.mxu0 0.0
    %2471 = vmatpush1.msra.mxu0 0.0
    %2472 = vmatprep.subr.mxu0 0.0
    %2473 = vmatpush1.msra.mxu0 0.0
    %2474 = vmatprep.subr.mxu0 0.0
    %2475 = vmatpush1.msra.mxu0 0.0
    %2476 = vmatprep.subr.mxu0 0.0
    %2477 = vmatpush1.msra.mxu0 0.0
    %2478 = vmatprep.subr.mxu0 0.0
    %2479 = vmatpush1.msra.mxu0 0.0
    %2480 = vmatprep.subr.mxu0 0.0
    %2481 = vmatpush1.msra.mxu0 0.0
    %2482 = vmatprep.subr.mxu0 0.0
    %2483 = vmatpush1.msra.mxu0 0.0
    %2484 = vmatprep.subr.mxu0 0.0
    %2485 = vmatpush1.msra.mxu0 0.0
    %2486 = vmatprep.subr.mxu0 0.0
    %2487 = vmatpush1.msra.mxu0 0.0
    %2488 = vmatprep.subr.mxu0 0.0
    %2489 = vmatpush1.msra.mxu0 0.0
    %2490 = vmatprep.mubr.f32.mxu0 0.0
    %2491 = vmatmul.mubr.f32.gmra.mrb[0].mxu0 %v2353
    %v2492 = vpop.f32.mrb[0].mxu0
    %v2493 = vadd.f32 0.0, %v2492
    %v2494 = vpop.f32.mrb[0].mxu0
    %v2495 = vadd.f32 0.0, %v2494
    %2496 = vdwg.mxu0
    %v2497 = vadd.f32 %v2330, %v2422
    %v2498 = vadd.f32 %v2331, %v2424
    %v2499 = vadd.f32 %v2332, %v2493
    %v2500 = vadd.f32 %v2333, %v2495
    %2501 = vrot.lane.b32.xlu0 %v1986, 1
    %v2502 = vpop.permute.xlu0 %2501
    %2503 = vrot.lane.b32.xlu0 %v1987, 1
    %v2504 = vpop.permute.xlu0 %2503
    %2505 = vrot.lane.b32.xlu0 %v1988, 1
    %v2506 = vpop.permute.xlu0 %2505
    %2507 = vrot.lane.b32.xlu0 %v1989, 1
    %v2508 = vpop.permute.xlu0 %2507
    %v2509 = vsel %vm907, %v2506, %v2508
    %v2510 = vsel %vm907, %v2504, %v2506
    %v2511 = vsel %vm907, %v2502, %v2504
    %v2512 = vsel %vm907, %v2508, %v2502
    %v2513 = vsel %vm916, %v2512, 0.0
    %v2514 = vsel %vm917, %v2511, 0.0
    %v2515 = vsel %vm918, %v2510, 0.0
    %v2516 = vsel %vm919, %v2509, 0.0
    %s2517 = scalar_lea.vmem %s3, 24
    %v2518 = vld [vmem:[%s2517] sm:$0xff]
    %v2520 = vsel %vm2017, %v2518, 0
    %2522 = vmatprep.subr.mxu0 %v2514
    %2523 = vmatpush1.msra.mxu0 %v2513
    %2524 = vmatprep.subr.mxu0 0.0
    %2525 = vmatpush1.msra.mxu0 0.0
    %2526 = vmatprep.subr.mxu0 0.0
    %2527 = vmatpush1.msra.mxu0 0.0
    %2528 = vmatprep.subr.mxu0 0.0
    %2529 = vmatpush1.msra.mxu0 0.0
    %2530 = vmatprep.subr.mxu0 0.0
    %2531 = vmatpush1.msra.mxu0 0.0
    %2532 = vmatprep.subr.mxu0 0.0
    %2533 = vmatpush1.msra.mxu0 0.0
    %2534 = vmatprep.subr.mxu0 0.0
    %2535 = vmatpush1.msra.mxu0 0.0
    %2536 = vmatprep.subr.mxu0 0.0
    %2537 = vmatpush1.msra.mxu0 0.0
    %2538 = vmatprep.subr.mxu0 0.0
    %2539 = vmatpush1.msra.mxu0 0.0
    %2540 = vmatprep.subr.mxu0 0.0
    %2541 = vmatpush1.msra.mxu0 0.0
    %2542 = vmatprep.subr.mxu0 0.0
    %2543 = vmatpush1.msra.mxu0 0.0
    %2544 = vmatprep.subr.mxu0 0.0
    %2545 = vmatpush1.msra.mxu0 0.0
    %2546 = vmatprep.subr.mxu0 0.0
    %2547 = vmatpush1.msra.mxu0 0.0
    %2548 = vmatprep.subr.mxu0 0.0
    %2549 = vmatpush1.msra.mxu0 0.0
    %2550 = vmatprep.subr.mxu0 0.0
    %2551 = vmatpush1.msra.mxu0 0.0
    %2552 = vmatprep.subr.mxu0 0.0
    %2553 = vmatpush1.msra.mxu0 0.0
    %2554 = vmatprep.subr.mxu0 0.0
    %2555 = vmatpush1.msra.mxu0 0.0
    %2556 = vmatprep.subr.mxu0 0.0
    %2557 = vmatpush1.msra.mxu0 0.0
    %2558 = vmatprep.subr.mxu0 0.0
    %2559 = vmatpush1.msra.mxu0 0.0
    %2560 = vmatprep.subr.mxu0 0.0
    %2561 = vmatpush1.msra.mxu0 0.0
    %2562 = vmatprep.subr.mxu0 0.0
    %2563 = vmatpush1.msra.mxu0 0.0
    %2564 = vmatprep.subr.mxu0 0.0
    %2565 = vmatpush1.msra.mxu0 0.0
    %2566 = vmatprep.subr.mxu0 0.0
    %2567 = vmatpush1.msra.mxu0 0.0
    %2568 = vmatprep.subr.mxu0 0.0
    %2569 = vmatpush1.msra.mxu0 0.0
    %2570 = vmatprep.subr.mxu0 0.0
    %2571 = vmatpush1.msra.mxu0 0.0
    %2572 = vmatprep.subr.mxu0 0.0
    %2573 = vmatpush1.msra.mxu0 0.0
    %2574 = vmatprep.subr.mxu0 0.0
    %2575 = vmatpush1.msra.mxu0 0.0
    %2576 = vmatprep.subr.mxu0 0.0
    %2577 = vmatpush1.msra.mxu0 0.0
    %2578 = vmatprep.subr.mxu0 0.0
    %2579 = vmatpush1.msra.mxu0 0.0
    %2580 = vmatprep.subr.mxu0 0.0
    %2581 = vmatpush1.msra.mxu0 0.0
    %2582 = vmatprep.subr.mxu0 0.0
    %2583 = vmatpush1.msra.mxu0 0.0
    %2584 = vmatprep.subr.mxu0 0.0
    %2585 = vmatpush1.msra.mxu0 0.0
    %2586 = vmatprep.mubr.f32.mxu0 0.0
    %2587 = vmatmul.mubr.f32.gmra.mrb[0].mxu0 %v2520
    %v2588 = vpop.f32.mrb[0].mxu0
    %v2589 = vadd.f32 0.0, %v2588
    %v2590 = vpop.f32.mrb[0].mxu0
    %v2591 = vadd.f32 0.0, %v2590
    %2592 = vdwg.mxu0
    %2593 = vmatprep.subr.mxu0 %v2516
    %2594 = vmatpush1.msra.mxu0 %v2515
    %2595 = vmatprep.subr.mxu0 0.0
    %2596 = vmatpush1.msra.mxu0 0.0
    %2597 = vmatprep.subr.mxu0 0.0
    %2598 = vmatpush1.msra.mxu0 0.0
    %2599 = vmatprep.subr.mxu0 0.0
    %2600 = vmatpush1.msra.mxu0 0.0
    %2601 = vmatprep.subr.mxu0 0.0
    %2602 = vmatpush1.msra.mxu0 0.0
    %2603 = vmatprep.subr.mxu0 0.0
    %2604 = vmatpush1.msra.mxu0 0.0
    %2605 = vmatprep.subr.mxu0 0.0
    %2606 = vmatpush1.msra.mxu0 0.0
    %2607 = vmatprep.subr.mxu0 0.0
    %2608 = vmatpush1.msra.mxu0 0.0
    %2609 = vmatprep.subr.mxu0 0.0
    %2610 = vmatpush1.msra.mxu0 0.0
    %2611 = vmatprep.subr.mxu0 0.0
    %2612 = vmatpush1.msra.mxu0 0.0
    %2613 = vmatprep.subr.mxu0 0.0
    %2614 = vmatpush1.msra.mxu0 0.0
    %2615 = vmatprep.subr.mxu0 0.0
    %2616 = vmatpush1.msra.mxu0 0.0
    %2617 = vmatprep.subr.mxu0 0.0
    %2618 = vmatpush1.msra.mxu0 0.0
    %2619 = vmatprep.subr.mxu0 0.0
    %2620 = vmatpush1.msra.mxu0 0.0
    %2621 = vmatprep.subr.mxu0 0.0
    %2622 = vmatpush1.msra.mxu0 0.0
    %2623 = vmatprep.subr.mxu0 0.0
    %2624 = vmatpush1.msra.mxu0 0.0
    %2625 = vmatprep.subr.mxu0 0.0
    %2626 = vmatpush1.msra.mxu0 0.0
    %2627 = vmatprep.subr.mxu0 0.0
    %2628 = vmatpush1.msra.mxu0 0.0
    %2629 = vmatprep.subr.mxu0 0.0
    %2630 = vmatpush1.msra.mxu0 0.0
    %2631 = vmatprep.subr.mxu0 0.0
    %2632 = vmatpush1.msra.mxu0 0.0
    %2633 = vmatprep.subr.mxu0 0.0
    %2634 = vmatpush1.msra.mxu0 0.0
    %2635 = vmatprep.subr.mxu0 0.0
    %2636 = vmatpush1.msra.mxu0 0.0
    %2637 = vmatprep.subr.mxu0 0.0
    %2638 = vmatpush1.msra.mxu0 0.0
    %2639 = vmatprep.subr.mxu0 0.0
    %2640 = vmatpush1.msra.mxu0 0.0
    %2641 = vmatprep.subr.mxu0 0.0
    %2642 = vmatpush1.msra.mxu0 0.0
    %2643 = vmatprep.subr.mxu0 0.0
    %2644 = vmatpush1.msra.mxu0 0.0
    %2645 = vmatprep.subr.mxu0 0.0
    %2646 = vmatpush1.msra.mxu0 0.0
    %2647 = vmatprep.subr.mxu0 0.0
    %2648 = vmatpush1.msra.mxu0 0.0
    %2649 = vmatprep.subr.mxu0 0.0
    %2650 = vmatpush1.msra.mxu0 0.0
    %2651 = vmatprep.subr.mxu0 0.0
    %2652 = vmatpush1.msra.mxu0 0.0
    %2653 = vmatprep.subr.mxu0 0.0
    %2654 = vmatpush1.msra.mxu0 0.0
    %2655 = vmatprep.subr.mxu0 0.0
    %2656 = vmatpush1.msra.mxu0 0.0
    %2657 = vmatprep.mubr.f32.mxu0 0.0
    %2658 = vmatmul.mubr.f32.gmra.mrb[0].mxu0 %v2520
    %v2659 = vpop.f32.mrb[0].mxu0
    %v2660 = vadd.f32 0.0, %v2659
    %v2661 = vpop.f32.mrb[0].mxu0
    %v2662 = vadd.f32 0.0, %v2661
    %2663 = vdwg.mxu0
    %v2664 = vadd.f32 %v2497, %v2589
    %v2665 = vadd.f32 %v2498, %v2591
    %v2666 = vadd.f32 %v2499, %v2660
    %v2667 = vadd.f32 %v2500, %v2662
    %s2668 = scalar_lea.vmem %s3, 32
    %v2669 = vld [vmem:[%s2668] sm:$0xff]
    %v2671 = vsel %vm2017, %v2669, 0
    %2673 = vmatprep.subr.mxu0 %v1987
    %2674 = vmatpush1.msra.mxu0 %v1986
    %2675 = vmatprep.subr.mxu0 0.0
    %2676 = vmatpush1.msra.mxu0 0.0
    %2677 = vmatprep.subr.mxu0 0.0
    %2678 = vmatpush1.msra.mxu0 0.0
    %2679 = vmatprep.subr.mxu0 0.0
    %2680 = vmatpush1.msra.mxu0 0.0
    %2681 = vmatprep.subr.mxu0 0.0
    %2682 = vmatpush1.msra.mxu0 0.0
    %2683 = vmatprep.subr.mxu0 0.0
    %2684 = vmatpush1.msra.mxu0 0.0
    %2685 = vmatprep.subr.mxu0 0.0
    %2686 = vmatpush1.msra.mxu0 0.0
    %2687 = vmatprep.subr.mxu0 0.0
    %2688 = vmatpush1.msra.mxu0 0.0
    %2689 = vmatprep.subr.mxu0 0.0
    %2690 = vmatpush1.msra.mxu0 0.0
    %2691 = vmatprep.subr.mxu0 0.0
    %2692 = vmatpush1.msra.mxu0 0.0
    %2693 = vmatprep.subr.mxu0 0.0
    %2694 = vmatpush1.msra.mxu0 0.0
    %2695 = vmatprep.subr.mxu0 0.0
    %2696 = vmatpush1.msra.mxu0 0.0
    %2697 = vmatprep.subr.mxu0 0.0
    %2698 = vmatpush1.msra.mxu0 0.0
    %2699 = vmatprep.subr.mxu0 0.0
    %2700 = vmatpush1.msra.mxu0 0.0
    %2701 = vmatprep.subr.mxu0 0.0
    %2702 = vmatpush1.msra.mxu0 0.0
    %2703 = vmatprep.subr.mxu0 0.0
    %2704 = vmatpush1.msra.mxu0 0.0
    %2705 = vmatprep.subr.mxu0 0.0
    %2706 = vmatpush1.msra.mxu0 0.0
    %2707 = vmatprep.subr.mxu0 0.0
    %2708 = vmatpush1.msra.mxu0 0.0
    %2709 = vmatprep.subr.mxu0 0.0
    %2710 = vmatpush1.msra.mxu0 0.0
    %2711 = vmatprep.subr.mxu0 0.0
    %2712 = vmatpush1.msra.mxu0 0.0
    %2713 = vmatprep.subr.mxu0 0.0
    %2714 = vmatpush1.msra.mxu0 0.0
    %2715 = vmatprep.subr.mxu0 0.0
    %2716 = vmatpush1.msra.mxu0 0.0
    %2717 = vmatprep.subr.mxu0 0.0
    %2718 = vmatpush1.msra.mxu0 0.0
    %2719 = vmatprep.subr.mxu0 0.0
    %2720 = vmatpush1.msra.mxu0 0.0
    %2721 = vmatprep.subr.mxu0 0.0
    %2722 = vmatpush1.msra.mxu0 0.0
    %2723 = vmatprep.subr.mxu0 0.0
    %2724 = vmatpush1.msra.mxu0 0.0
    %2725 = vmatprep.subr.mxu0 0.0
    %2726 = vmatpush1.msra.mxu0 0.0
    %2727 = vmatprep.subr.mxu0 0.0
    %2728 = vmatpush1.msra.mxu0 0.0
    %2729 = vmatprep.subr.mxu0 0.0
    %2730 = vmatpush1.msra.mxu0 0.0
    %2731 = vmatprep.subr.mxu0 0.0
    %2732 = vmatpush1.msra.mxu0 0.0
    %2733 = vmatprep.subr.mxu0 0.0
    %2734 = vmatpush1.msra.mxu0 0.0
    %2735 = vmatprep.subr.mxu0 0.0
    %2736 = vmatpush1.msra.mxu0 0.0
    %2737 = vmatprep.mubr.f32.mxu0 0.0
    %2738 = vmatmul.mubr.f32.gmra.mrb[0].mxu0 %v2671
    %v2739 = vpop.f32.mrb[0].mxu0
    %v2740 = vadd.f32 0.0, %v2739
    %v2741 = vpop.f32.mrb[0].mxu0
    %v2742 = vadd.f32 0.0, %v2741
    %2743 = vdwg.mxu0
    %2744 = vmatprep.subr.mxu0 %v1989
    %2745 = vmatpush1.msra.mxu0 %v1988
    %2746 = vmatprep.subr.mxu0 0.0
    %2747 = vmatpush1.msra.mxu0 0.0
    %2748 = vmatprep.subr.mxu0 0.0
    %2749 = vmatpush1.msra.mxu0 0.0
    %2750 = vmatprep.subr.mxu0 0.0
    %2751 = vmatpush1.msra.mxu0 0.0
    %2752 = vmatprep.subr.mxu0 0.0
    %2753 = vmatpush1.msra.mxu0 0.0
    %2754 = vmatprep.subr.mxu0 0.0
    %2755 = vmatpush1.msra.mxu0 0.0
    %2756 = vmatprep.subr.mxu0 0.0
    %2757 = vmatpush1.msra.mxu0 0.0
    %2758 = vmatprep.subr.mxu0 0.0
    %2759 = vmatpush1.msra.mxu0 0.0
    %2760 = vmatprep.subr.mxu0 0.0
    %2761 = vmatpush1.msra.mxu0 0.0
    %2762 = vmatprep.subr.mxu0 0.0
    %2763 = vmatpush1.msra.mxu0 0.0
    %2764 = vmatprep.subr.mxu0 0.0
    %2765 = vmatpush1.msra.mxu0 0.0
    %2766 = vmatprep.subr.mxu0 0.0
    %2767 = vmatpush1.msra.mxu0 0.0
    %2768 = vmatprep.subr.mxu0 0.0
    %2769 = vmatpush1.msra.mxu0 0.0
    %2770 = vmatprep.subr.mxu0 0.0
    %2771 = vmatpush1.msra.mxu0 0.0
    %2772 = vmatprep.subr.mxu0 0.0
    %2773 = vmatpush1.msra.mxu0 0.0
    %2774 = vmatprep.subr.mxu0 0.0
    %2775 = vmatpush1.msra.mxu0 0.0
    %2776 = vmatprep.subr.mxu0 0.0
    %2777 = vmatpush1.msra.mxu0 0.0
    %2778 = vmatprep.subr.mxu0 0.0
    %2779 = vmatpush1.msra.mxu0 0.0
    %2780 = vmatprep.subr.mxu0 0.0
    %2781 = vmatpush1.msra.mxu0 0.0
    %2782 = vmatprep.subr.mxu0 0.0
    %2783 = vmatpush1.msra.mxu0 0.0
    %2784 = vmatprep.subr.mxu0 0.0
    %2785 = vmatpush1.msra.mxu0 0.0
    %2786 = vmatprep.subr.mxu0 0.0
    %2787 = vmatpush1.msra.mxu0 0.0
    %2788 = vmatprep.subr.mxu0 0.0
    %2789 = vmatpush1.msra.mxu0 0.0
    %2790 = vmatprep.subr.mxu0 0.0
    %2791 = vmatpush1.msra.mxu0 0.0
    %2792 = vmatprep.subr.mxu0 0.0
    %2793 = vmatpush1.msra.mxu0 0.0
    %2794 = vmatprep.subr.mxu0 0.0
    %2795 = vmatpush1.msra.mxu0 0.0
    %2796 = vmatprep.subr.mxu0 0.0
    %2797 = vmatpush1.msra.mxu0 0.0
    %2798 = vmatprep.subr.mxu0 0.0
    %2799 = vmatpush1.msra.mxu0 0.0
    %2800 = vmatprep.subr.mxu0 0.0
    %2801 = vmatpush1.msra.mxu0 0.0
    %2802 = vmatprep.subr.mxu0 0.0
    %2803 = vmatpush1.msra.mxu0 0.0
    %2804 = vmatprep.subr.mxu0 0.0
    %2805 = vmatpush1.msra.mxu0 0.0
    %2806 = vmatprep.subr.mxu0 0.0
    %2807 = vmatpush1.msra.mxu0 0.0
    %2808 = vmatprep.mubr.f32.mxu0 0.0
    %2809 = vmatmul.mubr.f32.gmra.mrb[0].mxu0 %v2671
    %v2810 = vpop.f32.mrb[0].mxu0
    %v2811 = vadd.f32 0.0, %v2810
    %v2812 = vpop.f32.mrb[0].mxu0
    %v2813 = vadd.f32 0.0, %v2812
    %2814 = vdwg.mxu0
    %v2815 = vadd.f32 %v2664, %v2740
    %v2816 = vadd.f32 %v2665, %v2742
    %v2817 = vadd.f32 %v2666, %v2811
    %v2818 = vadd.f32 %v2667, %v2813
    %2819 = vrot.lane.b32.xlu0 %v1986, 127
    %v2820 = vpop.permute.xlu0 %2819
    %2821 = vrot.lane.b32.xlu0 %v1987, 127
    %v2822 = vpop.permute.xlu0 %2821
    %2823 = vrot.lane.b32.xlu0 %v1988, 127
    %v2824 = vpop.permute.xlu0 %2823
    %2825 = vrot.lane.b32.xlu0 %v1989, 127
    %v2826 = vpop.permute.xlu0 %2825
    %v2827 = vsel %vm1246, %v2824, %v2826
    %v2828 = vsel %vm1246, %v2822, %v2824
    %v2829 = vsel %vm1246, %v2820, %v2822
    %v2830 = vsel %vm1246, %v2826, %v2820
    %v2831 = vsel %vm1255, %v2829, 0.0
    %v2832 = vsel %vm1256, %v2828, 0.0
    %v2833 = vsel %vm1257, %v2827, 0.0
    %v2834 = vsel %vm1258, %v2830, 0.0
    %s2835 = scalar_lea.vmem %s3, 40
    %v2836 = vld [vmem:[%s2835] sm:$0xff]
    %v2838 = vsel %vm2017, %v2836, 0
    %2840 = vmatprep.subr.mxu0 %v2832
    %2841 = vmatpush1.msra.mxu0 %v2831
    %2842 = vmatprep.subr.mxu0 0.0
    %2843 = vmatpush1.msra.mxu0 0.0
    %2844 = vmatprep.subr.mxu0 0.0
    %2845 = vmatpush1.msra.mxu0 0.0
    %2846 = vmatprep.subr.mxu0 0.0
    %2847 = vmatpush1.msra.mxu0 0.0
    %2848 = vmatprep.subr.mxu0 0.0
    %2849 = vmatpush1.msra.mxu0 0.0
    %2850 = vmatprep.subr.mxu0 0.0
    %2851 = vmatpush1.msra.mxu0 0.0
    %2852 = vmatprep.subr.mxu0 0.0
    %2853 = vmatpush1.msra.mxu0 0.0
    %2854 = vmatprep.subr.mxu0 0.0
    %2855 = vmatpush1.msra.mxu0 0.0
    %2856 = vmatprep.subr.mxu0 0.0
    %2857 = vmatpush1.msra.mxu0 0.0
    %2858 = vmatprep.subr.mxu0 0.0
    %2859 = vmatpush1.msra.mxu0 0.0
    %2860 = vmatprep.subr.mxu0 0.0
    %2861 = vmatpush1.msra.mxu0 0.0
    %2862 = vmatprep.subr.mxu0 0.0
    %2863 = vmatpush1.msra.mxu0 0.0
    %2864 = vmatprep.subr.mxu0 0.0
    %2865 = vmatpush1.msra.mxu0 0.0
    %2866 = vmatprep.subr.mxu0 0.0
    %2867 = vmatpush1.msra.mxu0 0.0
    %2868 = vmatprep.subr.mxu0 0.0
    %2869 = vmatpush1.msra.mxu0 0.0
    %2870 = vmatprep.subr.mxu0 0.0
    %2871 = vmatpush1.msra.mxu0 0.0
    %2872 = vmatprep.subr.mxu0 0.0
    %2873 = vmatpush1.msra.mxu0 0.0
    %2874 = vmatprep.subr.mxu0 0.0
    %2875 = vmatpush1.msra.mxu0 0.0
    %2876 = vmatprep.subr.mxu0 0.0
    %2877 = vmatpush1.msra.mxu0 0.0
    %2878 = vmatprep.subr.mxu0 0.0
    %2879 = vmatpush1.msra.mxu0 0.0
    %2880 = vmatprep.subr.mxu0 0.0
    %2881 = vmatpush1.msra.mxu0 0.0
    %2882 = vmatprep.subr.mxu0 0.0
    %2883 = vmatpush1.msra.mxu0 0.0
    %2884 = vmatprep.subr.mxu0 0.0
    %2885 = vmatpush1.msra.mxu0 0.0
    %2886 = vmatprep.subr.mxu0 0.0
    %2887 = vmatpush1.msra.mxu0 0.0
    %2888 = vmatprep.subr.mxu0 0.0
    %2889 = vmatpush1.msra.mxu0 0.0
    %2890 = vmatprep.subr.mxu0 0.0
    %2891 = vmatpush1.msra.mxu0 0.0
    %2892 = vmatprep.subr.mxu0 0.0
    %2893 = vmatpush1.msra.mxu0 0.0
    %2894 = vmatprep.subr.mxu0 0.0
    %2895 = vmatpush1.msra.mxu0 0.0
    %2896 = vmatprep.subr.mxu0 0.0
    %2897 = vmatpush1.msra.mxu0 0.0
    %2898 = vmatprep.subr.mxu0 0.0
    %2899 = vmatpush1.msra.mxu0 0.0
    %2900 = vmatprep.subr.mxu0 0.0
    %2901 = vmatpush1.msra.mxu0 0.0
    %2902 = vmatprep.subr.mxu0 0.0
    %2903 = vmatpush1.msra.mxu0 0.0
    %2904 = vmatprep.mubr.f32.mxu0 0.0
    %2905 = vmatmul.mubr.f32.gmra.mrb[0].mxu0 %v2838
    %v2906 = vpop.f32.mrb[0].mxu0
    %v2907 = vadd.f32 0.0, %v2906
    %v2908 = vpop.f32.mrb[0].mxu0
    %v2909 = vadd.f32 0.0, %v2908
    %2910 = vdwg.mxu0
    %2911 = vmatprep.subr.mxu0 %v2834
    %2912 = vmatpush1.msra.mxu0 %v2833
    %2913 = vmatprep.subr.mxu0 0.0
    %2914 = vmatpush1.msra.mxu0 0.0
    %2915 = vmatprep.subr.mxu0 0.0
    %2916 = vmatpush1.msra.mxu0 0.0
    %2917 = vmatprep.subr.mxu0 0.0
    %2918 = vmatpush1.msra.mxu0 0.0
    %2919 = vmatprep.subr.mxu0 0.0
    %2920 = vmatpush1.msra.mxu0 0.0
    %2921 = vmatprep.subr.mxu0 0.0
    %2922 = vmatpush1.msra.mxu0 0.0
    %2923 = vmatprep.subr.mxu0 0.0
    %2924 = vmatpush1.msra.mxu0 0.0
    %2925 = vmatprep.subr.mxu0 0.0
    %2926 = vmatpush1.msra.mxu0 0.0
    %2927 = vmatprep.subr.mxu0 0.0
    %2928 = vmatpush1.msra.mxu0 0.0
    %2929 = vmatprep.subr.mxu0 0.0
    %2930 = vmatpush1.msra.mxu0 0.0
    %2931 = vmatprep.subr.mxu0 0.0
    %2932 = vmatpush1.msra.mxu0 0.0
    %2933 = vmatprep.subr.mxu0 0.0
    %2934 = vmatpush1.msra.mxu0 0.0
    %2935 = vmatprep.subr.mxu0 0.0
    %2936 = vmatpush1.msra.mxu0 0.0
    %2937 = vmatprep.subr.mxu0 0.0
    %2938 = vmatpush1.msra.mxu0 0.0
    %2939 = vmatprep.subr.mxu0 0.0
    %2940 = vmatpush1.msra.mxu0 0.0
    %2941 = vmatprep.subr.mxu0 0.0
    %2942 = vmatpush1.msra.mxu0 0.0
    %2943 = vmatprep.subr.mxu0 0.0
    %2944 = vmatpush1.msra.mxu0 0.0
    %2945 = vmatprep.subr.mxu0 0.0
    %2946 = vmatpush1.msra.mxu0 0.0
    %2947 = vmatprep.subr.mxu0 0.0
    %2948 = vmatpush1.msra.mxu0 0.0
    %2949 = vmatprep.subr.mxu0 0.0
    %2950 = vmatpush1.msra.mxu0 0.0
    %2951 = vmatprep.subr.mxu0 0.0
    %2952 = vmatpush1.msra.mxu0 0.0
    %2953 = vmatprep.subr.mxu0 0.0
    %2954 = vmatpush1.msra.mxu0 0.0
    %2955 = vmatprep.subr.mxu0 0.0
    %2956 = vmatpush1.msra.mxu0 0.0
    %2957 = vmatprep.subr.mxu0 0.0
    %2958 = vmatpush1.msra.mxu0 0.0
    %2959 = vmatprep.subr.mxu0 0.0
    %2960 = vmatpush1.msra.mxu0 0.0
    %2961 = vmatprep.subr.mxu0 0.0
    %2962 = vmatpush1.msra.mxu0 0.0
    %2963 = vmatprep.subr.mxu0 0.0
    %2964 = vmatpush1.msra.mxu0 0.0
    %2965 = vmatprep.subr.mxu0 0.0
    %2966 = vmatpush1.msra.mxu0 0.0
    %2967 = vmatprep.subr.mxu0 0.0
    %2968 = vmatpush1.msra.mxu0 0.0
    %2969 = vmatprep.subr.mxu0 0.0
    %2970 = vmatpush1.msra.mxu0 0.0
    %2971 = vmatprep.subr.mxu0 0.0
    %2972 = vmatpush1.msra.mxu0 0.0
    %2973 = vmatprep.subr.mxu0 0.0
    %2974 = vmatpush1.msra.mxu0 0.0
    %2975 = vmatprep.mubr.f32.mxu0 0.0
    %2976 = vmatmul.mubr.f32.gmra.mrb[0].mxu0 %v2838
    %v2977 = vpop.f32.mrb[0].mxu0
    %v2978 = vadd.f32 0.0, %v2977
    %v2979 = vpop.f32.mrb[0].mxu0
    %v2980 = vadd.f32 0.0, %v2979
    %2981 = vdwg.mxu0
    %v2982 = vadd.f32 %v2815, %v2907
    %v2983 = vadd.f32 %v2816, %v2909
    %v2984 = vadd.f32 %v2817, %v2978
    %v2985 = vadd.f32 %v2818, %v2980
    %2986 = vrot.lane.b32.xlu0 %v1986, 113
    %v2987 = vpop.permute.xlu0 %2986
    %2988 = vrot.lane.b32.xlu0 %v1987, 113
    %v2989 = vpop.permute.xlu0 %2988
    %2990 = vrot.lane.b32.xlu0 %v1988, 113
    %v2991 = vpop.permute.xlu0 %2990
    %2992 = vrot.lane.b32.xlu0 %v1989, 113
    %v2993 = vpop.permute.xlu0 %2992
    %v2994 = vsel %vm1434, %v2991, %v2993
    %v2995 = vsel %vm1434, %v2989, %v2991
    %v2996 = vsel %vm1434, %v2987, %v2989
    %v2997 = vsel %vm1434, %v2993, %v2987
    %v2998 = vsel %vm1443, %v2996, 0.0
    %v2999 = vsel %vm1444, %v2995, 0.0
    %v3000 = vsel %vm1445, %v2994, 0.0
    %v3001 = vsel %vm1446, %v2997, 0.0
    %s3002 = scalar_lea.vmem %s3, 48
    %v3003 = vld [vmem:[%s3002] sm:$0xff]
    %v3005 = vsel %vm2017, %v3003, 0
    %3007 = vmatprep.subr.mxu0 %v2999
    %3008 = vmatpush1.msra.mxu0 %v2998
    %3009 = vmatprep.subr.mxu0 0.0
    %3010 = vmatpush1.msra.mxu0 0.0
    %3011 = vmatprep.subr.mxu0 0.0
    %3012 = vmatpush1.msra.mxu0 0.0
    %3013 = vmatprep.subr.mxu0 0.0
    %3014 = vmatpush1.msra.mxu0 0.0
    %3015 = vmatprep.subr.mxu0 0.0
    %3016 = vmatpush1.msra.mxu0 0.0
    %3017 = vmatprep.subr.mxu0 0.0
    %3018 = vmatpush1.msra.mxu0 0.0
    %3019 = vmatprep.subr.mxu0 0.0
    %3020 = vmatpush1.msra.mxu0 0.0
    %3021 = vmatprep.subr.mxu0 0.0
    %3022 = vmatpush1.msra.mxu0 0.0
    %3023 = vmatprep.subr.mxu0 0.0
    %3024 = vmatpush1.msra.mxu0 0.0
    %3025 = vmatprep.subr.mxu0 0.0
    %3026 = vmatpush1.msra.mxu0 0.0
    %3027 = vmatprep.subr.mxu0 0.0
    %3028 = vmatpush1.msra.mxu0 0.0
    %3029 = vmatprep.subr.mxu0 0.0
    %3030 = vmatpush1.msra.mxu0 0.0
    %3031 = vmatprep.subr.mxu0 0.0
    %3032 = vmatpush1.msra.mxu0 0.0
    %3033 = vmatprep.subr.mxu0 0.0
    %3034 = vmatpush1.msra.mxu0 0.0
    %3035 = vmatprep.subr.mxu0 0.0
    %3036 = vmatpush1.msra.mxu0 0.0
    %3037 = vmatprep.subr.mxu0 0.0
    %3038 = vmatpush1.msra.mxu0 0.0
    %3039 = vmatprep.subr.mxu0 0.0
    %3040 = vmatpush1.msra.mxu0 0.0
    %3041 = vmatprep.subr.mxu0 0.0
    %3042 = vmatpush1.msra.mxu0 0.0
    %3043 = vmatprep.subr.mxu0 0.0
    %3044 = vmatpush1.msra.mxu0 0.0
    %3045 = vmatprep.subr.mxu0 0.0
    %3046 = vmatpush1.msra.mxu0 0.0
    %3047 = vmatprep.subr.mxu0 0.0
    %3048 = vmatpush1.msra.mxu0 0.0
    %3049 = vmatprep.subr.mxu0 0.0
    %3050 = vmatpush1.msra.mxu0 0.0
    %3051 = vmatprep.subr.mxu0 0.0
    %3052 = vmatpush1.msra.mxu0 0.0
    %3053 = vmatprep.subr.mxu0 0.0
    %3054 = vmatpush1.msra.mxu0 0.0
    %3055 = vmatprep.subr.mxu0 0.0
    %3056 = vmatpush1.msra.mxu0 0.0
    %3057 = vmatprep.subr.mxu0 0.0
    %3058 = vmatpush1.msra.mxu0 0.0
    %3059 = vmatprep.subr.mxu0 0.0
    %3060 = vmatpush1.msra.mxu0 0.0
    %3061 = vmatprep.subr.mxu0 0.0
    %3062 = vmatpush1.msra.mxu0 0.0
    %3063 = vmatprep.subr.mxu0 0.0
    %3064 = vmatpush1.msra.mxu0 0.0
    %3065 = vmatprep.subr.mxu0 0.0
    %3066 = vmatpush1.msra.mxu0 0.0
    %3067 = vmatprep.subr.mxu0 0.0
    %3068 = vmatpush1.msra.mxu0 0.0
    %3069 = vmatprep.subr.mxu0 0.0
    %3070 = vmatpush1.msra.mxu0 0.0
    %3071 = vmatprep.mubr.f32.mxu0 0.0
    %3072 = vmatmul.mubr.f32.gmra.mrb[0].mxu0 %v3005
    %v3073 = vpop.f32.mrb[0].mxu0
    %v3074 = vadd.f32 0.0, %v3073
    %v3075 = vpop.f32.mrb[0].mxu0
    %v3076 = vadd.f32 0.0, %v3075
    %3077 = vdwg.mxu0
    %3078 = vmatprep.subr.mxu0 %v3001
    %3079 = vmatpush1.msra.mxu0 %v3000
    %3080 = vmatprep.subr.mxu0 0.0
    %3081 = vmatpush1.msra.mxu0 0.0
    %3082 = vmatprep.subr.mxu0 0.0
    %3083 = vmatpush1.msra.mxu0 0.0
    %3084 = vmatprep.subr.mxu0 0.0
    %3085 = vmatpush1.msra.mxu0 0.0
    %3086 = vmatprep.subr.mxu0 0.0
    %3087 = vmatpush1.msra.mxu0 0.0
    %3088 = vmatprep.subr.mxu0 0.0
    %3089 = vmatpush1.msra.mxu0 0.0
    %3090 = vmatprep.subr.mxu0 0.0
    %3091 = vmatpush1.msra.mxu0 0.0
    %3092 = vmatprep.subr.mxu0 0.0
    %3093 = vmatpush1.msra.mxu0 0.0
    %3094 = vmatprep.subr.mxu0 0.0
    %3095 = vmatpush1.msra.mxu0 0.0
    %3096 = vmatprep.subr.mxu0 0.0
    %3097 = vmatpush1.msra.mxu0 0.0
    %3098 = vmatprep.subr.mxu0 0.0
    %3099 = vmatpush1.msra.mxu0 0.0
    %3100 = vmatprep.subr.mxu0 0.0
    %3101 = vmatpush1.msra.mxu0 0.0
    %3102 = vmatprep.subr.mxu0 0.0
    %3103 = vmatpush1.msra.mxu0 0.0
    %3104 = vmatprep.subr.mxu0 0.0
    %3105 = vmatpush1.msra.mxu0 0.0
    %3106 = vmatprep.subr.mxu0 0.0
    %3107 = vmatpush1.msra.mxu0 0.0
    %3108 = vmatprep.subr.mxu0 0.0
    %3109 = vmatpush1.msra.mxu0 0.0
    %3110 = vmatprep.subr.mxu0 0.0
    %3111 = vmatpush1.msra.mxu0 0.0
    %3112 = vmatprep.subr.mxu0 0.0
    %3113 = vmatpush1.msra.mxu0 0.0
    %3114 = vmatprep.subr.mxu0 0.0
    %3115 = vmatpush1.msra.mxu0 0.0
    %3116 = vmatprep.subr.mxu0 0.0
    %3117 = vmatpush1.msra.mxu0 0.0
    %3118 = vmatprep.subr.mxu0 0.0
    %3119 = vmatpush1.msra.mxu0 0.0
    %3120 = vmatprep.subr.mxu0 0.0
    %3121 = vmatpush1.msra.mxu0 0.0
    %3122 = vmatprep.subr.mxu0 0.0
    %3123 = vmatpush1.msra.mxu0 0.0
    %3124 = vmatprep.subr.mxu0 0.0
    %3125 = vmatpush1.msra.mxu0 0.0
    %3126 = vmatprep.subr.mxu0 0.0
    %3127 = vmatpush1.msra.mxu0 0.0
    %3128 = vmatprep.subr.mxu0 0.0
    %3129 = vmatpush1.msra.mxu0 0.0
    %3130 = vmatprep.subr.mxu0 0.0
    %3131 = vmatpush1.msra.mxu0 0.0
    %3132 = vmatprep.subr.mxu0 0.0
    %3133 = vmatpush1.msra.mxu0 0.0
    %3134 = vmatprep.subr.mxu0 0.0
    %3135 = vmatpush1.msra.mxu0 0.0
    %3136 = vmatprep.subr.mxu0 0.0
    %3137 = vmatpush1.msra.mxu0 0.0
    %3138 = vmatprep.subr.mxu0 0.0
    %3139 = vmatpush1.msra.mxu0 0.0
    %3140 = vmatprep.subr.mxu0 0.0
    %3141 = vmatpush1.msra.mxu0 0.0
    %3142 = vmatprep.mubr.f32.mxu0 0.0
    %3143 = vmatmul.mubr.f32.gmra.mrb[0].mxu0 %v3005
    %v3144 = vpop.f32.mrb[0].mxu0
    %v3145 = vadd.f32 0.0, %v3144
    %v3146 = vpop.f32.mrb[0].mxu0
    %v3147 = vadd.f32 0.0, %v3146
    %3148 = vdwg.mxu0
    %v3149 = vadd.f32 %v2982, %v3074
    %v3150 = vadd.f32 %v2983, %v3076
    %v3151 = vadd.f32 %v2984, %v3145
    %v3152 = vadd.f32 %v2985, %v3147
    %3153 = vrot.lane.b32.xlu0 %v1986, 112
    %v3154 = vpop.permute.xlu0 %3153
    %3155 = vrot.lane.b32.xlu0 %v1987, 112
    %v3156 = vpop.permute.xlu0 %3155
    %3157 = vrot.lane.b32.xlu0 %v1988, 112
    %v3158 = vpop.permute.xlu0 %3157
    %3159 = vrot.lane.b32.xlu0 %v1989, 112
    %v3160 = vpop.permute.xlu0 %3159
    %v3161 = vsel %vm1622, %v3158, %v3160
    %v3162 = vsel %vm1622, %v3156, %v3158
    %v3163 = vsel %vm1622, %v3154, %v3156
    %v3164 = vsel %vm1622, %v3160, %v3154
    %v3165 = vsel %vm1631, %v3163, 0.0
    %v3166 = vsel %vm1632, %v3162, 0.0
    %v3167 = vsel %vm1633, %v3161, 0.0
    %v3168 = vsel %vm1634, %v3164, 0.0
    %s3169 = scalar_lea.vmem %s3, 56
    %v3170 = vld [vmem:[%s3169] sm:$0xff]
    %v3172 = vsel %vm2017, %v3170, 0
    %3174 = vmatprep.subr.mxu0 %v3166
    %3175 = vmatpush1.msra.mxu0 %v3165
    %3176 = vmatprep.subr.mxu0 0.0
    %3177 = vmatpush1.msra.mxu0 0.0
    %3178 = vmatprep.subr.mxu0 0.0
    %3179 = vmatpush1.msra.mxu0 0.0
    %3180 = vmatprep.subr.mxu0 0.0
    %3181 = vmatpush1.msra.mxu0 0.0
    %3182 = vmatprep.subr.mxu0 0.0
    %3183 = vmatpush1.msra.mxu0 0.0
    %3184 = vmatprep.subr.mxu0 0.0
    %3185 = vmatpush1.msra.mxu0 0.0
    %3186 = vmatprep.subr.mxu0 0.0
    %3187 = vmatpush1.msra.mxu0 0.0
    %3188 = vmatprep.subr.mxu0 0.0
    %3189 = vmatpush1.msra.mxu0 0.0
    %3190 = vmatprep.subr.mxu0 0.0
    %3191 = vmatpush1.msra.mxu0 0.0
    %3192 = vmatprep.subr.mxu0 0.0
    %3193 = vmatpush1.msra.mxu0 0.0
    %3194 = vmatprep.subr.mxu0 0.0
    %3195 = vmatpush1.msra.mxu0 0.0
    %3196 = vmatprep.subr.mxu0 0.0
    %3197 = vmatpush1.msra.mxu0 0.0
    %3198 = vmatprep.subr.mxu0 0.0
    %3199 = vmatpush1.msra.mxu0 0.0
    %3200 = vmatprep.subr.mxu0 0.0
    %3201 = vmatpush1.msra.mxu0 0.0
    %3202 = vmatprep.subr.mxu0 0.0
    %3203 = vmatpush1.msra.mxu0 0.0
    %3204 = vmatprep.subr.mxu0 0.0
    %3205 = vmatpush1.msra.mxu0 0.0
    %3206 = vmatprep.subr.mxu0 0.0
    %3207 = vmatpush1.msra.mxu0 0.0
    %3208 = vmatprep.subr.mxu0 0.0
    %3209 = vmatpush1.msra.mxu0 0.0
    %3210 = vmatprep.subr.mxu0 0.0
    %3211 = vmatpush1.msra.mxu0 0.0
    %3212 = vmatprep.subr.mxu0 0.0
    %3213 = vmatpush1.msra.mxu0 0.0
    %3214 = vmatprep.subr.mxu0 0.0
    %3215 = vmatpush1.msra.mxu0 0.0
    %3216 = vmatprep.subr.mxu0 0.0
    %3217 = vmatpush1.msra.mxu0 0.0
    %3218 = vmatprep.subr.mxu0 0.0
    %3219 = vmatpush1.msra.mxu0 0.0
    %3220 = vmatprep.subr.mxu0 0.0
    %3221 = vmatpush1.msra.mxu0 0.0
    %3222 = vmatprep.subr.mxu0 0.0
    %3223 = vmatpush1.msra.mxu0 0.0
    %3224 = vmatprep.subr.mxu0 0.0
    %3225 = vmatpush1.msra.mxu0 0.0
    %3226 = vmatprep.subr.mxu0 0.0
    %3227 = vmatpush1.msra.mxu0 0.0
    %3228 = vmatprep.subr.mxu0 0.0
    %3229 = vmatpush1.msra.mxu0 0.0
    %3230 = vmatprep.subr.mxu0 0.0
    %3231 = vmatpush1.msra.mxu0 0.0
    %3232 = vmatprep.subr.mxu0 0.0
    %3233 = vmatpush1.msra.mxu0 0.0
    %3234 = vmatprep.subr.mxu0 0.0
    %3235 = vmatpush1.msra.mxu0 0.0
    %3236 = vmatprep.subr.mxu0 0.0
    %3237 = vmatpush1.msra.mxu0 0.0
    %3238 = vmatprep.mubr.f32.mxu0 0.0
    %3239 = vmatmul.mubr.f32.gmra.mrb[0].mxu0 %v3172
    %v3240 = vpop.f32.mrb[0].mxu0
    %v3241 = vadd.f32 0.0, %v3240
    %v3242 = vpop.f32.mrb[0].mxu0
    %v3243 = vadd.f32 0.0, %v3242
    %3244 = vdwg.mxu0
    %3245 = vmatprep.subr.mxu0 %v3168
    %3246 = vmatpush1.msra.mxu0 %v3167
    %3247 = vmatprep.subr.mxu0 0.0
    %3248 = vmatpush1.msra.mxu0 0.0
    %3249 = vmatprep.subr.mxu0 0.0
    %3250 = vmatpush1.msra.mxu0 0.0
    %3251 = vmatprep.subr.mxu0 0.0
    %3252 = vmatpush1.msra.mxu0 0.0
    %3253 = vmatprep.subr.mxu0 0.0
    %3254 = vmatpush1.msra.mxu0 0.0
    %3255 = vmatprep.subr.mxu0 0.0
    %3256 = vmatpush1.msra.mxu0 0.0
    %3257 = vmatprep.subr.mxu0 0.0
    %3258 = vmatpush1.msra.mxu0 0.0
    %3259 = vmatprep.subr.mxu0 0.0
    %3260 = vmatpush1.msra.mxu0 0.0
    %3261 = vmatprep.subr.mxu0 0.0
    %3262 = vmatpush1.msra.mxu0 0.0
    %3263 = vmatprep.subr.mxu0 0.0
    %3264 = vmatpush1.msra.mxu0 0.0
    %3265 = vmatprep.subr.mxu0 0.0
    %3266 = vmatpush1.msra.mxu0 0.0
    %3267 = vmatprep.subr.mxu0 0.0
    %3268 = vmatpush1.msra.mxu0 0.0
    %3269 = vmatprep.subr.mxu0 0.0
    %3270 = vmatpush1.msra.mxu0 0.0
    %3271 = vmatprep.subr.mxu0 0.0
    %3272 = vmatpush1.msra.mxu0 0.0
    %3273 = vmatprep.subr.mxu0 0.0
    %3274 = vmatpush1.msra.mxu0 0.0
    %3275 = vmatprep.subr.mxu0 0.0
    %3276 = vmatpush1.msra.mxu0 0.0
    %3277 = vmatprep.subr.mxu0 0.0
    %3278 = vmatpush1.msra.mxu0 0.0
    %3279 = vmatprep.subr.mxu0 0.0
    %3280 = vmatpush1.msra.mxu0 0.0
    %3281 = vmatprep.subr.mxu0 0.0
    %3282 = vmatpush1.msra.mxu0 0.0
    %3283 = vmatprep.subr.mxu0 0.0
    %3284 = vmatpush1.msra.mxu0 0.0
    %3285 = vmatprep.subr.mxu0 0.0
    %3286 = vmatpush1.msra.mxu0 0.0
    %3287 = vmatprep.subr.mxu0 0.0
    %3288 = vmatpush1.msra.mxu0 0.0
    %3289 = vmatprep.subr.mxu0 0.0
    %3290 = vmatpush1.msra.mxu0 0.0
    %3291 = vmatprep.subr.mxu0 0.0
    %3292 = vmatpush1.msra.mxu0 0.0
    %3293 = vmatprep.subr.mxu0 0.0
    %3294 = vmatpush1.msra.mxu0 0.0
    %3295 = vmatprep.subr.mxu0 0.0
    %3296 = vmatpush1.msra.mxu0 0.0
    %3297 = vmatprep.subr.mxu0 0.0
    %3298 = vmatpush1.msra.mxu0 0.0
    %3299 = vmatprep.subr.mxu0 0.0
    %3300 = vmatpush1.msra.mxu0 0.0
    %3301 = vmatprep.subr.mxu0 0.0
    %3302 = vmatpush1.msra.mxu0 0.0
    %3303 = vmatprep.subr.mxu0 0.0
    %3304 = vmatpush1.msra.mxu0 0.0
    %3305 = vmatprep.subr.mxu0 0.0
    %3306 = vmatpush1.msra.mxu0 0.0
    %3307 = vmatprep.subr.mxu0 0.0
    %3308 = vmatpush1.msra.mxu0 0.0
    %3309 = vmatprep.mubr.f32.mxu0 0.0
    %3310 = vmatmul.mubr.f32.gmra.mrb[0].mxu0 %v3172
    %v3311 = vpop.f32.mrb[0].mxu0
    %v3312 = vadd.f32 0.0, %v3311
    %v3313 = vpop.f32.mrb[0].mxu0
    %v3314 = vadd.f32 0.0, %v3313
    %3315 = vdwg.mxu0
    %v3316 = vadd.f32 %v3149, %v3241
    %v3317 = vadd.f32 %v3150, %v3243
    %v3318 = vadd.f32 %v3151, %v3312
    %v3319 = vadd.f32 %v3152, %v3314
    %3320 = vrot.lane.b32.xlu0 %v1986, 111
    %v3321 = vpop.permute.xlu0 %3320
    %3322 = vrot.lane.b32.xlu0 %v1987, 111
    %v3323 = vpop.permute.xlu0 %3322
    %3324 = vrot.lane.b32.xlu0 %v1988, 111
    %v3325 = vpop.permute.xlu0 %3324
    %3326 = vrot.lane.b32.xlu0 %v1989, 111
    %v3327 = vpop.permute.xlu0 %3326
    %v3328 = vsel %vm1810, %v3325, %v3327
    %v3329 = vsel %vm1810, %v3323, %v3325
    %v3330 = vsel %vm1810, %v3321, %v3323
    %v3331 = vsel %vm1810, %v3327, %v3321
    %v3332 = vsel %vm1819, %v3330, 0.0
    %v3333 = vsel %vm1820, %v3329, 0.0
    %v3334 = vsel %vm1821, %v3328, 0.0
    %v3335 = vsel %vm1822, %v3331, 0.0
    %s3336 = scalar_lea.vmem %s3, 64
    %v3337 = vld [vmem:[%s3336] sm:$0xff]
    %v3339 = vsel %vm2017, %v3337, 0
    %3341 = vmatprep.subr.mxu0 %v3333
    %3342 = vmatpush1.msra.mxu0 %v3332
    %3343 = vmatprep.subr.mxu0 0.0
    %3344 = vmatpush1.msra.mxu0 0.0
    %3345 = vmatprep.subr.mxu0 0.0
    %3346 = vmatpush1.msra.mxu0 0.0
    %3347 = vmatprep.subr.mxu0 0.0
    %3348 = vmatpush1.msra.mxu0 0.0
    %3349 = vmatprep.subr.mxu0 0.0
    %3350 = vmatpush1.msra.mxu0 0.0
    %3351 = vmatprep.subr.mxu0 0.0
    %3352 = vmatpush1.msra.mxu0 0.0
    %3353 = vmatprep.subr.mxu0 0.0
    %3354 = vmatpush1.msra.mxu0 0.0
    %3355 = vmatprep.subr.mxu0 0.0
    %3356 = vmatpush1.msra.mxu0 0.0
    %3357 = vmatprep.subr.mxu0 0.0
    %3358 = vmatpush1.msra.mxu0 0.0
    %3359 = vmatprep.subr.mxu0 0.0
    %3360 = vmatpush1.msra.mxu0 0.0
    %3361 = vmatprep.subr.mxu0 0.0
    %3362 = vmatpush1.msra.mxu0 0.0
    %3363 = vmatprep.subr.mxu0 0.0
    %3364 = vmatpush1.msra.mxu0 0.0
    %3365 = vmatprep.subr.mxu0 0.0
    %3366 = vmatpush1.msra.mxu0 0.0
    %3367 = vmatprep.subr.mxu0 0.0
    %3368 = vmatpush1.msra.mxu0 0.0
    %3369 = vmatprep.subr.mxu0 0.0
    %3370 = vmatpush1.msra.mxu0 0.0
    %3371 = vmatprep.subr.mxu0 0.0
    %3372 = vmatpush1.msra.mxu0 0.0
    %3373 = vmatprep.subr.mxu0 0.0
    %3374 = vmatpush1.msra.mxu0 0.0
    %3375 = vmatprep.subr.mxu0 0.0
    %3376 = vmatpush1.msra.mxu0 0.0
    %3377 = vmatprep.subr.mxu0 0.0
    %3378 = vmatpush1.msra.mxu0 0.0
    %3379 = vmatprep.subr.mxu0 0.0
    %3380 = vmatpush1.msra.mxu0 0.0
    %3381 = vmatprep.subr.mxu0 0.0
    %3382 = vmatpush1.msra.mxu0 0.0
    %3383 = vmatprep.subr.mxu0 0.0
    %3384 = vmatpush1.msra.mxu0 0.0
    %3385 = vmatprep.subr.mxu0 0.0
    %3386 = vmatpush1.msra.mxu0 0.0
    %3387 = vmatprep.subr.mxu0 0.0
    %3388 = vmatpush1.msra.mxu0 0.0
    %3389 = vmatprep.subr.mxu0 0.0
    %3390 = vmatpush1.msra.mxu0 0.0
    %3391 = vmatprep.subr.mxu0 0.0
    %3392 = vmatpush1.msra.mxu0 0.0
    %3393 = vmatprep.subr.mxu0 0.0
    %3394 = vmatpush1.msra.mxu0 0.0
    %3395 = vmatprep.subr.mxu0 0.0
    %3396 = vmatpush1.msra.mxu0 0.0
    %3397 = vmatprep.subr.mxu0 0.0
    %3398 = vmatpush1.msra.mxu0 0.0
    %3399 = vmatprep.subr.mxu0 0.0
    %3400 = vmatpush1.msra.mxu0 0.0
    %3401 = vmatprep.subr.mxu0 0.0
    %3402 = vmatpush1.msra.mxu0 0.0
    %3403 = vmatprep.subr.mxu0 0.0
    %3404 = vmatpush1.msra.mxu0 0.0
    %3405 = vmatprep.mubr.f32.mxu0 0.0
    %3406 = vmatmul.mubr.f32.gmra.mrb[0].mxu0 %v3339
    %v3407 = vpop.f32.mrb[0].mxu0
    %v3408 = vadd.f32 0.0, %v3407
    %v3409 = vpop.f32.mrb[0].mxu0
    %v3410 = vadd.f32 0.0, %v3409
    %3411 = vdwg.mxu0
    %3412 = vmatprep.subr.mxu0 %v3335
    %3413 = vmatpush1.msra.mxu0 %v3334
    %3414 = vmatprep.subr.mxu0 0.0
    %3415 = vmatpush1.msra.mxu0 0.0
    %3416 = vmatprep.subr.mxu0 0.0
    %3417 = vmatpush1.msra.mxu0 0.0
    %3418 = vmatprep.subr.mxu0 0.0
    %3419 = vmatpush1.msra.mxu0 0.0
    %3420 = vmatprep.subr.mxu0 0.0
    %3421 = vmatpush1.msra.mxu0 0.0
    %3422 = vmatprep.subr.mxu0 0.0
    %3423 = vmatpush1.msra.mxu0 0.0
    %3424 = vmatprep.subr.mxu0 0.0
    %3425 = vmatpush1.msra.mxu0 0.0
    %3426 = vmatprep.subr.mxu0 0.0
    %3427 = vmatpush1.msra.mxu0 0.0
    %3428 = vmatprep.subr.mxu0 0.0
    %3429 = vmatpush1.msra.mxu0 0.0
    %3430 = vmatprep.subr.mxu0 0.0
    %3431 = vmatpush1.msra.mxu0 0.0
    %3432 = vmatprep.subr.mxu0 0.0
    %3433 = vmatpush1.msra.mxu0 0.0
    %3434 = vmatprep.subr.mxu0 0.0
    %3435 = vmatpush1.msra.mxu0 0.0
    %3436 = vmatprep.subr.mxu0 0.0
    %3437 = vmatpush1.msra.mxu0 0.0
    %3438 = vmatprep.subr.mxu0 0.0
    %3439 = vmatpush1.msra.mxu0 0.0
    %3440 = vmatprep.subr.mxu0 0.0
    %3441 = vmatpush1.msra.mxu0 0.0
    %3442 = vmatprep.subr.mxu0 0.0
    %3443 = vmatpush1.msra.mxu0 0.0
    %3444 = vmatprep.subr.mxu0 0.0
    %3445 = vmatpush1.msra.mxu0 0.0
    %3446 = vmatprep.subr.mxu0 0.0
    %3447 = vmatpush1.msra.mxu0 0.0
    %3448 = vmatprep.subr.mxu0 0.0
    %3449 = vmatpush1.msra.mxu0 0.0
    %3450 = vmatprep.subr.mxu0 0.0
    %3451 = vmatpush1.msra.mxu0 0.0
    %3452 = vmatprep.subr.mxu0 0.0
    %3453 = vmatpush1.msra.mxu0 0.0
    %3454 = vmatprep.subr.mxu0 0.0
    %3455 = vmatpush1.msra.mxu0 0.0
    %3456 = vmatprep.subr.mxu0 0.0
    %3457 = vmatpush1.msra.mxu0 0.0
    %3458 = vmatprep.subr.mxu0 0.0
    %3459 = vmatpush1.msra.mxu0 0.0
    %3460 = vmatprep.subr.mxu0 0.0
    %3461 = vmatpush1.msra.mxu0 0.0
    %3462 = vmatprep.subr.mxu0 0.0
    %3463 = vmatpush1.msra.mxu0 0.0
    %3464 = vmatprep.subr.mxu0 0.0
    %3465 = vmatpush1.msra.mxu0 0.0
    %3466 = vmatprep.subr.mxu0 0.0
    %3467 = vmatpush1.msra.mxu0 0.0
    %3468 = vmatprep.subr.mxu0 0.0
    %3469 = vmatpush1.msra.mxu0 0.0
    %3470 = vmatprep.subr.mxu0 0.0
    %3471 = vmatpush1.msra.mxu0 0.0
    %3472 = vmatprep.subr.mxu0 0.0
    %3473 = vmatpush1.msra.mxu0 0.0
    %3474 = vmatprep.subr.mxu0 0.0
    %3475 = vmatpush1.msra.mxu0 0.0
    %3476 = vmatprep.mubr.f32.mxu0 0.0
    %3477 = vmatmul.mubr.f32.gmra.mrb[0].mxu0 %v3339
    %v3478 = vpop.f32.mrb[0].mxu0
    %v3479 = vadd.f32 0.0, %v3478
    %v3480 = vpop.f32.mrb[0].mxu0
    %v3481 = vadd.f32 0.0, %v3480
    %3482 = vdwg.mxu0
    %v3483 = vadd.f32 %v3316, %v3408
    %v3484 = vadd.f32 %v3317, %v3410
    %v3485 = vadd.f32 %v3318, %v3479
    %v3486 = vadd.f32 %v3319, %v3481
    %3487 = vst [vmem:[#allocation2] sm:$0xff] %v3483
    %3488 = vst [vmem:[#allocation2 + $0x8] sm:$0xff] %v3484
    %3489 = vst [vmem:[#allocation2 + $0x10] sm:$0xff] %v3485
    %3490 = vst [vmem:[#allocation2 + $0x18] sm:$0xff] %v3486
    // Predicated region
    $region30: #{tpu_custom_call.1} parent=1 // pred_check
      _
    $region31: #{tpu_custom_call.1} parent=1 // pred_check_branch
      %3492 = sbr.rel (0) target = $region33
    $region32: #{tpu_custom_call.1} parent=1 // pred_region
      %s3494 = ssub.s32 512, 512
      %3495 = vsyncadd [#allocation3], %s3494
      %s3497 = sshll.u32 [#allocation2], 4
      %s3498 = int_to_ptr.vmem [resolvable:$true] %s3497
      %3500 = dma.vmem_to_hbm [thread:$0]  %s3498, 512, %s7, [#allocation3]
    $region33: #{tpu_custom_call.1} parent=1 // pred_fallthru
      _
    // Predicated region
    $region34: #{tpu_custom_call.1} parent=1 // pred_check
      _
    $region35: #{tpu_custom_call.1} parent=1 // pred_check_branch
      %3502 = sbr.rel (0) target = $region37
    $region36: #{tpu_custom_call.1} parent=1 // pred_region
      %3503 = dma.done [#allocation3], 512
    $region37: #{tpu_custom_call.1} parent=1 // pred_fallthru
      _
    %3504 = vsyncpa [#allocation3], 1

</llo_original>
